<compile_context>
chip_gen: v7x
topology: tpu7x:2x2x1
jax: 0.10.0
libtpu: 0.0.40
codegen_flags: <defaults>
</compile_context>

<pallas_src>
import jax
import jax.numpy as jnp
from jax.experimental import pallas as pl
from jax.experimental.pallas import tpu as pltpu

# ----- small synthetic config (stands in for hiddenDim=768 BigBird-BERT) -----
CLS_NUM = 7
CLS_PAD = 128            # lane-padded classifier width (sliced to CLS_NUM outside)
VOCAB = 64
SEQ = 8
HIDDEN = 32
HEADS = 4
HEAD_DIM = HIDDEN // HEADS
FFN = 64
LAYERS = 2
BATCH = 2
LN_EPS = 1e-12


# ----------------------------- Pallas kernel ----------------------------------
def _layer_norm(x, gamma, beta):
    mu = jnp.mean(x, axis=-1, keepdims=True)
    var = jnp.mean((x - mu) * (x - mu), axis=-1, keepdims=True)
    return (x - mu) * jax.lax.rsqrt(var + LN_EPS) * gamma + beta


def encoder_cls_kernel(x_ref, emb_g_ref, emb_b_ref,
                       wqkv_ref, bqkv_ref, wo_ref, bo_ref,
                       ln1_g_ref, ln1_b_ref, w1_ref, b1_ref,
                       w2_ref, b2_ref, ln2_g_ref, ln2_b_ref,
                       wcls_ref, bcls_ref, out_ref):
    # One grid step == one sequence.  Attention within a step is fully dense,
    # so no batch-block-diagonal bias is needed at all.
    x = x_ref[0].astype(jnp.float32)                    # (SEQ, HIDDEN), f32 math
    x = _layer_norm(x, emb_g_ref[...], emb_b_ref[...])  # embedding LayerNorm

    scale = 1.0 / (HEAD_DIM ** 0.5)

    for l in range(LAYERS):                              # static unroll
        xb = x.astype(jnp.bfloat16)

        # Fused QKV projection: one MXU push instead of three.
        qkv = (jnp.dot(xb, wqkv_ref[l], preferred_element_type=jnp.float32)
               + bqkv_ref[l])                            # (SEQ, 3H) f32

        # Per-head scores/context (HEAD_DIM=8 here, sub-lane either way); the
        # contexts are assembled once and projected through a SINGLE
        # (S,H)@(H,H) matmul below — no per-head output-projection matmuls.
        ctx_heads = []
        for h in range(HEADS):
            lo, hi = h * HEAD_DIM, (h + 1) * HEAD_DIM
            q_h = qkv[:, lo:hi] * scale                  # fold scale into Q
            k_h = qkv[:, HIDDEN + lo:HIDDEN + hi]
            v_h = qkv[:, 2 * HIDDEN + lo:2 * HIDDEN + hi]
            s = jax.lax.dot_general(
                q_h, k_h, (((1,), (1,)), ((), ())),
                preferred_element_type=jnp.float32)      # (SEQ, SEQ)
            s = s - jnp.max(s, axis=-1, keepdims=True)
            p = jnp.exp(s)                               # unnormalized probs
            denom = jnp.sum(p, axis=-1, keepdims=True)   # (SEQ, 1)
            ctx = jnp.dot(p.astype(jnp.bfloat16), v_h.astype(jnp.bfloat16),
                          preferred_element_type=jnp.float32)   # (SEQ, D)
            # Deferred softmax normalization: O(S*D) multiply, EUP reciprocal.
            ctx_heads.append(ctx * pl.reciprocal(denom, approx=True))
        ctx = jnp.concatenate(ctx_heads, axis=-1)        # (SEQ, HIDDEN)

        # One output projection for all heads (collapses 4 K=8 pushes + adds).
        attn = (jnp.dot(ctx.astype(jnp.bfloat16), wo_ref[l],
                        preferred_element_type=jnp.float32) + bo_ref[l])

        h1 = _layer_norm(x + attn, ln1_g_ref[l], ln1_b_ref[l])   # post-LN

        ff = (jnp.dot(h1.astype(jnp.bfloat16), w1_ref[l],
                      preferred_element_type=jnp.float32) + b1_ref[l])
        # TODO(synk): HF BERT/BigBird uses exact (erf) GELU; tanh approx here.
        ff = jax.nn.gelu(ff, approximate=True)
        ff = (jnp.dot(ff.astype(jnp.bfloat16), w2_ref[l],
                      preferred_element_type=jnp.float32) + b2_ref[l])
        x = _layer_norm(h1 + ff, ln2_g_ref[l], ln2_b_ref[l])

    # Classifier head on the CLS row only (last_hidden_state[:, 0, :] @ W),
    # lane-padded to 128 for a dense, unmasked writeback.
    cls = x[0:1, :]                                      # (1, HIDDEN)
    logits = (jnp.dot(cls.astype(jnp.bfloat16), wcls_ref[...],
                      preferred_element_type=jnp.float32) + bcls_ref[...])
    out_ref[0] = logits.astype(out_ref.dtype)            # (1, CLS_PAD)


# ------------------------------- wrapper ---------------------------------------
def _weight_spec(arr):
    zeros = (0,) * arr.ndim
    return pl.BlockSpec(arr.shape, lambda b, _z=zeros: _z)


def com_erc_forward(batch_input_tokens, params):
    """batch_input_tokens: (batch, len) int32 token ids -> (batch, clsNum)."""
    B, S = batch_input_tokens.shape
    # Embedding lookup + position embedding (data-dependent gather: JAX glue).
    x = params['word_emb'][batch_input_tokens] + params['pos_emb'][None, :S, :]
    # Ship activations bf16 (halves HBM->VMEM DMA); f32 math happens in-kernel.
    x = x.astype(jnp.bfloat16)                           # (B, S, HIDDEN)

    weights = (params['emb_ln_g'], params['emb_ln_b'],
               params['wqkv'], params['bqkv'], params['wo'], params['bo'],
               params['ln1_g'], params['ln1_b'], params['w1'], params['b1'],
               params['w2'], params['b2'], params['ln2_g'], params['ln2_b'],
               params['Wcls'], params['bcls'])

    in_specs = ([pl.BlockSpec((1, S, HIDDEN), lambda b: (b, 0, 0))]
                + [_weight_spec(w) for w in weights])

    logits_full = pl.pallas_call(
        encoder_cls_kernel,
        grid=(B,),
        in_specs=in_specs,
        out_specs=pl.BlockSpec((1, 1, CLS_PAD), lambda b: (b, 0, 0)),
        out_shape=jax.ShapeDtypeStruct((B, 1, CLS_PAD), jnp.float32),
        compiler_params=pltpu.CompilerParams(
            dimension_semantics=("parallel",)),          # v7x: one seq per TC
    )(x, *weights)

    # Slice off the lane padding (columns >= clsNum).
    return logits_full.reshape(B, CLS_PAD)[:, :CLS_NUM]


# --------------------------- parameter construction ----------------------------
def init_params(key):
    def normal(k, shape, scale=0.02, dtype=jnp.float32):
        return (scale * jax.random.normal(k, shape)).astype(dtype)

    bf = jnp.bfloat16
    keys = iter(jax.random.split(key, 32))
    params = {
        'word_emb': normal(next(keys), (VOCAB, HIDDEN)),
        'pos_emb': normal(next(keys), (SEQ, HIDDEN)),
        'emb_ln_g': jnp.ones((1, HIDDEN), jnp.float32),
        'emb_ln_b': jnp.zeros((1, HIDDEN), jnp.float32),
        # Per-layer weights stacked along a leading L axis.  Matmul operands
        # stored bf16 (f32 accumulation in-kernel); biases / LN params f32.
        'wqkv': normal(next(keys), (LAYERS, HIDDEN, 3 * HIDDEN), dtype=bf),
        'bqkv': jnp.zeros((LAYERS, 1, 3 * HIDDEN), jnp.float32),
        'wo': normal(next(keys), (LAYERS, HIDDEN, HIDDEN), dtype=bf),
        'bo': jnp.zeros((LAYERS, 1, HIDDEN), jnp.float32),
        'ln1_g': jnp.ones((LAYERS, 1, HIDDEN), jnp.float32),
        'ln1_b': jnp.zeros((LAYERS, 1, HIDDEN), jnp.float32),
        'w1': normal(next(keys), (LAYERS, HIDDEN, FFN), dtype=bf),
        'b1': jnp.zeros((LAYERS, 1, FFN), jnp.float32),
        'w2': normal(next(keys), (LAYERS, FFN, HIDDEN), dtype=bf),
        'b2': jnp.zeros((LAYERS, 1, HIDDEN), jnp.float32),
        'ln2_g': jnp.ones((LAYERS, 1, HIDDEN), jnp.float32),
        'ln2_b': jnp.zeros((LAYERS, 1, HIDDEN), jnp.float32),
    }
    # self.W = nn.Linear(hiddenDim, clsNum), stored (in, out), lane-padded.
    wcls = jnp.zeros((HIDDEN, CLS_PAD), jnp.float32)
    wcls = wcls.at[:, :CLS_NUM].set(normal(next(keys), (HIDDEN, CLS_NUM)))
    params['Wcls'] = wcls.astype(bf)
    params['bcls'] = jnp.zeros((1, CLS_PAD), jnp.float32)
    return params


# ----------------------------------- main ---------------------------------------
if __name__ == "__main__":
    key = jax.random.PRNGKey(0)
    pkey, tkey = jax.random.split(key)
    params = init_params(pkey)

    # (batch, len) input tokens; position 0 plays the role of [CLS].
    batch_input_tokens = jax.random.randint(
        tkey, (BATCH, SEQ), minval=0, maxval=VOCAB, dtype=jnp.int32)

    logits = com_erc_forward(batch_input_tokens, params)
    logits = jax.block_until_ready(logits)
    assert logits.shape == (BATCH, CLS_NUM)
    assert bool(jnp.all(jnp.isfinite(logits)))
    print("KERNEL_OK")
</pallas_src>

<mosaic_0001>
module attributes {stable_mosaic.version = 11 : i64} {
  func.func @encoder_cls_kernel(%arg0: i32, %arg1: memref<1x8x32xbf16, #tpu.memory_space<vmem>>, %arg2: memref<1x32xf32, #tpu.memory_space<vmem>>, %arg3: memref<1x32xf32, #tpu.memory_space<vmem>>, %arg4: memref<2x32x96xbf16, #tpu.memory_space<vmem>>, %arg5: memref<2x1x96xf32, #tpu.memory_space<vmem>>, %arg6: memref<2x32x32xbf16, #tpu.memory_space<vmem>>, %arg7: memref<2x1x32xf32, #tpu.memory_space<vmem>>, %arg8: memref<2x1x32xf32, #tpu.memory_space<vmem>>, %arg9: memref<2x1x32xf32, #tpu.memory_space<vmem>>, %arg10: memref<2x32x64xbf16, #tpu.memory_space<vmem>>, %arg11: memref<2x1x64xf32, #tpu.memory_space<vmem>>, %arg12: memref<2x64x32xbf16, #tpu.memory_space<vmem>>, %arg13: memref<2x1x32xf32, #tpu.memory_space<vmem>>, %arg14: memref<2x1x32xf32, #tpu.memory_space<vmem>>, %arg15: memref<2x1x32xf32, #tpu.memory_space<vmem>>, %arg16: memref<32x128xbf16, #tpu.memory_space<vmem>>, %arg17: memref<1x128xf32, #tpu.memory_space<vmem>>, %arg18: memref<1x1x128xf32, #tpu.memory_space<vmem>>) attributes {dimension_semantics = [#tpu.dimension_semantics<parallel>], iteration_bounds = array<i64: 2>, scalar_prefetch = 0 : i64, scratch_operands = 0 : i64, tpu.core_type = #tpu.core_type<tc>, window_params = [{transform_indices = @transform_0, window_bounds = array<i64: 1, 8, 32>}, {pipeline_mode = #tpu.pipeline_mode<synchronous>, transform_indices = @transform_1, window_bounds = array<i64: 1, 32>}, {pipeline_mode = #tpu.pipeline_mode<synchronous>, transform_indices = @transform_2, window_bounds = array<i64: 1, 32>}, {pipeline_mode = #tpu.pipeline_mode<synchronous>, transform_indices = @transform_3, window_bounds = array<i64: 2, 32, 96>}, {pipeline_mode = #tpu.pipeline_mode<synchronous>, transform_indices = @transform_4, window_bounds = array<i64: 2, 1, 96>}, {pipeline_mode = #tpu.pipeline_mode<synchronous>, transform_indices = @transform_5, window_bounds = array<i64: 2, 32, 32>}, {pipeline_mode = #tpu.pipeline_mode<synchronous>, transform_indices = @transform_6, window_bounds = array<i64: 2, 1, 32>}, {pipeline_mode = #tpu.pipeline_mode<synchronous>, transform_indices = @transform_7, window_bounds = array<i64: 2, 1, 32>}, {pipeline_mode = #tpu.pipeline_mode<synchronous>, transform_indices = @transform_8, window_bounds = array<i64: 2, 1, 32>}, {pipeline_mode = #tpu.pipeline_mode<synchronous>, transform_indices = @transform_9, window_bounds = array<i64: 2, 32, 64>}, {pipeline_mode = #tpu.pipeline_mode<synchronous>, transform_indices = @transform_10, window_bounds = array<i64: 2, 1, 64>}, {pipeline_mode = #tpu.pipeline_mode<synchronous>, transform_indices = @transform_11, window_bounds = array<i64: 2, 64, 32>}, {pipeline_mode = #tpu.pipeline_mode<synchronous>, transform_indices = @transform_12, window_bounds = array<i64: 2, 1, 32>}, {pipeline_mode = #tpu.pipeline_mode<synchronous>, transform_indices = @transform_13, window_bounds = array<i64: 2, 1, 32>}, {pipeline_mode = #tpu.pipeline_mode<synchronous>, transform_indices = @transform_14, window_bounds = array<i64: 2, 1, 32>}, {pipeline_mode = #tpu.pipeline_mode<synchronous>, transform_indices = @transform_15, window_bounds = array<i64: 32, 128>}, {pipeline_mode = #tpu.pipeline_mode<synchronous>, transform_indices = @transform_16, window_bounds = array<i64: 1, 128>}, {transform_indices = @transform_17, window_bounds = array<i64: 1, 1, 128>}]} {
    %c0 = arith.constant 0 : index
    %c0_0 = arith.constant 0 : index
    %c0_1 = arith.constant 0 : index
    %0 = vector.load %arg1[%c0, %c0_0, %c0_1] : memref<1x8x32xbf16, #tpu.memory_space<vmem>>, vector<1x8x32xbf16>
    %1 = vector.shape_cast %0 : vector<1x8x32xbf16> to vector<8x32xbf16>
    %2 = arith.extf %1 : vector<8x32xbf16> to vector<8x32xf32>
    %c0_2 = arith.constant 0 : index
    %c0_3 = arith.constant 0 : index
    %3 = vector.load %arg2[%c0_2, %c0_3] : memref<1x32xf32, #tpu.memory_space<vmem>>, vector<1x32xf32>
    %c0_4 = arith.constant 0 : index
    %c0_5 = arith.constant 0 : index
    %4 = vector.load %arg3[%c0_4, %c0_5] : memref<1x32xf32, #tpu.memory_space<vmem>>, vector<1x32xf32>
    %cst = arith.constant dense<0.000000e+00> : vector<8xf32>
    %5 = vector.multi_reduction <add>, %2, %cst [1] : vector<8x32xf32> to vector<8xf32>
    %6 = vector.shape_cast %5 : vector<8xf32> to vector<8x1xf32>
    %cst_6 = arith.constant 3.200000e+01 : f32
    %7 = vector.broadcast %cst_6 : f32 to vector<8x1xf32>
    %8 = arith.divf %6, %7 : vector<8x1xf32>
    %9 = vector.broadcast %8 : vector<8x1xf32> to vector<8x32xf32>
    %10 = arith.subf %2, %9 : vector<8x32xf32>
    %11 = vector.broadcast %8 : vector<8x1xf32> to vector<8x32xf32>
    %12 = arith.subf %2, %11 : vector<8x32xf32>
    %13 = arith.mulf %10, %12 : vector<8x32xf32>
    %cst_7 = arith.constant dense<0.000000e+00> : vector<8xf32>
    %14 = vector.multi_reduction <add>, %13, %cst_7 [1] : vector<8x32xf32> to vector<8xf32>
    %15 = vector.shape_cast %14 : vector<8xf32> to vector<8x1xf32>
    %cst_8 = arith.constant 3.200000e+01 : f32
    %16 = vector.broadcast %cst_8 : f32 to vector<8x1xf32>
    %17 = arith.divf %15, %16 : vector<8x1xf32>
    %18 = vector.broadcast %8 : vector<8x1xf32> to vector<8x32xf32>
    %19 = arith.subf %2, %18 : vector<8x32xf32>
    %cst_9 = arith.constant 9.99999996E-13 : f32
    %20 = vector.broadcast %cst_9 : f32 to vector<8x1xf32>
    %21 = arith.addf %17, %20 : vector<8x1xf32>
    %22 = math.rsqrt %21 : vector<8x1xf32>
    %23 = vector.broadcast %22 : vector<8x1xf32> to vector<8x32xf32>
    %24 = arith.mulf %19, %23 : vector<8x32xf32>
    %25 = vector.broadcast %3 : vector<1x32xf32> to vector<8x32xf32>
    %26 = arith.mulf %24, %25 : vector<8x32xf32>
    %27 = vector.broadcast %4 : vector<1x32xf32> to vector<8x32xf32>
    %28 = arith.addf %26, %27 : vector<8x32xf32>
    %29 = arith.truncf %28 : vector<8x32xf32> to vector<8x32xbf16>
    %c0_10 = arith.constant 0 : index
    %c0_11 = arith.constant 0 : index
    %c0_12 = arith.constant 0 : index
    %30 = vector.load %arg4[%c0_10, %c0_11, %c0_12] : memref<2x32x96xbf16, #tpu.memory_space<vmem>>, vector<1x32x96xbf16>
    %31 = vector.shape_cast %30 : vector<1x32x96xbf16> to vector<32x96xbf16>
    %cst_13 = arith.constant dense<0.000000e+00> : vector<8x96xf32>
    %32 = tpu.matmul %29, %31, %cst_13 {dimension_numbers = #tpu.dot_dimension_numbers<[1], [0], [0], [1], [0, 0, 1, 1], [], []>} : vector<8x32xbf16>, vector<32x96xbf16>, vector<8x96xf32> -> vector<8x96xf32>
    %c0_14 = arith.constant 0 : index
    %c0_15 = arith.constant 0 : index
    %c0_16 = arith.constant 0 : index
    %33 = vector.load %arg5[%c0_14, %c0_15, %c0_16] : memref<2x1x96xf32, #tpu.memory_space<vmem>>, vector<1x1x96xf32>
    %34 = vector.shape_cast %33 : vector<1x1x96xf32> to vector<1x96xf32>
    %35 = vector.broadcast %34 : vector<1x96xf32> to vector<8x96xf32>
    %36 = arith.addf %32, %35 : vector<8x96xf32>
    %37 = vector.extract_strided_slice %36 {offsets = [0, 0], sizes = [8, 8], strides = [1, 1]} : vector<8x96xf32> to vector<8x8xf32>
    %cst_17 = arith.constant 0.353553385 : f32
    %38 = vector.broadcast %cst_17 : f32 to vector<8x8xf32>
    %39 = arith.mulf %37, %38 : vector<8x8xf32>
    %40 = vector.extract_strided_slice %36 {offsets = [0, 32], sizes = [8, 8], strides = [1, 1]} : vector<8x96xf32> to vector<8x8xf32>
    %41 = vector.extract_strided_slice %36 {offsets = [0, 64], sizes = [8, 8], strides = [1, 1]} : vector<8x96xf32> to vector<8x8xf32>
    %cst_18 = arith.constant dense<0.000000e+00> : vector<8x8xf32>
    %42 = tpu.matmul %39, %40, %cst_18 {dimension_numbers = #tpu.dot_dimension_numbers<[1], [1], [0], [0], [0, 0, 1, 0], [], []>} : vector<8x8xf32>, vector<8x8xf32>, vector<8x8xf32> -> vector<8x8xf32>
    %cst_19 = arith.constant dense<0xFF800000> : vector<8xf32>
    %43 = vector.multi_reduction <maximumf>, %42, %cst_19 [1] : vector<8x8xf32> to vector<8xf32>
    %44 = vector.shape_cast %43 : vector<8xf32> to vector<8x1xf32>
    %45 = vector.broadcast %44 : vector<8x1xf32> to vector<8x8xf32>
    %46 = arith.subf %42, %45 : vector<8x8xf32>
    %47 = math.exp %46 : vector<8x8xf32>
    %cst_20 = arith.constant dense<0.000000e+00> : vector<8xf32>
    %48 = vector.multi_reduction <add>, %47, %cst_20 [1] : vector<8x8xf32> to vector<8xf32>
    %49 = vector.shape_cast %48 : vector<8xf32> to vector<8x1xf32>
    %50 = arith.truncf %47 : vector<8x8xf32> to vector<8x8xbf16>
    %51 = arith.truncf %41 : vector<8x8xf32> to vector<8x8xbf16>
    %cst_21 = arith.constant dense<0.000000e+00> : vector<8x8xf32>
    %52 = tpu.matmul %50, %51, %cst_21 {dimension_numbers = #tpu.dot_dimension_numbers<[1], [0], [0], [1], [0, 0, 1, 1], [], []>} : vector<8x8xbf16>, vector<8x8xbf16>, vector<8x8xf32> -> vector<8x8xf32>
    %53 = tpu.reciprocal %49 {approx = true} : vector<8x1xf32> -> vector<8x1xf32>
    %54 = vector.broadcast %53 : vector<8x1xf32> to vector<8x8xf32>
    %55 = arith.mulf %52, %54 : vector<8x8xf32>
    %56 = vector.extract_strided_slice %36 {offsets = [0, 8], sizes = [8, 8], strides = [1, 1]} : vector<8x96xf32> to vector<8x8xf32>
    %cst_22 = arith.constant 0.353553385 : f32
    %57 = vector.broadcast %cst_22 : f32 to vector<8x8xf32>
    %58 = arith.mulf %56, %57 : vector<8x8xf32>
    %59 = vector.extract_strided_slice %36 {offsets = [0, 40], sizes = [8, 8], strides = [1, 1]} : vector<8x96xf32> to vector<8x8xf32>
    %60 = vector.extract_strided_slice %36 {offsets = [0, 72], sizes = [8, 8], strides = [1, 1]} : vector<8x96xf32> to vector<8x8xf32>
    %cst_23 = arith.constant dense<0.000000e+00> : vector<8x8xf32>
    %61 = tpu.matmul %58, %59, %cst_23 {dimension_numbers = #tpu.dot_dimension_numbers<[1], [1], [0], [0], [0, 0, 1, 0], [], []>} : vector<8x8xf32>, vector<8x8xf32>, vector<8x8xf32> -> vector<8x8xf32>
    %cst_24 = arith.constant dense<0xFF800000> : vector<8xf32>
    %62 = vector.multi_reduction <maximumf>, %61, %cst_24 [1] : vector<8x8xf32> to vector<8xf32>
    %63 = vector.shape_cast %62 : vector<8xf32> to vector<8x1xf32>
    %64 = vector.broadcast %63 : vector<8x1xf32> to vector<8x8xf32>
    %65 = arith.subf %61, %64 : vector<8x8xf32>
    %66 = math.exp %65 : vector<8x8xf32>
    %cst_25 = arith.constant dense<0.000000e+00> : vector<8xf32>
    %67 = vector.multi_reduction <add>, %66, %cst_25 [1] : vector<8x8xf32> to vector<8xf32>
    %68 = vector.shape_cast %67 : vector<8xf32> to vector<8x1xf32>
    %69 = arith.truncf %66 : vector<8x8xf32> to vector<8x8xbf16>
    %70 = arith.truncf %60 : vector<8x8xf32> to vector<8x8xbf16>
    %cst_26 = arith.constant dense<0.000000e+00> : vector<8x8xf32>
    %71 = tpu.matmul %69, %70, %cst_26 {dimension_numbers = #tpu.dot_dimension_numbers<[1], [0], [0], [1], [0, 0, 1, 1], [], []>} : vector<8x8xbf16>, vector<8x8xbf16>, vector<8x8xf32> -> vector<8x8xf32>
    %72 = tpu.reciprocal %68 {approx = true} : vector<8x1xf32> -> vector<8x1xf32>
    %73 = vector.broadcast %72 : vector<8x1xf32> to vector<8x8xf32>
    %74 = arith.mulf %71, %73 : vector<8x8xf32>
    %75 = vector.extract_strided_slice %36 {offsets = [0, 16], sizes = [8, 8], strides = [1, 1]} : vector<8x96xf32> to vector<8x8xf32>
    %cst_27 = arith.constant 0.353553385 : f32
    %76 = vector.broadcast %cst_27 : f32 to vector<8x8xf32>
    %77 = arith.mulf %75, %76 : vector<8x8xf32>
    %78 = vector.extract_strided_slice %36 {offsets = [0, 48], sizes = [8, 8], strides = [1, 1]} : vector<8x96xf32> to vector<8x8xf32>
    %79 = vector.extract_strided_slice %36 {offsets = [0, 80], sizes = [8, 8], strides = [1, 1]} : vector<8x96xf32> to vector<8x8xf32>
    %cst_28 = arith.constant dense<0.000000e+00> : vector<8x8xf32>
    %80 = tpu.matmul %77, %78, %cst_28 {dimension_numbers = #tpu.dot_dimension_numbers<[1], [1], [0], [0], [0, 0, 1, 0], [], []>} : vector<8x8xf32>, vector<8x8xf32>, vector<8x8xf32> -> vector<8x8xf32>
    %cst_29 = arith.constant dense<0xFF800000> : vector<8xf32>
    %81 = vector.multi_reduction <maximumf>, %80, %cst_29 [1] : vector<8x8xf32> to vector<8xf32>
    %82 = vector.shape_cast %81 : vector<8xf32> to vector<8x1xf32>
    %83 = vector.broadcast %82 : vector<8x1xf32> to vector<8x8xf32>
    %84 = arith.subf %80, %83 : vector<8x8xf32>
    %85 = math.exp %84 : vector<8x8xf32>
    %cst_30 = arith.constant dense<0.000000e+00> : vector<8xf32>
    %86 = vector.multi_reduction <add>, %85, %cst_30 [1] : vector<8x8xf32> to vector<8xf32>
    %87 = vector.shape_cast %86 : vector<8xf32> to vector<8x1xf32>
    %88 = arith.truncf %85 : vector<8x8xf32> to vector<8x8xbf16>
    %89 = arith.truncf %79 : vector<8x8xf32> to vector<8x8xbf16>
    %cst_31 = arith.constant dense<0.000000e+00> : vector<8x8xf32>
    %90 = tpu.matmul %88, %89, %cst_31 {dimension_numbers = #tpu.dot_dimension_numbers<[1], [0], [0], [1], [0, 0, 1, 1], [], []>} : vector<8x8xbf16>, vector<8x8xbf16>, vector<8x8xf32> -> vector<8x8xf32>
    %91 = tpu.reciprocal %87 {approx = true} : vector<8x1xf32> -> vector<8x1xf32>
    %92 = vector.broadcast %91 : vector<8x1xf32> to vector<8x8xf32>
    %93 = arith.mulf %90, %92 : vector<8x8xf32>
    %94 = vector.extract_strided_slice %36 {offsets = [0, 24], sizes = [8, 8], strides = [1, 1]} : vector<8x96xf32> to vector<8x8xf32>
    %cst_32 = arith.constant 0.353553385 : f32
    %95 = vector.broadcast %cst_32 : f32 to vector<8x8xf32>
    %96 = arith.mulf %94, %95 : vector<8x8xf32>
    %97 = vector.extract_strided_slice %36 {offsets = [0, 56], sizes = [8, 8], strides = [1, 1]} : vector<8x96xf32> to vector<8x8xf32>
    %98 = vector.extract_strided_slice %36 {offsets = [0, 88], sizes = [8, 8], strides = [1, 1]} : vector<8x96xf32> to vector<8x8xf32>
    %cst_33 = arith.constant dense<0.000000e+00> : vector<8x8xf32>
    %99 = tpu.matmul %96, %97, %cst_33 {dimension_numbers = #tpu.dot_dimension_numbers<[1], [1], [0], [0], [0, 0, 1, 0], [], []>} : vector<8x8xf32>, vector<8x8xf32>, vector<8x8xf32> -> vector<8x8xf32>
    %cst_34 = arith.constant dense<0xFF800000> : vector<8xf32>
    %100 = vector.multi_reduction <maximumf>, %99, %cst_34 [1] : vector<8x8xf32> to vector<8xf32>
    %101 = vector.shape_cast %100 : vector<8xf32> to vector<8x1xf32>
    %102 = vector.broadcast %101 : vector<8x1xf32> to vector<8x8xf32>
    %103 = arith.subf %99, %102 : vector<8x8xf32>
    %104 = math.exp %103 : vector<8x8xf32>
    %cst_35 = arith.constant dense<0.000000e+00> : vector<8xf32>
    %105 = vector.multi_reduction <add>, %104, %cst_35 [1] : vector<8x8xf32> to vector<8xf32>
    %106 = vector.shape_cast %105 : vector<8xf32> to vector<8x1xf32>
    %107 = arith.truncf %104 : vector<8x8xf32> to vector<8x8xbf16>
    %108 = arith.truncf %98 : vector<8x8xf32> to vector<8x8xbf16>
    %cst_36 = arith.constant dense<0.000000e+00> : vector<8x8xf32>
    %109 = tpu.matmul %107, %108, %cst_36 {dimension_numbers = #tpu.dot_dimension_numbers<[1], [0], [0], [1], [0, 0, 1, 1], [], []>} : vector<8x8xbf16>, vector<8x8xbf16>, vector<8x8xf32> -> vector<8x8xf32>
    %110 = tpu.reciprocal %106 {approx = true} : vector<8x1xf32> -> vector<8x1xf32>
    %111 = vector.broadcast %110 : vector<8x1xf32> to vector<8x8xf32>
    %112 = arith.mulf %109, %111 : vector<8x8xf32>
    %113 = tpu.concatenate %55, %74, %93, %112 in 1 : vector<8x8xf32>, vector<8x8xf32>, vector<8x8xf32>, vector<8x8xf32> -> vector<8x32xf32>
    %114 = arith.truncf %113 : vector<8x32xf32> to vector<8x32xbf16>
    %c0_37 = arith.constant 0 : index
    %c0_38 = arith.constant 0 : index
    %c0_39 = arith.constant 0 : index
    %115 = vector.load %arg6[%c0_37, %c0_38, %c0_39] : memref<2x32x32xbf16, #tpu.memory_space<vmem>>, vector<1x32x32xbf16>
    %116 = vector.shape_cast %115 : vector<1x32x32xbf16> to vector<32x32xbf16>
    %cst_40 = arith.constant dense<0.000000e+00> : vector<8x32xf32>
    %117 = tpu.matmul %114, %116, %cst_40 {dimension_numbers = #tpu.dot_dimension_numbers<[1], [0], [0], [1], [0, 0, 1, 1], [], []>} : vector<8x32xbf16>, vector<32x32xbf16>, vector<8x32xf32> -> vector<8x32xf32>
    %c0_41 = arith.constant 0 : index
    %c0_42 = arith.constant 0 : index
    %c0_43 = arith.constant 0 : index
    %118 = vector.load %arg7[%c0_41, %c0_42, %c0_43] : memref<2x1x32xf32, #tpu.memory_space<vmem>>, vector<1x1x32xf32>
    %119 = vector.shape_cast %118 : vector<1x1x32xf32> to vector<1x32xf32>
    %120 = vector.broadcast %119 : vector<1x32xf32> to vector<8x32xf32>
    %121 = arith.addf %117, %120 : vector<8x32xf32>
    %122 = arith.addf %28, %121 : vector<8x32xf32>
    %c0_44 = arith.constant 0 : index
    %c0_45 = arith.constant 0 : index
    %c0_46 = arith.constant 0 : index
    %123 = vector.load %arg8[%c0_44, %c0_45, %c0_46] : memref<2x1x32xf32, #tpu.memory_space<vmem>>, vector<1x1x32xf32>
    %124 = vector.shape_cast %123 : vector<1x1x32xf32> to vector<1x32xf32>
    %c0_47 = arith.constant 0 : index
    %c0_48 = arith.constant 0 : index
    %c0_49 = arith.constant 0 : index
    %125 = vector.load %arg9[%c0_47, %c0_48, %c0_49] : memref<2x1x32xf32, #tpu.memory_space<vmem>>, vector<1x1x32xf32>
    %126 = vector.shape_cast %125 : vector<1x1x32xf32> to vector<1x32xf32>
    %cst_50 = arith.constant dense<0.000000e+00> : vector<8xf32>
    %127 = vector.multi_reduction <add>, %122, %cst_50 [1] : vector<8x32xf32> to vector<8xf32>
    %128 = vector.shape_cast %127 : vector<8xf32> to vector<8x1xf32>
    %cst_51 = arith.constant 3.200000e+01 : f32
    %129 = vector.broadcast %cst_51 : f32 to vector<8x1xf32>
    %130 = arith.divf %128, %129 : vector<8x1xf32>
    %131 = vector.broadcast %130 : vector<8x1xf32> to vector<8x32xf32>
    %132 = arith.subf %122, %131 : vector<8x32xf32>
    %133 = vector.broadcast %130 : vector<8x1xf32> to vector<8x32xf32>
    %134 = arith.subf %122, %133 : vector<8x32xf32>
    %135 = arith.mulf %132, %134 : vector<8x32xf32>
    %cst_52 = arith.constant dense<0.000000e+00> : vector<8xf32>
    %136 = vector.multi_reduction <add>, %135, %cst_52 [1] : vector<8x32xf32> to vector<8xf32>
    %137 = vector.shape_cast %136 : vector<8xf32> to vector<8x1xf32>
    %cst_53 = arith.constant 3.200000e+01 : f32
    %138 = vector.broadcast %cst_53 : f32 to vector<8x1xf32>
    %139 = arith.divf %137, %138 : vector<8x1xf32>
    %140 = vector.broadcast %130 : vector<8x1xf32> to vector<8x32xf32>
    %141 = arith.subf %122, %140 : vector<8x32xf32>
    %cst_54 = arith.constant 9.99999996E-13 : f32
    %142 = vector.broadcast %cst_54 : f32 to vector<8x1xf32>
    %143 = arith.addf %139, %142 : vector<8x1xf32>
    %144 = math.rsqrt %143 : vector<8x1xf32>
    %145 = vector.broadcast %144 : vector<8x1xf32> to vector<8x32xf32>
    %146 = arith.mulf %141, %145 : vector<8x32xf32>
    %147 = vector.broadcast %124 : vector<1x32xf32> to vector<8x32xf32>
    %148 = arith.mulf %146, %147 : vector<8x32xf32>
    %149 = vector.broadcast %126 : vector<1x32xf32> to vector<8x32xf32>
    %150 = arith.addf %148, %149 : vector<8x32xf32>
    %151 = arith.truncf %150 : vector<8x32xf32> to vector<8x32xbf16>
    %c0_55 = arith.constant 0 : index
    %c0_56 = arith.constant 0 : index
    %c0_57 = arith.constant 0 : index
    %152 = vector.load %arg10[%c0_55, %c0_56, %c0_57] : memref<2x32x64xbf16, #tpu.memory_space<vmem>>, vector<1x32x64xbf16>
    %153 = vector.shape_cast %152 : vector<1x32x64xbf16> to vector<32x64xbf16>
    %cst_58 = arith.constant dense<0.000000e+00> : vector<8x64xf32>
    %154 = tpu.matmul %151, %153, %cst_58 {dimension_numbers = #tpu.dot_dimension_numbers<[1], [0], [0], [1], [0, 0, 1, 1], [], []>} : vector<8x32xbf16>, vector<32x64xbf16>, vector<8x64xf32> -> vector<8x64xf32>
    %c0_59 = arith.constant 0 : index
    %c0_60 = arith.constant 0 : index
    %c0_61 = arith.constant 0 : index
    %155 = vector.load %arg11[%c0_59, %c0_60, %c0_61] : memref<2x1x64xf32, #tpu.memory_space<vmem>>, vector<1x1x64xf32>
    %156 = vector.shape_cast %155 : vector<1x1x64xf32> to vector<1x64xf32>
    %157 = vector.broadcast %156 : vector<1x64xf32> to vector<8x64xf32>
    %158 = arith.addf %154, %157 : vector<8x64xf32>
    %159 = arith.mulf %158, %158 : vector<8x64xf32>
    %160 = arith.mulf %158, %159 : vector<8x64xf32>
    %cst_62 = arith.constant 4.471500e-02 : f32
    %161 = vector.broadcast %cst_62 : f32 to vector<8x64xf32>
    %162 = arith.mulf %161, %160 : vector<8x64xf32>
    %163 = arith.addf %158, %162 : vector<8x64xf32>
    %cst_63 = arith.constant 0.797884583 : f32
    %164 = vector.broadcast %cst_63 : f32 to vector<8x64xf32>
    %165 = arith.mulf %164, %163 : vector<8x64xf32>
    %166 = math.tanh %165 : vector<8x64xf32>
    %cst_64 = arith.constant 1.000000e+00 : f32
    %167 = vector.broadcast %cst_64 : f32 to vector<8x64xf32>
    %168 = arith.addf %167, %166 : vector<8x64xf32>
    %cst_65 = arith.constant 5.000000e-01 : f32
    %169 = vector.broadcast %cst_65 : f32 to vector<8x64xf32>
    %170 = arith.mulf %169, %168 : vector<8x64xf32>
    %171 = arith.mulf %158, %170 : vector<8x64xf32>
    %172 = arith.truncf %171 : vector<8x64xf32> to vector<8x64xbf16>
    %c0_66 = arith.constant 0 : index
    %c0_67 = arith.constant 0 : index
    %c0_68 = arith.constant 0 : index
    %173 = vector.load %arg12[%c0_66, %c0_67, %c0_68] : memref<2x64x32xbf16, #tpu.memory_space<vmem>>, vector<1x64x32xbf16>
    %174 = vector.shape_cast %173 : vector<1x64x32xbf16> to vector<64x32xbf16>
    %cst_69 = arith.constant dense<0.000000e+00> : vector<8x32xf32>
    %175 = tpu.matmul %172, %174, %cst_69 {dimension_numbers = #tpu.dot_dimension_numbers<[1], [0], [0], [1], [0, 0, 1, 1], [], []>} : vector<8x64xbf16>, vector<64x32xbf16>, vector<8x32xf32> -> vector<8x32xf32>
    %c0_70 = arith.constant 0 : index
    %c0_71 = arith.constant 0 : index
    %c0_72 = arith.constant 0 : index
    %176 = vector.load %arg13[%c0_70, %c0_71, %c0_72] : memref<2x1x32xf32, #tpu.memory_space<vmem>>, vector<1x1x32xf32>
    %177 = vector.shape_cast %176 : vector<1x1x32xf32> to vector<1x32xf32>
    %178 = vector.broadcast %177 : vector<1x32xf32> to vector<8x32xf32>
    %179 = arith.addf %175, %178 : vector<8x32xf32>
    %180 = arith.addf %150, %179 : vector<8x32xf32>
    %c0_73 = arith.constant 0 : index
    %c0_74 = arith.constant 0 : index
    %c0_75 = arith.constant 0 : index
    %181 = vector.load %arg14[%c0_73, %c0_74, %c0_75] : memref<2x1x32xf32, #tpu.memory_space<vmem>>, vector<1x1x32xf32>
    %182 = vector.shape_cast %181 : vector<1x1x32xf32> to vector<1x32xf32>
    %c0_76 = arith.constant 0 : index
    %c0_77 = arith.constant 0 : index
    %c0_78 = arith.constant 0 : index
    %183 = vector.load %arg15[%c0_76, %c0_77, %c0_78] : memref<2x1x32xf32, #tpu.memory_space<vmem>>, vector<1x1x32xf32>
    %184 = vector.shape_cast %183 : vector<1x1x32xf32> to vector<1x32xf32>
    %cst_79 = arith.constant dense<0.000000e+00> : vector<8xf32>
    %185 = vector.multi_reduction <add>, %180, %cst_79 [1] : vector<8x32xf32> to vector<8xf32>
    %186 = vector.shape_cast %185 : vector<8xf32> to vector<8x1xf32>
    %cst_80 = arith.constant 3.200000e+01 : f32
    %187 = vector.broadcast %cst_80 : f32 to vector<8x1xf32>
    %188 = arith.divf %186, %187 : vector<8x1xf32>
    %189 = vector.broadcast %188 : vector<8x1xf32> to vector<8x32xf32>
    %190 = arith.subf %180, %189 : vector<8x32xf32>
    %191 = vector.broadcast %188 : vector<8x1xf32> to vector<8x32xf32>
    %192 = arith.subf %180, %191 : vector<8x32xf32>
    %193 = arith.mulf %190, %192 : vector<8x32xf32>
    %cst_81 = arith.constant dense<0.000000e+00> : vector<8xf32>
    %194 = vector.multi_reduction <add>, %193, %cst_81 [1] : vector<8x32xf32> to vector<8xf32>
    %195 = vector.shape_cast %194 : vector<8xf32> to vector<8x1xf32>
    %cst_82 = arith.constant 3.200000e+01 : f32
    %196 = vector.broadcast %cst_82 : f32 to vector<8x1xf32>
    %197 = arith.divf %195, %196 : vector<8x1xf32>
    %198 = vector.broadcast %188 : vector<8x1xf32> to vector<8x32xf32>
    %199 = arith.subf %180, %198 : vector<8x32xf32>
    %cst_83 = arith.constant 9.99999996E-13 : f32
    %200 = vector.broadcast %cst_83 : f32 to vector<8x1xf32>
    %201 = arith.addf %197, %200 : vector<8x1xf32>
    %202 = math.rsqrt %201 : vector<8x1xf32>
    %203 = vector.broadcast %202 : vector<8x1xf32> to vector<8x32xf32>
    %204 = arith.mulf %199, %203 : vector<8x32xf32>
    %205 = vector.broadcast %182 : vector<1x32xf32> to vector<8x32xf32>
    %206 = arith.mulf %204, %205 : vector<8x32xf32>
    %207 = vector.broadcast %184 : vector<1x32xf32> to vector<8x32xf32>
    %208 = arith.addf %206, %207 : vector<8x32xf32>
    %209 = arith.truncf %208 : vector<8x32xf32> to vector<8x32xbf16>
    %c1 = arith.constant 1 : index
    %c0_84 = arith.constant 0 : index
    %c0_85 = arith.constant 0 : index
    %210 = vector.load %arg4[%c1, %c0_84, %c0_85] : memref<2x32x96xbf16, #tpu.memory_space<vmem>>, vector<1x32x96xbf16>
    %211 = vector.shape_cast %210 : vector<1x32x96xbf16> to vector<32x96xbf16>
    %cst_86 = arith.constant dense<0.000000e+00> : vector<8x96xf32>
    %212 = tpu.matmul %209, %211, %cst_86 {dimension_numbers = #tpu.dot_dimension_numbers<[1], [0], [0], [1], [0, 0, 1, 1], [], []>} : vector<8x32xbf16>, vector<32x96xbf16>, vector<8x96xf32> -> vector<8x96xf32>
    %c1_87 = arith.constant 1 : index
    %c0_88 = arith.constant 0 : index
    %c0_89 = arith.constant 0 : index
    %213 = vector.load %arg5[%c1_87, %c0_88, %c0_89] : memref<2x1x96xf32, #tpu.memory_space<vmem>>, vector<1x1x96xf32>
    %214 = vector.shape_cast %213 : vector<1x1x96xf32> to vector<1x96xf32>
    %215 = vector.broadcast %214 : vector<1x96xf32> to vector<8x96xf32>
    %216 = arith.addf %212, %215 : vector<8x96xf32>
    %217 = vector.extract_strided_slice %216 {offsets = [0, 0], sizes = [8, 8], strides = [1, 1]} : vector<8x96xf32> to vector<8x8xf32>
    %cst_90 = arith.constant 0.353553385 : f32
    %218 = vector.broadcast %cst_90 : f32 to vector<8x8xf32>
    %219 = arith.mulf %217, %218 : vector<8x8xf32>
    %220 = vector.extract_strided_slice %216 {offsets = [0, 32], sizes = [8, 8], strides = [1, 1]} : vector<8x96xf32> to vector<8x8xf32>
    %221 = vector.extract_strided_slice %216 {offsets = [0, 64], sizes = [8, 8], strides = [1, 1]} : vector<8x96xf32> to vector<8x8xf32>
    %cst_91 = arith.constant dense<0.000000e+00> : vector<8x8xf32>
    %222 = tpu.matmul %219, %220, %cst_91 {dimension_numbers = #tpu.dot_dimension_numbers<[1], [1], [0], [0], [0, 0, 1, 0], [], []>} : vector<8x8xf32>, vector<8x8xf32>, vector<8x8xf32> -> vector<8x8xf32>
    %cst_92 = arith.constant dense<0xFF800000> : vector<8xf32>
    %223 = vector.multi_reduction <maximumf>, %222, %cst_92 [1] : vector<8x8xf32> to vector<8xf32>
    %224 = vector.shape_cast %223 : vector<8xf32> to vector<8x1xf32>
    %225 = vector.broadcast %224 : vector<8x1xf32> to vector<8x8xf32>
    %226 = arith.subf %222, %225 : vector<8x8xf32>
    %227 = math.exp %226 : vector<8x8xf32>
    %cst_93 = arith.constant dense<0.000000e+00> : vector<8xf32>
    %228 = vector.multi_reduction <add>, %227, %cst_93 [1] : vector<8x8xf32> to vector<8xf32>
    %229 = vector.shape_cast %228 : vector<8xf32> to vector<8x1xf32>
    %230 = arith.truncf %227 : vector<8x8xf32> to vector<8x8xbf16>
    %231 = arith.truncf %221 : vector<8x8xf32> to vector<8x8xbf16>
    %cst_94 = arith.constant dense<0.000000e+00> : vector<8x8xf32>
    %232 = tpu.matmul %230, %231, %cst_94 {dimension_numbers = #tpu.dot_dimension_numbers<[1], [0], [0], [1], [0, 0, 1, 1], [], []>} : vector<8x8xbf16>, vector<8x8xbf16>, vector<8x8xf32> -> vector<8x8xf32>
    %233 = tpu.reciprocal %229 {approx = true} : vector<8x1xf32> -> vector<8x1xf32>
    %234 = vector.broadcast %233 : vector<8x1xf32> to vector<8x8xf32>
    %235 = arith.mulf %232, %234 : vector<8x8xf32>
    %236 = vector.extract_strided_slice %216 {offsets = [0, 8], sizes = [8, 8], strides = [1, 1]} : vector<8x96xf32> to vector<8x8xf32>
    %cst_95 = arith.constant 0.353553385 : f32
    %237 = vector.broadcast %cst_95 : f32 to vector<8x8xf32>
    %238 = arith.mulf %236, %237 : vector<8x8xf32>
    %239 = vector.extract_strided_slice %216 {offsets = [0, 40], sizes = [8, 8], strides = [1, 1]} : vector<8x96xf32> to vector<8x8xf32>
    %240 = vector.extract_strided_slice %216 {offsets = [0, 72], sizes = [8, 8], strides = [1, 1]} : vector<8x96xf32> to vector<8x8xf32>
    %cst_96 = arith.constant dense<0.000000e+00> : vector<8x8xf32>
    %241 = tpu.matmul %238, %239, %cst_96 {dimension_numbers = #tpu.dot_dimension_numbers<[1], [1], [0], [0], [0, 0, 1, 0], [], []>} : vector<8x8xf32>, vector<8x8xf32>, vector<8x8xf32> -> vector<8x8xf32>
    %cst_97 = arith.constant dense<0xFF800000> : vector<8xf32>
    %242 = vector.multi_reduction <maximumf>, %241, %cst_97 [1] : vector<8x8xf32> to vector<8xf32>
    %243 = vector.shape_cast %242 : vector<8xf32> to vector<8x1xf32>
    %244 = vector.broadcast %243 : vector<8x1xf32> to vector<8x8xf32>
    %245 = arith.subf %241, %244 : vector<8x8xf32>
    %246 = math.exp %245 : vector<8x8xf32>
    %cst_98 = arith.constant dense<0.000000e+00> : vector<8xf32>
    %247 = vector.multi_reduction <add>, %246, %cst_98 [1] : vector<8x8xf32> to vector<8xf32>
    %248 = vector.shape_cast %247 : vector<8xf32> to vector<8x1xf32>
    %249 = arith.truncf %246 : vector<8x8xf32> to vector<8x8xbf16>
    %250 = arith.truncf %240 : vector<8x8xf32> to vector<8x8xbf16>
    %cst_99 = arith.constant dense<0.000000e+00> : vector<8x8xf32>
    %251 = tpu.matmul %249, %250, %cst_99 {dimension_numbers = #tpu.dot_dimension_numbers<[1], [0], [0], [1], [0, 0, 1, 1], [], []>} : vector<8x8xbf16>, vector<8x8xbf16>, vector<8x8xf32> -> vector<8x8xf32>
    %252 = tpu.reciprocal %248 {approx = true} : vector<8x1xf32> -> vector<8x1xf32>
    %253 = vector.broadcast %252 : vector<8x1xf32> to vector<8x8xf32>
    %254 = arith.mulf %251, %253 : vector<8x8xf32>
    %255 = vector.extract_strided_slice %216 {offsets = [0, 16], sizes = [8, 8], strides = [1, 1]} : vector<8x96xf32> to vector<8x8xf32>
    %cst_100 = arith.constant 0.353553385 : f32
    %256 = vector.broadcast %cst_100 : f32 to vector<8x8xf32>
    %257 = arith.mulf %255, %256 : vector<8x8xf32>
    %258 = vector.extract_strided_slice %216 {offsets = [0, 48], sizes = [8, 8], strides = [1, 1]} : vector<8x96xf32> to vector<8x8xf32>
    %259 = vector.extract_strided_slice %216 {offsets = [0, 80], sizes = [8, 8], strides = [1, 1]} : vector<8x96xf32> to vector<8x8xf32>
    %cst_101 = arith.constant dense<0.000000e+00> : vector<8x8xf32>
    %260 = tpu.matmul %257, %258, %cst_101 {dimension_numbers = #tpu.dot_dimension_numbers<[1], [1], [0], [0], [0, 0, 1, 0], [], []>} : vector<8x8xf32>, vector<8x8xf32>, vector<8x8xf32> -> vector<8x8xf32>
    %cst_102 = arith.constant dense<0xFF800000> : vector<8xf32>
    %261 = vector.multi_reduction <maximumf>, %260, %cst_102 [1] : vector<8x8xf32> to vector<8xf32>
    %262 = vector.shape_cast %261 : vector<8xf32> to vector<8x1xf32>
    %263 = vector.broadcast %262 : vector<8x1xf32> to vector<8x8xf32>
    %264 = arith.subf %260, %263 : vector<8x8xf32>
    %265 = math.exp %264 : vector<8x8xf32>
    %cst_103 = arith.constant dense<0.000000e+00> : vector<8xf32>
    %266 = vector.multi_reduction <add>, %265, %cst_103 [1] : vector<8x8xf32> to vector<8xf32>
    %267 = vector.shape_cast %266 : vector<8xf32> to vector<8x1xf32>
    %268 = arith.truncf %265 : vector<8x8xf32> to vector<8x8xbf16>
    %269 = arith.truncf %259 : vector<8x8xf32> to vector<8x8xbf16>
    %cst_104 = arith.constant dense<0.000000e+00> : vector<8x8xf32>
    %270 = tpu.matmul %268, %269, %cst_104 {dimension_numbers = #tpu.dot_dimension_numbers<[1], [0], [0], [1], [0, 0, 1, 1], [], []>} : vector<8x8xbf16>, vector<8x8xbf16>, vector<8x8xf32> -> vector<8x8xf32>
    %271 = tpu.reciprocal %267 {approx = true} : vector<8x1xf32> -> vector<8x1xf32>
    %272 = vector.broadcast %271 : vector<8x1xf32> to vector<8x8xf32>
    %273 = arith.mulf %270, %272 : vector<8x8xf32>
    %274 = vector.extract_strided_slice %216 {offsets = [0, 24], sizes = [8, 8], strides = [1, 1]} : vector<8x96xf32> to vector<8x8xf32>
    %cst_105 = arith.constant 0.353553385 : f32
    %275 = vector.broadcast %cst_105 : f32 to vector<8x8xf32>
    %276 = arith.mulf %274, %275 : vector<8x8xf32>
    %277 = vector.extract_strided_slice %216 {offsets = [0, 56], sizes = [8, 8], strides = [1, 1]} : vector<8x96xf32> to vector<8x8xf32>
    %278 = vector.extract_strided_slice %216 {offsets = [0, 88], sizes = [8, 8], strides = [1, 1]} : vector<8x96xf32> to vector<8x8xf32>
    %cst_106 = arith.constant dense<0.000000e+00> : vector<8x8xf32>
    %279 = tpu.matmul %276, %277, %cst_106 {dimension_numbers = #tpu.dot_dimension_numbers<[1], [1], [0], [0], [0, 0, 1, 0], [], []>} : vector<8x8xf32>, vector<8x8xf32>, vector<8x8xf32> -> vector<8x8xf32>
    %cst_107 = arith.constant dense<0xFF800000> : vector<8xf32>
    %280 = vector.multi_reduction <maximumf>, %279, %cst_107 [1] : vector<8x8xf32> to vector<8xf32>
    %281 = vector.shape_cast %280 : vector<8xf32> to vector<8x1xf32>
    %282 = vector.broadcast %281 : vector<8x1xf32> to vector<8x8xf32>
    %283 = arith.subf %279, %282 : vector<8x8xf32>
    %284 = math.exp %283 : vector<8x8xf32>
    %cst_108 = arith.constant dense<0.000000e+00> : vector<8xf32>
    %285 = vector.multi_reduction <add>, %284, %cst_108 [1] : vector<8x8xf32> to vector<8xf32>
    %286 = vector.shape_cast %285 : vector<8xf32> to vector<8x1xf32>
    %287 = arith.truncf %284 : vector<8x8xf32> to vector<8x8xbf16>
    %288 = arith.truncf %278 : vector<8x8xf32> to vector<8x8xbf16>
    %cst_109 = arith.constant dense<0.000000e+00> : vector<8x8xf32>
    %289 = tpu.matmul %287, %288, %cst_109 {dimension_numbers = #tpu.dot_dimension_numbers<[1], [0], [0], [1], [0, 0, 1, 1], [], []>} : vector<8x8xbf16>, vector<8x8xbf16>, vector<8x8xf32> -> vector<8x8xf32>
    %290 = tpu.reciprocal %286 {approx = true} : vector<8x1xf32> -> vector<8x1xf32>
    %291 = vector.broadcast %290 : vector<8x1xf32> to vector<8x8xf32>
    %292 = arith.mulf %289, %291 : vector<8x8xf32>
    %293 = tpu.concatenate %235, %254, %273, %292 in 1 : vector<8x8xf32>, vector<8x8xf32>, vector<8x8xf32>, vector<8x8xf32> -> vector<8x32xf32>
    %294 = arith.truncf %293 : vector<8x32xf32> to vector<8x32xbf16>
    %c1_110 = arith.constant 1 : index
    %c0_111 = arith.constant 0 : index
    %c0_112 = arith.constant 0 : index
    %295 = vector.load %arg6[%c1_110, %c0_111, %c0_112] : memref<2x32x32xbf16, #tpu.memory_space<vmem>>, vector<1x32x32xbf16>
    %296 = vector.shape_cast %295 : vector<1x32x32xbf16> to vector<32x32xbf16>
    %cst_113 = arith.constant dense<0.000000e+00> : vector<8x32xf32>
    %297 = tpu.matmul %294, %296, %cst_113 {dimension_numbers = #tpu.dot_dimension_numbers<[1], [0], [0], [1], [0, 0, 1, 1], [], []>} : vector<8x32xbf16>, vector<32x32xbf16>, vector<8x32xf32> -> vector<8x32xf32>
    %c1_114 = arith.constant 1 : index
    %c0_115 = arith.constant 0 : index
    %c0_116 = arith.constant 0 : index
    %298 = vector.load %arg7[%c1_114, %c0_115, %c0_116] : memref<2x1x32xf32, #tpu.memory_space<vmem>>, vector<1x1x32xf32>
    %299 = vector.shape_cast %298 : vector<1x1x32xf32> to vector<1x32xf32>
    %300 = vector.broadcast %299 : vector<1x32xf32> to vector<8x32xf32>
    %301 = arith.addf %297, %300 : vector<8x32xf32>
    %302 = arith.addf %208, %301 : vector<8x32xf32>
    %c1_117 = arith.constant 1 : index
    %c0_118 = arith.constant 0 : index
    %c0_119 = arith.constant 0 : index
    %303 = vector.load %arg8[%c1_117, %c0_118, %c0_119] : memref<2x1x32xf32, #tpu.memory_space<vmem>>, vector<1x1x32xf32>
    %304 = vector.shape_cast %303 : vector<1x1x32xf32> to vector<1x32xf32>
    %c1_120 = arith.constant 1 : index
    %c0_121 = arith.constant 0 : index
    %c0_122 = arith.constant 0 : index
    %305 = vector.load %arg9[%c1_120, %c0_121, %c0_122] : memref<2x1x32xf32, #tpu.memory_space<vmem>>, vector<1x1x32xf32>
    %306 = vector.shape_cast %305 : vector<1x1x32xf32> to vector<1x32xf32>
    %cst_123 = arith.constant dense<0.000000e+00> : vector<8xf32>
    %307 = vector.multi_reduction <add>, %302, %cst_123 [1] : vector<8x32xf32> to vector<8xf32>
    %308 = vector.shape_cast %307 : vector<8xf32> to vector<8x1xf32>
    %cst_124 = arith.constant 3.200000e+01 : f32
    %309 = vector.broadcast %cst_124 : f32 to vector<8x1xf32>
    %310 = arith.divf %308, %309 : vector<8x1xf32>
    %311 = vector.broadcast %310 : vector<8x1xf32> to vector<8x32xf32>
    %312 = arith.subf %302, %311 : vector<8x32xf32>
    %313 = vector.broadcast %310 : vector<8x1xf32> to vector<8x32xf32>
    %314 = arith.subf %302, %313 : vector<8x32xf32>
    %315 = arith.mulf %312, %314 : vector<8x32xf32>
    %cst_125 = arith.constant dense<0.000000e+00> : vector<8xf32>
    %316 = vector.multi_reduction <add>, %315, %cst_125 [1] : vector<8x32xf32> to vector<8xf32>
    %317 = vector.shape_cast %316 : vector<8xf32> to vector<8x1xf32>
    %cst_126 = arith.constant 3.200000e+01 : f32
    %318 = vector.broadcast %cst_126 : f32 to vector<8x1xf32>
    %319 = arith.divf %317, %318 : vector<8x1xf32>
    %320 = vector.broadcast %310 : vector<8x1xf32> to vector<8x32xf32>
    %321 = arith.subf %302, %320 : vector<8x32xf32>
    %cst_127 = arith.constant 9.99999996E-13 : f32
    %322 = vector.broadcast %cst_127 : f32 to vector<8x1xf32>
    %323 = arith.addf %319, %322 : vector<8x1xf32>
    %324 = math.rsqrt %323 : vector<8x1xf32>
    %325 = vector.broadcast %324 : vector<8x1xf32> to vector<8x32xf32>
    %326 = arith.mulf %321, %325 : vector<8x32xf32>
    %327 = vector.broadcast %304 : vector<1x32xf32> to vector<8x32xf32>
    %328 = arith.mulf %326, %327 : vector<8x32xf32>
    %329 = vector.broadcast %306 : vector<1x32xf32> to vector<8x32xf32>
    %330 = arith.addf %328, %329 : vector<8x32xf32>
    %331 = arith.truncf %330 : vector<8x32xf32> to vector<8x32xbf16>
    %c1_128 = arith.constant 1 : index
    %c0_129 = arith.constant 0 : index
    %c0_130 = arith.constant 0 : index
    %332 = vector.load %arg10[%c1_128, %c0_129, %c0_130] : memref<2x32x64xbf16, #tpu.memory_space<vmem>>, vector<1x32x64xbf16>
    %333 = vector.shape_cast %332 : vector<1x32x64xbf16> to vector<32x64xbf16>
    %cst_131 = arith.constant dense<0.000000e+00> : vector<8x64xf32>
    %334 = tpu.matmul %331, %333, %cst_131 {dimension_numbers = #tpu.dot_dimension_numbers<[1], [0], [0], [1], [0, 0, 1, 1], [], []>} : vector<8x32xbf16>, vector<32x64xbf16>, vector<8x64xf32> -> vector<8x64xf32>
    %c1_132 = arith.constant 1 : index
    %c0_133 = arith.constant 0 : index
    %c0_134 = arith.constant 0 : index
    %335 = vector.load %arg11[%c1_132, %c0_133, %c0_134] : memref<2x1x64xf32, #tpu.memory_space<vmem>>, vector<1x1x64xf32>
    %336 = vector.shape_cast %335 : vector<1x1x64xf32> to vector<1x64xf32>
    %337 = vector.broadcast %336 : vector<1x64xf32> to vector<8x64xf32>
    %338 = arith.addf %334, %337 : vector<8x64xf32>
    %339 = arith.mulf %338, %338 : vector<8x64xf32>
    %340 = arith.mulf %338, %339 : vector<8x64xf32>
    %cst_135 = arith.constant 4.471500e-02 : f32
    %341 = vector.broadcast %cst_135 : f32 to vector<8x64xf32>
    %342 = arith.mulf %341, %340 : vector<8x64xf32>
    %343 = arith.addf %338, %342 : vector<8x64xf32>
    %cst_136 = arith.constant 0.797884583 : f32
    %344 = vector.broadcast %cst_136 : f32 to vector<8x64xf32>
    %345 = arith.mulf %344, %343 : vector<8x64xf32>
    %346 = math.tanh %345 : vector<8x64xf32>
    %cst_137 = arith.constant 1.000000e+00 : f32
    %347 = vector.broadcast %cst_137 : f32 to vector<8x64xf32>
    %348 = arith.addf %347, %346 : vector<8x64xf32>
    %cst_138 = arith.constant 5.000000e-01 : f32
    %349 = vector.broadcast %cst_138 : f32 to vector<8x64xf32>
    %350 = arith.mulf %349, %348 : vector<8x64xf32>
    %351 = arith.mulf %338, %350 : vector<8x64xf32>
    %352 = arith.truncf %351 : vector<8x64xf32> to vector<8x64xbf16>
    %c1_139 = arith.constant 1 : index
    %c0_140 = arith.constant 0 : index
    %c0_141 = arith.constant 0 : index
    %353 = vector.load %arg12[%c1_139, %c0_140, %c0_141] : memref<2x64x32xbf16, #tpu.memory_space<vmem>>, vector<1x64x32xbf16>
    %354 = vector.shape_cast %353 : vector<1x64x32xbf16> to vector<64x32xbf16>
    %cst_142 = arith.constant dense<0.000000e+00> : vector<8x32xf32>
    %355 = tpu.matmul %352, %354, %cst_142 {dimension_numbers = #tpu.dot_dimension_numbers<[1], [0], [0], [1], [0, 0, 1, 1], [], []>} : vector<8x64xbf16>, vector<64x32xbf16>, vector<8x32xf32> -> vector<8x32xf32>
    %c1_143 = arith.constant 1 : index
    %c0_144 = arith.constant 0 : index
    %c0_145 = arith.constant 0 : index
    %356 = vector.load %arg13[%c1_143, %c0_144, %c0_145] : memref<2x1x32xf32, #tpu.memory_space<vmem>>, vector<1x1x32xf32>
    %357 = vector.shape_cast %356 : vector<1x1x32xf32> to vector<1x32xf32>
    %358 = vector.broadcast %357 : vector<1x32xf32> to vector<8x32xf32>
    %359 = arith.addf %355, %358 : vector<8x32xf32>
    %360 = arith.addf %330, %359 : vector<8x32xf32>
    %c1_146 = arith.constant 1 : index
    %c0_147 = arith.constant 0 : index
    %c0_148 = arith.constant 0 : index
    %361 = vector.load %arg14[%c1_146, %c0_147, %c0_148] : memref<2x1x32xf32, #tpu.memory_space<vmem>>, vector<1x1x32xf32>
    %362 = vector.shape_cast %361 : vector<1x1x32xf32> to vector<1x32xf32>
    %c1_149 = arith.constant 1 : index
    %c0_150 = arith.constant 0 : index
    %c0_151 = arith.constant 0 : index
    %363 = vector.load %arg15[%c1_149, %c0_150, %c0_151] : memref<2x1x32xf32, #tpu.memory_space<vmem>>, vector<1x1x32xf32>
    %364 = vector.shape_cast %363 : vector<1x1x32xf32> to vector<1x32xf32>
    %cst_152 = arith.constant dense<0.000000e+00> : vector<8xf32>
    %365 = vector.multi_reduction <add>, %360, %cst_152 [1] : vector<8x32xf32> to vector<8xf32>
    %366 = vector.shape_cast %365 : vector<8xf32> to vector<8x1xf32>
    %cst_153 = arith.constant 3.200000e+01 : f32
    %367 = vector.broadcast %cst_153 : f32 to vector<8x1xf32>
    %368 = arith.divf %366, %367 : vector<8x1xf32>
    %369 = vector.broadcast %368 : vector<8x1xf32> to vector<8x32xf32>
    %370 = arith.subf %360, %369 : vector<8x32xf32>
    %371 = vector.broadcast %368 : vector<8x1xf32> to vector<8x32xf32>
    %372 = arith.subf %360, %371 : vector<8x32xf32>
    %373 = arith.mulf %370, %372 : vector<8x32xf32>
    %cst_154 = arith.constant dense<0.000000e+00> : vector<8xf32>
    %374 = vector.multi_reduction <add>, %373, %cst_154 [1] : vector<8x32xf32> to vector<8xf32>
    %375 = vector.shape_cast %374 : vector<8xf32> to vector<8x1xf32>
    %cst_155 = arith.constant 3.200000e+01 : f32
    %376 = vector.broadcast %cst_155 : f32 to vector<8x1xf32>
    %377 = arith.divf %375, %376 : vector<8x1xf32>
    %378 = vector.broadcast %368 : vector<8x1xf32> to vector<8x32xf32>
    %379 = arith.subf %360, %378 : vector<8x32xf32>
    %cst_156 = arith.constant 9.99999996E-13 : f32
    %380 = vector.broadcast %cst_156 : f32 to vector<8x1xf32>
    %381 = arith.addf %377, %380 : vector<8x1xf32>
    %382 = math.rsqrt %381 : vector<8x1xf32>
    %383 = vector.broadcast %382 : vector<8x1xf32> to vector<8x32xf32>
    %384 = arith.mulf %379, %383 : vector<8x32xf32>
    %385 = vector.broadcast %362 : vector<1x32xf32> to vector<8x32xf32>
    %386 = arith.mulf %384, %385 : vector<8x32xf32>
    %387 = vector.broadcast %364 : vector<1x32xf32> to vector<8x32xf32>
    %388 = arith.addf %386, %387 : vector<8x32xf32>
    %389 = vector.extract_strided_slice %388 {offsets = [0, 0], sizes = [1, 32], strides = [1, 1]} : vector<8x32xf32> to vector<1x32xf32>
    %390 = arith.truncf %389 : vector<1x32xf32> to vector<1x32xbf16>
    %c0_157 = arith.constant 0 : index
    %c0_158 = arith.constant 0 : index
    %391 = vector.load %arg16[%c0_157, %c0_158] : memref<32x128xbf16, #tpu.memory_space<vmem>>, vector<32x128xbf16>
    %cst_159 = arith.constant dense<0.000000e+00> : vector<1x128xf32>
    %392 = tpu.matmul %390, %391, %cst_159 {dimension_numbers = #tpu.dot_dimension_numbers<[1], [0], [0], [1], [0, 0, 1, 1], [], []>} : vector<1x32xbf16>, vector<32x128xbf16>, vector<1x128xf32> -> vector<1x128xf32>
    %c0_160 = arith.constant 0 : index
    %c0_161 = arith.constant 0 : index
    %393 = vector.load %arg17[%c0_160, %c0_161] : memref<1x128xf32, #tpu.memory_space<vmem>>, vector<1x128xf32>
    %394 = arith.addf %392, %393 : vector<1x128xf32>
    %c0_162 = arith.constant 0 : index
    %c0_163 = arith.constant 0 : index
    %c0_164 = arith.constant 0 : index
    %395 = vector.load %arg18[%c0_162, %c0_163, %c0_164] : memref<1x1x128xf32, #tpu.memory_space<vmem>>, vector<1x1x128xf32>
    %396 = vector.shape_cast %395 : vector<1x1x128xf32> to vector<1x128xf32>
    %397 = vector.shape_cast %394 : vector<1x128xf32> to vector<1x1x128xf32>
    tpu.vector_store %arg18[%c0_162, %c0_163, %c0_164], %397 {strides = array<i32>} : memref<1x1x128xf32, #tpu.memory_space<vmem>>, vector<1x1x128xf32>,
    return
  }
  func.func @transform_0(%arg0: i32) -> (i32, i32, i32) {
    %c0_i32 = arith.constant 0 : i32
    %c0_i32_0 = arith.constant 0 : i32
    %c0_i32_1 = arith.constant 0 : i32
    return %arg0, %c0_i32, %c0_i32_0 : i32, i32, i32
  }
  func.func @transform_1(%arg0: i32) -> (i32, i32) {
    %c0_i32 = arith.constant 0 : i32
    %c0_i32_0 = arith.constant 0 : i32
    %c0_i32_1 = arith.constant 0 : i32
    return %c0_i32, %c0_i32_0 : i32, i32
  }
  func.func @transform_2(%arg0: i32) -> (i32, i32) {
    %c0_i32 = arith.constant 0 : i32
    %c0_i32_0 = arith.constant 0 : i32
    %c0_i32_1 = arith.constant 0 : i32
    return %c0_i32, %c0_i32_0 : i32, i32
  }
  func.func @transform_3(%arg0: i32) -> (i32, i32, i32) {
    %c0_i32 = arith.constant 0 : i32
    %c0_i32_0 = arith.constant 0 : i32
    %c0_i32_1 = arith.constant 0 : i32
    %c0_i32_2 = arith.constant 0 : i32
    return %c0_i32, %c0_i32_0, %c0_i32_1 : i32, i32, i32
  }
  func.func @transform_4(%arg0: i32) -> (i32, i32, i32) {
    %c0_i32 = arith.constant 0 : i32
    %c0_i32_0 = arith.constant 0 : i32
    %c0_i32_1 = arith.constant 0 : i32
    %c0_i32_2 = arith.constant 0 : i32
    return %c0_i32, %c0_i32_0, %c0_i32_1 : i32, i32, i32
  }
  func.func @transform_5(%arg0: i32) -> (i32, i32, i32) {
    %c0_i32 = arith.constant 0 : i32
    %c0_i32_0 = arith.constant 0 : i32
    %c0_i32_1 = arith.constant 0 : i32
    %c0_i32_2 = arith.constant 0 : i32
    return %c0_i32, %c0_i32_0, %c0_i32_1 : i32, i32, i32
  }
  func.func @transform_6(%arg0: i32) -> (i32, i32, i32) {
    %c0_i32 = arith.constant 0 : i32
    %c0_i32_0 = arith.constant 0 : i32
    %c0_i32_1 = arith.constant 0 : i32
    %c0_i32_2 = arith.constant 0 : i32
    return %c0_i32, %c0_i32_0, %c0_i32_1 : i32, i32, i32
  }
  func.func @transform_7(%arg0: i32) -> (i32, i32, i32) {
    %c0_i32 = arith.constant 0 : i32
    %c0_i32_0 = arith.constant 0 : i32
    %c0_i32_1 = arith.constant 0 : i32
    %c0_i32_2 = arith.constant 0 : i32
    return %c0_i32, %c0_i32_0, %c0_i32_1 : i32, i32, i32
  }
  func.func @transform_8(%arg0: i32) -> (i32, i32, i32) {
    %c0_i32 = arith.constant 0 : i32
    %c0_i32_0 = arith.constant 0 : i32
    %c0_i32_1 = arith.constant 0 : i32
    %c0_i32_2 = arith.constant 0 : i32
    return %c0_i32, %c0_i32_0, %c0_i32_1 : i32, i32, i32
  }
  func.func @transform_9(%arg0: i32) -> (i32, i32, i32) {
    %c0_i32 = arith.constant 0 : i32
    %c0_i32_0 = arith.constant 0 : i32
    %c0_i32_1 = arith.constant 0 : i32
    %c0_i32_2 = arith.constant 0 : i32
    return %c0_i32, %c0_i32_0, %c0_i32_1 : i32, i32, i32
  }
  func.func @transform_10(%arg0: i32) -> (i32, i32, i32) {
    %c0_i32 = arith.constant 0 : i32
    %c0_i32_0 = arith.constant 0 : i32
    %c0_i32_1 = arith.constant 0 : i32
    %c0_i32_2 = arith.constant 0 : i32
    return %c0_i32, %c0_i32_0, %c0_i32_1 : i32, i32, i32
  }
  func.func @transform_11(%arg0: i32) -> (i32, i32, i32) {
    %c0_i32 = arith.constant 0 : i32
    %c0_i32_0 = arith.constant 0 : i32
    %c0_i32_1 = arith.constant 0 : i32
    %c0_i32_2 = arith.constant 0 : i32
    return %c0_i32, %c0_i32_0, %c0_i32_1 : i32, i32, i32
  }
  func.func @transform_12(%arg0: i32) -> (i32, i32, i32) {
    %c0_i32 = arith.constant 0 : i32
    %c0_i32_0 = arith.constant 0 : i32
    %c0_i32_1 = arith.constant 0 : i32
    %c0_i32_2 = arith.constant 0 : i32
    return %c0_i32, %c0_i32_0, %c0_i32_1 : i32, i32, i32
  }
  func.func @transform_13(%arg0: i32) -> (i32, i32, i32) {
    %c0_i32 = arith.constant 0 : i32
    %c0_i32_0 = arith.constant 0 : i32
    %c0_i32_1 = arith.constant 0 : i32
    %c0_i32_2 = arith.constant 0 : i32
    return %c0_i32, %c0_i32_0, %c0_i32_1 : i32, i32, i32
  }
  func.func @transform_14(%arg0: i32) -> (i32, i32, i32) {
    %c0_i32 = arith.constant 0 : i32
    %c0_i32_0 = arith.constant 0 : i32
    %c0_i32_1 = arith.constant 0 : i32
    %c0_i32_2 = arith.constant 0 : i32
    return %c0_i32, %c0_i32_0, %c0_i32_1 : i32, i32, i32
  }
  func.func @transform_15(%arg0: i32) -> (i32, i32) {
    %c0_i32 = arith.constant 0 : i32
    %c0_i32_0 = arith.constant 0 : i32
    %c0_i32_1 = arith.constant 0 : i32
    return %c0_i32, %c0_i32_0 : i32, i32
  }
  func.func @transform_16(%arg0: i32) -> (i32, i32) {
    %c0_i32 = arith.constant 0 : i32
    %c0_i32_0 = arith.constant 0 : i32
    %c0_i32_1 = arith.constant 0 : i32
    return %c0_i32, %c0_i32_0 : i32, i32
  }
  func.func @transform_17(%arg0: i32) -> (i32, i32, i32) {
    %c0_i32 = arith.constant 0 : i32
    %c0_i32_0 = arith.constant 0 : i32
    %c0_i32_1 = arith.constant 0 : i32
    return %arg0, %c0_i32, %c0_i32_0 : i32, i32, i32
  }
}

</mosaic_0001>

<llo_original>
// kernel: tpu_custom_call.1
$region0: #{tpu_custom_call.1}
  #allocation0 [shape = 'u32[]', space=smem, size = 0x4, offset = 0x4, fixed_abs, tag = 'smem constant byte address 0x4 - core index']
  #allocation1 [shape = 'u32[144,128]{1,0:T(1,128)}', space=vmem, size = 0x12000, scoped, tag = 'internal scratch']
  %s0 = inlined_call_operand.hbm [shape: bf16[2,8,32], index: 0, kind: input, shape index: {}]
  %s1 = inlined_call_operand.vmem [shape: f32[1,32], index: 1, kind: input, shape index: {}]
  %s2 = inlined_call_operand.hbm [shape: f32[1,32], index: 2, kind: input, shape index: {}]
  %s3 = inlined_call_operand.vmem [shape: bf16[2,32,96], index: 3, kind: input, shape index: {}]
  %s4 = inlined_call_operand.hbm [shape: f32[2,1,96], index: 4, kind: input, shape index: {}]
  %s5 = inlined_call_operand.vmem [shape: bf16[2,32,32], index: 5, kind: input, shape index: {}]
  %s6 = inlined_call_operand.hbm [shape: f32[2,1,32], index: 6, kind: input, shape index: {}]
  %s7 = inlined_call_operand.hbm [shape: f32[2,1,32], index: 7, kind: input, shape index: {}]
  %s8 = inlined_call_operand.hbm [shape: f32[2,1,32], index: 8, kind: input, shape index: {}]
  %s9 = inlined_call_operand.vmem [shape: bf16[2,32,64], index: 9, kind: input, shape index: {}]
  %s10 = inlined_call_operand.hbm [shape: f32[2,1,64], index: 10, kind: input, shape index: {}]
  %s11 = inlined_call_operand.vmem [shape: bf16[2,64,32], index: 11, kind: input, shape index: {}]
  %s12 = inlined_call_operand.hbm [shape: f32[2,1,32], index: 12, kind: input, shape index: {}]
  %s13 = inlined_call_operand.hbm [shape: f32[2,1,32], index: 13, kind: input, shape index: {}]
  %s14 = inlined_call_operand.vmem [shape: f32[2,1,32], index: 14, kind: input, shape index: {}]
  %s15 = inlined_call_operand.vmem [shape: bf16[32,128], index: 15, kind: input, shape index: {}]
  %s16 = inlined_call_operand.vmem [shape: f32[1,128], index: 16, kind: input, shape index: {}]
  %s17 = inlined_call_operand.hbm [shape: f32[2,1,128], index: 17, kind: output, shape index: {}]
  %s18 = sld [smem:[#allocation0]]
  $region137: #{tpu_custom_call.1} parent=0
    _
  %s20 = ssub.s32 1, %s18
  %s21 = scalar_select 0, %s20, %s18
  $region1: #{tpu_custom_call.1} parent=0
    #allocation2 [shape = 'u8[4096]{0}', space=vmem, size = 0x1000, scoped, tag = 'input window, operand 0']
    #allocation3 [shape = 's32[2]{0}', space=sflag, size = 0x8, scoped, tag = 'scoped memory for tpu_custom_call.1']
    #allocation4 [shape = 's32[2]{0}', space=sflag, size = 0x8, scoped, tag = 'scoped memory for tpu_custom_call.1']
    #allocation5 [shape = 'u8[512]{0}', space=vmem, size = 0x400, scoped, tag = 'input window, operand 2, single buffered']
    #allocation6 [shape = 's32[1]{0}', space=sflag, size = 0x4, scoped, tag = 'scoped memory for tpu_custom_call.1']
    #allocation7 [shape = 'u8[1024]{0}', space=vmem, size = 0x400, scoped, tag = 'input window, operand 4, single buffered']
    #allocation8 [shape = 'u8[1024]{0}', space=vmem, size = 0x400, scoped, tag = 'input window, operand 6, single buffered']
    #allocation9 [shape = 's32[1]{0}', space=sflag, size = 0x4, scoped, tag = 'scoped memory for tpu_custom_call.1']
    #allocation10 [shape = 'u8[1024]{0}', space=vmem, size = 0x400, scoped, tag = 'input window, operand 7, single buffered']
    #allocation11 [shape = 'u8[1024]{0}', space=vmem, size = 0x400, scoped, tag = 'input window, operand 8, single buffered']
    #allocation12 [shape = 's32[1]{0}', space=sflag, size = 0x4, scoped, tag = 'scoped memory for tpu_custom_call.1']
    #allocation13 [shape = 'u8[1024]{0}', space=vmem, size = 0x400, scoped, tag = 'input window, operand 10, single buffered']
    #allocation14 [shape = 'u8[1024]{0}', space=vmem, size = 0x400, scoped, tag = 'input window, operand 12, single buffered']
    #allocation15 [shape = 's32[1]{0}', space=sflag, size = 0x4, scoped, tag = 'scoped memory for tpu_custom_call.1']
    #allocation16 [shape = 'u8[1024]{0}', space=vmem, size = 0x400, scoped, tag = 'input window, operand 13, single buffered']
    #allocation17 [shape = 'u8[1024]{0}', space=vmem, size = 0x400, scoped, tag = 'output window, operand 0']
    %22 = vsyncpa [#allocation3], 0
    %s23 = scalar_lea.sflag [#allocation3], 1
    %24 = vsyncpa %s23, 0
    %25 = vsyncpa [#allocation6], 0
    %26 = vsyncpa [#allocation9], 0
    %27 = vsyncpa [#allocation12], 0
    %28 = vsyncpa [#allocation15], 0
    %29 = vsyncpa [#allocation4], 0
    %s30 = scalar_lea.sflag [#allocation4], 1
    %31 = vsyncpa %s30, 0
    loop: start=0, step=1, limit=4
    $region2: #{tpu_custom_call.1} parent=1 // loop_pre_header
      _
    $region3: #{tpu_custom_call.1} parent=1 // loop_header
      %s33 = sphi 0, %s37
      %p34 = scmp.ge.s32.totalorder %s33, 4
      %s43 = sphi 0, %s45
      %s46 = sphi 0, %s43
      %s47 = sphi 0, %s46
      %s63 = sphi 0, %s47
      %s67 = sphi 0, %s67
      %s69 = sphi 0, %s67
      %s70 = sphi 0, %s69
      %s84 = sphi 0, %s70
      %s88 = sphi 0, %s88
      %s90 = sphi 0, %s88
      %s91 = sphi 0, %s90
      %s105 = sphi 0, %s91
      %s109 = sphi 0, %s109
      %s111 = sphi 0, %s109
      %s112 = sphi 0, %s111
      %s126 = sphi 0, %s112
      %s130 = sphi 0, %s130
      %s132 = sphi 0, %s130
      %s133 = sphi 0, %s132
      %s147 = sphi 0, %s133
      %s151 = sphi 0, %s151
      %s153 = sphi 0, %s151
      %s154 = sphi 0, %s153
      %s168 = sphi 0, %s154
      %s172 = sphi 0, %s172
      %s174 = sphi 0, %s172
      %s175 = sphi 0, %s174
      %s189 = sphi 0, %s175
      %s193 = sphi 0, %s193
      %s195 = sphi 0, %s193
      %s196 = sphi 0, %s195
      %s210 = sphi 0, %s196
      %s214 = sphi 0, %s214
      %s216 = sphi 0, %s214
      %s217 = sphi 0, %s216
      %s231 = sphi 0, %s217
      %s235 = sphi 0, %s235
      %s237 = sphi 0, %s235
      %s238 = sphi 0, %s237
      %s252 = sphi 0, %s238
      %s256 = sphi 0, %s256
      %s258 = sphi 0, %s256
      %s259 = sphi 0, %s258
      %s273 = sphi 0, %s259
      %s277 = sphi 0, %s277
      %s279 = sphi 0, %s277
      %s280 = sphi 0, %s279
      %s294 = sphi 0, %s280
      %s298 = sphi 0, %s298
      %s300 = sphi 0, %s298
      %s301 = sphi 0, %s300
      %s315 = sphi 0, %s301
      %s319 = sphi 0, %s319
      %s321 = sphi 0, %s319
      %s322 = sphi 0, %s321
      %s336 = sphi 0, %s322
      %s340 = sphi 0, %s340
      %s342 = sphi 0, %s340
      %s343 = sphi 0, %s342
      %s357 = sphi 0, %s343
      %s361 = sphi 0, %s361
      %s363 = sphi 0, %s361
      %s364 = sphi 0, %s363
      %s378 = sphi 0, %s364
      %s382 = sphi 0, %s382
      %s384 = sphi 0, %s382
      %s385 = sphi 0, %s384
      %s399 = sphi 0, %s385
      %s405 = sphi 0, %s407
      %s408 = sphi 0, %s405
      %s409 = sphi 0, %s408
      %s425 = sphi 0, %s409
    $region4: #{tpu_custom_call.1} parent=1 // loop_header_branch
      %36 = sbr.rel (%p34) target = $region8
    $region5: #{tpu_custom_call.1} parent=1 // loop_body
      %s38 = ssub.s32 %s33, 1
      %s39 = ssub.s32 %s33, 2
      %s40 = sadd.s32 %s33, 1
      %s41 = ssub.s32 %s33, %s40
      %p42 = scmp.eq.s32.totalorder %s41, 0
      %s44 = sadd.s32 %s43, 1
      %s45 = scalar_select %p42, %s43, %s44
      %p48 = pneg %p42
      %p49 = scmp.eq.s32.totalorder %s33, 1
      %p50 = por %p48, %p49
      %p51 = scmp.ne.s32.totalorder %s43, %s46
      %p52 = scmp.eq.s32.totalorder %s33, 0
      %p53 = por %p51, %p52
      %p54 = scmp.ne.s32.totalorder %s43, %s46
      %p55 = scmp.eq.s32.totalorder %s38, 1
      %p56 = por %p54, %p55
      %p57 = scmp.ne.s32.totalorder %s46, %s47
      %p58 = scmp.eq.s32.totalorder %s38, 0
      %p59 = por %p57, %p58
      %p60 = scmp.ne.s32.totalorder %s46, %s47
      %p61 = scmp.eq.s32.totalorder %s39, 1
      %p62 = por %p60, %p61
      %p64 = scmp.ne.s32.totalorder %s47, %s63
      %p65 = scmp.eq.s32.totalorder %s39, 0
      %p66 = por %p64, %p65
      %s68 = sadd.s32 %s67, 1
      %p71 = scmp.eq.s32.totalorder %s33, 1
      %p72 = scmp.ne.s32.totalorder %s67, %s69
      %p73 = scmp.eq.s32.totalorder %s33, 0
      %p74 = por %p72, %p73
      %p75 = scmp.ne.s32.totalorder %s67, %s69
      %p76 = scmp.eq.s32.totalorder %s38, 1
      %p77 = por %p75, %p76
      %p78 = scmp.ne.s32.totalorder %s69, %s70
      %p79 = scmp.eq.s32.totalorder %s38, 0
      %p80 = por %p78, %p79
      %p81 = scmp.ne.s32.totalorder %s69, %s70
      %p82 = scmp.eq.s32.totalorder %s39, 1
      %p83 = por %p81, %p82
      %p85 = scmp.ne.s32.totalorder %s70, %s84
      %p86 = scmp.eq.s32.totalorder %s39, 0
      %p87 = por %p85, %p86
      %s89 = sadd.s32 %s88, 1
      %p92 = scmp.eq.s32.totalorder %s33, 1
      %p93 = scmp.ne.s32.totalorder %s88, %s90
      %p94 = scmp.eq.s32.totalorder %s33, 0
      %p95 = por %p93, %p94
      %p96 = scmp.ne.s32.totalorder %s88, %s90
      %p97 = scmp.eq.s32.totalorder %s38, 1
      %p98 = por %p96, %p97
      %p99 = scmp.ne.s32.totalorder %s90, %s91
      %p100 = scmp.eq.s32.totalorder %s38, 0
      %p101 = por %p99, %p100
      %p102 = scmp.ne.s32.totalorder %s90, %s91
      %p103 = scmp.eq.s32.totalorder %s39, 1
      %p104 = por %p102, %p103
      %p106 = scmp.ne.s32.totalorder %s91, %s105
      %p107 = scmp.eq.s32.totalorder %s39, 0
      %p108 = por %p106, %p107
      %s110 = sadd.s32 %s109, 1
      %p113 = scmp.eq.s32.totalorder %s33, 1
      %p114 = scmp.ne.s32.totalorder %s109, %s111
      %p115 = scmp.eq.s32.totalorder %s33, 0
      %p116 = por %p114, %p115
      %p117 = scmp.ne.s32.totalorder %s109, %s111
      %p118 = scmp.eq.s32.totalorder %s38, 1
      %p119 = por %p117, %p118
      %p120 = scmp.ne.s32.totalorder %s111, %s112
      %p121 = scmp.eq.s32.totalorder %s38, 0
      %p122 = por %p120, %p121
      %p123 = scmp.ne.s32.totalorder %s111, %s112
      %p124 = scmp.eq.s32.totalorder %s39, 1
      %p125 = por %p123, %p124
      %p127 = scmp.ne.s32.totalorder %s112, %s126
      %p128 = scmp.eq.s32.totalorder %s39, 0
      %p129 = por %p127, %p128
      %s131 = sadd.s32 %s130, 1
      %p134 = scmp.eq.s32.totalorder %s33, 1
      %p135 = scmp.ne.s32.totalorder %s130, %s132
      %p136 = scmp.eq.s32.totalorder %s33, 0
      %p137 = por %p135, %p136
      %p138 = scmp.ne.s32.totalorder %s130, %s132
      %p139 = scmp.eq.s32.totalorder %s38, 1
      %p140 = por %p138, %p139
      %p141 = scmp.ne.s32.totalorder %s132, %s133
      %p142 = scmp.eq.s32.totalorder %s38, 0
      %p143 = por %p141, %p142
      %p144 = scmp.ne.s32.totalorder %s132, %s133
      %p145 = scmp.eq.s32.totalorder %s39, 1
      %p146 = por %p144, %p145
      %p148 = scmp.ne.s32.totalorder %s133, %s147
      %p149 = scmp.eq.s32.totalorder %s39, 0
      %p150 = por %p148, %p149
      %s152 = sadd.s32 %s151, 1
      %p155 = scmp.eq.s32.totalorder %s33, 1
      %p156 = scmp.ne.s32.totalorder %s151, %s153
      %p157 = scmp.eq.s32.totalorder %s33, 0
      %p158 = por %p156, %p157
      %p159 = scmp.ne.s32.totalorder %s151, %s153
      %p160 = scmp.eq.s32.totalorder %s38, 1
      %p161 = por %p159, %p160
      %p162 = scmp.ne.s32.totalorder %s153, %s154
      %p163 = scmp.eq.s32.totalorder %s38, 0
      %p164 = por %p162, %p163
      %p165 = scmp.ne.s32.totalorder %s153, %s154
      %p166 = scmp.eq.s32.totalorder %s39, 1
      %p167 = por %p165, %p166
      %p169 = scmp.ne.s32.totalorder %s154, %s168
      %p170 = scmp.eq.s32.totalorder %s39, 0
      %p171 = por %p169, %p170
      %s173 = sadd.s32 %s172, 1
      %p176 = scmp.eq.s32.totalorder %s33, 1
      %p177 = scmp.ne.s32.totalorder %s172, %s174
      %p178 = scmp.eq.s32.totalorder %s33, 0
      %p179 = por %p177, %p178
      %p180 = scmp.ne.s32.totalorder %s172, %s174
      %p181 = scmp.eq.s32.totalorder %s38, 1
      %p182 = por %p180, %p181
      %p183 = scmp.ne.s32.totalorder %s174, %s175
      %p184 = scmp.eq.s32.totalorder %s38, 0
      %p185 = por %p183, %p184
      %p186 = scmp.ne.s32.totalorder %s174, %s175
      %p187 = scmp.eq.s32.totalorder %s39, 1
      %p188 = por %p186, %p187
      %p190 = scmp.ne.s32.totalorder %s175, %s189
      %p191 = scmp.eq.s32.totalorder %s39, 0
      %p192 = por %p190, %p191
      %s194 = sadd.s32 %s193, 1
      %p197 = scmp.eq.s32.totalorder %s33, 1
      %p198 = scmp.ne.s32.totalorder %s193, %s195
      %p199 = scmp.eq.s32.totalorder %s33, 0
      %p200 = por %p198, %p199
      %p201 = scmp.ne.s32.totalorder %s193, %s195
      %p202 = scmp.eq.s32.totalorder %s38, 1
      %p203 = por %p201, %p202
      %p204 = scmp.ne.s32.totalorder %s195, %s196
      %p205 = scmp.eq.s32.totalorder %s38, 0
      %p206 = por %p204, %p205
      %p207 = scmp.ne.s32.totalorder %s195, %s196
      %p208 = scmp.eq.s32.totalorder %s39, 1
      %p209 = por %p207, %p208
      %p211 = scmp.ne.s32.totalorder %s196, %s210
      %p212 = scmp.eq.s32.totalorder %s39, 0
      %p213 = por %p211, %p212
      %s215 = sadd.s32 %s214, 1
      %p218 = scmp.eq.s32.totalorder %s33, 1
      %p219 = scmp.ne.s32.totalorder %s214, %s216
      %p220 = scmp.eq.s32.totalorder %s33, 0
      %p221 = por %p219, %p220
      %p222 = scmp.ne.s32.totalorder %s214, %s216
      %p223 = scmp.eq.s32.totalorder %s38, 1
      %p224 = por %p222, %p223
      %p225 = scmp.ne.s32.totalorder %s216, %s217
      %p226 = scmp.eq.s32.totalorder %s38, 0
      %p227 = por %p225, %p226
      %p228 = scmp.ne.s32.totalorder %s216, %s217
      %p229 = scmp.eq.s32.totalorder %s39, 1
      %p230 = por %p228, %p229
      %p232 = scmp.ne.s32.totalorder %s217, %s231
      %p233 = scmp.eq.s32.totalorder %s39, 0
      %p234 = por %p232, %p233
      %s236 = sadd.s32 %s235, 1
      %p239 = scmp.eq.s32.totalorder %s33, 1
      %p240 = scmp.ne.s32.totalorder %s235, %s237
      %p241 = scmp.eq.s32.totalorder %s33, 0
      %p242 = por %p240, %p241
      %p243 = scmp.ne.s32.totalorder %s235, %s237
      %p244 = scmp.eq.s32.totalorder %s38, 1
      %p245 = por %p243, %p244
      %p246 = scmp.ne.s32.totalorder %s237, %s238
      %p247 = scmp.eq.s32.totalorder %s38, 0
      %p248 = por %p246, %p247
      %p249 = scmp.ne.s32.totalorder %s237, %s238
      %p250 = scmp.eq.s32.totalorder %s39, 1
      %p251 = por %p249, %p250
      %p253 = scmp.ne.s32.totalorder %s238, %s252
      %p254 = scmp.eq.s32.totalorder %s39, 0
      %p255 = por %p253, %p254
      %s257 = sadd.s32 %s256, 1
      %p260 = scmp.eq.s32.totalorder %s33, 1
      %p261 = scmp.ne.s32.totalorder %s256, %s258
      %p262 = scmp.eq.s32.totalorder %s33, 0
      %p263 = por %p261, %p262
      %p264 = scmp.ne.s32.totalorder %s256, %s258
      %p265 = scmp.eq.s32.totalorder %s38, 1
      %p266 = por %p264, %p265
      %p267 = scmp.ne.s32.totalorder %s258, %s259
      %p268 = scmp.eq.s32.totalorder %s38, 0
      %p269 = por %p267, %p268
      %p270 = scmp.ne.s32.totalorder %s258, %s259
      %p271 = scmp.eq.s32.totalorder %s39, 1
      %p272 = por %p270, %p271
      %p274 = scmp.ne.s32.totalorder %s259, %s273
      %p275 = scmp.eq.s32.totalorder %s39, 0
      %p276 = por %p274, %p275
      %s278 = sadd.s32 %s277, 1
      %p281 = scmp.eq.s32.totalorder %s33, 1
      %p282 = scmp.ne.s32.totalorder %s277, %s279
      %p283 = scmp.eq.s32.totalorder %s33, 0
      %p284 = por %p282, %p283
      %p285 = scmp.ne.s32.totalorder %s277, %s279
      %p286 = scmp.eq.s32.totalorder %s38, 1
      %p287 = por %p285, %p286
      %p288 = scmp.ne.s32.totalorder %s279, %s280
      %p289 = scmp.eq.s32.totalorder %s38, 0
      %p290 = por %p288, %p289
      %p291 = scmp.ne.s32.totalorder %s279, %s280
      %p292 = scmp.eq.s32.totalorder %s39, 1
      %p293 = por %p291, %p292
      %p295 = scmp.ne.s32.totalorder %s280, %s294
      %p296 = scmp.eq.s32.totalorder %s39, 0
      %p297 = por %p295, %p296
      %s299 = sadd.s32 %s298, 1
      %p302 = scmp.eq.s32.totalorder %s33, 1
      %p303 = scmp.ne.s32.totalorder %s298, %s300
      %p304 = scmp.eq.s32.totalorder %s33, 0
      %p305 = por %p303, %p304
      %p306 = scmp.ne.s32.totalorder %s298, %s300
      %p307 = scmp.eq.s32.totalorder %s38, 1
      %p308 = por %p306, %p307
      %p309 = scmp.ne.s32.totalorder %s300, %s301
      %p310 = scmp.eq.s32.totalorder %s38, 0
      %p311 = por %p309, %p310
      %p312 = scmp.ne.s32.totalorder %s300, %s301
      %p313 = scmp.eq.s32.totalorder %s39, 1
      %p314 = por %p312, %p313
      %p316 = scmp.ne.s32.totalorder %s301, %s315
      %p317 = scmp.eq.s32.totalorder %s39, 0
      %p318 = por %p316, %p317
      %s320 = sadd.s32 %s319, 1
      %p323 = scmp.eq.s32.totalorder %s33, 1
      %p324 = scmp.ne.s32.totalorder %s319, %s321
      %p325 = scmp.eq.s32.totalorder %s33, 0
      %p326 = por %p324, %p325
      %p327 = scmp.ne.s32.totalorder %s319, %s321
      %p328 = scmp.eq.s32.totalorder %s38, 1
      %p329 = por %p327, %p328
      %p330 = scmp.ne.s32.totalorder %s321, %s322
      %p331 = scmp.eq.s32.totalorder %s38, 0
      %p332 = por %p330, %p331
      %p333 = scmp.ne.s32.totalorder %s321, %s322
      %p334 = scmp.eq.s32.totalorder %s39, 1
      %p335 = por %p333, %p334
      %p337 = scmp.ne.s32.totalorder %s322, %s336
      %p338 = scmp.eq.s32.totalorder %s39, 0
      %p339 = por %p337, %p338
      %s341 = sadd.s32 %s340, 1
      %p344 = scmp.eq.s32.totalorder %s33, 1
      %p345 = scmp.ne.s32.totalorder %s340, %s342
      %p346 = scmp.eq.s32.totalorder %s33, 0
      %p347 = por %p345, %p346
      %p348 = scmp.ne.s32.totalorder %s340, %s342
      %p349 = scmp.eq.s32.totalorder %s38, 1
      %p350 = por %p348, %p349
      %p351 = scmp.ne.s32.totalorder %s342, %s343
      %p352 = scmp.eq.s32.totalorder %s38, 0
      %p353 = por %p351, %p352
      %p354 = scmp.ne.s32.totalorder %s342, %s343
      %p355 = scmp.eq.s32.totalorder %s39, 1
      %p356 = por %p354, %p355
      %p358 = scmp.ne.s32.totalorder %s343, %s357
      %p359 = scmp.eq.s32.totalorder %s39, 0
      %p360 = por %p358, %p359
      %s362 = sadd.s32 %s361, 1
      %p365 = scmp.eq.s32.totalorder %s33, 1
      %p366 = scmp.ne.s32.totalorder %s361, %s363
      %p367 = scmp.eq.s32.totalorder %s33, 0
      %p368 = por %p366, %p367
      %p369 = scmp.ne.s32.totalorder %s361, %s363
      %p370 = scmp.eq.s32.totalorder %s38, 1
      %p371 = por %p369, %p370
      %p372 = scmp.ne.s32.totalorder %s363, %s364
      %p373 = scmp.eq.s32.totalorder %s38, 0
      %p374 = por %p372, %p373
      %p375 = scmp.ne.s32.totalorder %s363, %s364
      %p376 = scmp.eq.s32.totalorder %s39, 1
      %p377 = por %p375, %p376
      %p379 = scmp.ne.s32.totalorder %s364, %s378
      %p380 = scmp.eq.s32.totalorder %s39, 0
      %p381 = por %p379, %p380
      %s383 = sadd.s32 %s382, 1
      %p386 = scmp.eq.s32.totalorder %s33, 1
      %p387 = scmp.ne.s32.totalorder %s382, %s384
      %p388 = scmp.eq.s32.totalorder %s33, 0
      %p389 = por %p387, %p388
      %p390 = scmp.ne.s32.totalorder %s382, %s384
      %p391 = scmp.eq.s32.totalorder %s38, 1
      %p392 = por %p390, %p391
      %p393 = scmp.ne.s32.totalorder %s384, %s385
      %p394 = scmp.eq.s32.totalorder %s38, 0
      %p395 = por %p393, %p394
      %p396 = scmp.ne.s32.totalorder %s384, %s385
      %p397 = scmp.eq.s32.totalorder %s39, 1
      %p398 = por %p396, %p397
      %p400 = scmp.ne.s32.totalorder %s385, %s399
      %p401 = scmp.eq.s32.totalorder %s39, 0
      %p402 = por %p400, %p401
      %s403 = ssub.s32 %s33, %s40
      %p404 = scmp.eq.s32.totalorder %s403, 0
      %s406 = sadd.s32 %s405, 1
      %s407 = scalar_select %p404, %s405, %s406
      %p410 = pneg %p404
      %p411 = scmp.eq.s32.totalorder %s33, 1
      %p412 = por %p410, %p411
      %p413 = scmp.ne.s32.totalorder %s405, %s408
      %p414 = scmp.eq.s32.totalorder %s33, 0
      %p415 = por %p413, %p414
      %p416 = scmp.ne.s32.totalorder %s405, %s408
      %p417 = scmp.eq.s32.totalorder %s38, 1
      %p418 = por %p416, %p417
      %p419 = scmp.ne.s32.totalorder %s408, %s409
      %p420 = scmp.eq.s32.totalorder %s38, 0
      %p421 = por %p419, %p420
      %p422 = scmp.ne.s32.totalorder %s408, %s409
      %p423 = scmp.eq.s32.totalorder %s39, 1
      %p424 = por %p422, %p423
      %p426 = scmp.ne.s32.totalorder %s409, %s425
      %p427 = scmp.eq.s32.totalorder %s39, 0
      %p428 = por %p426, %p427
      %p429 = scmp.le.s32.totalorder 1, %s33
      %p430 = scmp.lt.s32.totalorder %s33, 3
      %p431 = pnand %p429, %p430
      %p432 = pneg %p431
      // Predicated region
      $region9: #{tpu_custom_call.1} parent=5 // pred_check
        _
      $region10: #{tpu_custom_call.1} parent=5 // pred_check_branch
        %434 = sbr.rel (%p431) target = $region12
      $region11: #{tpu_custom_call.1} parent=5 // pred_region
        %s435 = ssub.s32 %s33, 1
        // Predicated region
        $region13: #{tpu_custom_call.1} parent=11 // pred_check
          %p436 = pneg %p80
        $region14: #{tpu_custom_call.1} parent=11 // pred_check_branch
          %438 = sbr.rel (%p436) target = $region16
        $region15: #{tpu_custom_call.1} parent=11 // pred_region
          _
        $region16: #{tpu_custom_call.1} parent=11 // pred_fallthru
          _
        // Predicated region
        $region17: #{tpu_custom_call.1} parent=11 // pred_check
          %p439 = pneg %p101
        $region18: #{tpu_custom_call.1} parent=11 // pred_check_branch
          %441 = sbr.rel (%p439) target = $region20
        $region19: #{tpu_custom_call.1} parent=11 // pred_region
          %s443 = ssub.s32 16, 16
          %444 = vsyncadd [#allocation6], %s443
          %s446 = sshll.u32 [#allocation5], 4
          %s447 = int_to_ptr.vmem [resolvable:$true] %s446
          %449 = dma.hbm_to_vmem [thread:$0]  %s2, 16, %s447, [#allocation6]
        $region20: #{tpu_custom_call.1} parent=11 // pred_fallthru
          _
        // Predicated region
        $region21: #{tpu_custom_call.1} parent=11 // pred_check
          %p450 = pneg %p122
        $region22: #{tpu_custom_call.1} parent=11 // pred_check_branch
          %452 = sbr.rel (%p450) target = $region24
        $region23: #{tpu_custom_call.1} parent=11 // pred_region
          _
        $region24: #{tpu_custom_call.1} parent=11 // pred_fallthru
          _
        // Predicated region
        $region25: #{tpu_custom_call.1} parent=11 // pred_check
          %p453 = pneg %p143
        $region26: #{tpu_custom_call.1} parent=11 // pred_check_branch
          %455 = sbr.rel (%p453) target = $region28
        $region27: #{tpu_custom_call.1} parent=11 // pred_region
          %s457 = ssub.s32 32, 32
          %458 = vsyncadd [#allocation6], %s457
          %s459 = sshll.u32 [#allocation7], 4
          %s460 = int_to_ptr.vmem [resolvable:$true] %s459
          %465 = dma.hbm_to_vmem [thread:$0]  %s4, 32, %s460, [#allocation6], 16, 16, 1
        $region28: #{tpu_custom_call.1} parent=11 // pred_fallthru
          _
        // Predicated region
        $region29: #{tpu_custom_call.1} parent=11 // pred_check
          %p466 = pneg %p164
        $region30: #{tpu_custom_call.1} parent=11 // pred_check_branch
          %468 = sbr.rel (%p466) target = $region32
        $region31: #{tpu_custom_call.1} parent=11 // pred_region
          _
        $region32: #{tpu_custom_call.1} parent=11 // pred_fallthru
          _
        // Predicated region
        $region33: #{tpu_custom_call.1} parent=11 // pred_check
          %p469 = pneg %p185
        $region34: #{tpu_custom_call.1} parent=11 // pred_check_branch
          %471 = sbr.rel (%p469) target = $region36
        $region35: #{tpu_custom_call.1} parent=11 // pred_region
          %s473 = ssub.s32 32, 32
          %474 = vsyncadd [#allocation9], %s473
          %s475 = sshll.u32 [#allocation8], 4
          %s476 = int_to_ptr.vmem [resolvable:$true] %s475
          %481 = dma.hbm_to_vmem [thread:$0]  %s6, 32, %s476, [#allocation9], 16, 16, 1
        $region36: #{tpu_custom_call.1} parent=11 // pred_fallthru
          _
        // Predicated region
        $region37: #{tpu_custom_call.1} parent=11 // pred_check
          %p482 = pneg %p206
        $region38: #{tpu_custom_call.1} parent=11 // pred_check_branch
          %484 = sbr.rel (%p482) target = $region40
        $region39: #{tpu_custom_call.1} parent=11 // pred_region
          %s486 = ssub.s32 32, 32
          %487 = vsyncadd [#allocation9], %s486
          %s488 = sshll.u32 [#allocation10], 4
          %s489 = int_to_ptr.vmem [resolvable:$true] %s488
          %494 = dma.hbm_to_vmem [thread:$0]  %s7, 32, %s489, [#allocation9], 16, 16, 1
        $region40: #{tpu_custom_call.1} parent=11 // pred_fallthru
          _
        // Predicated region
        $region41: #{tpu_custom_call.1} parent=11 // pred_check
          %p495 = pneg %p227
        $region42: #{tpu_custom_call.1} parent=11 // pred_check_branch
          %497 = sbr.rel (%p495) target = $region44
        $region43: #{tpu_custom_call.1} parent=11 // pred_region
          %s499 = ssub.s32 32, 32
          %500 = vsyncadd [#allocation12], %s499
          %s501 = sshll.u32 [#allocation11], 4
          %s502 = int_to_ptr.vmem [resolvable:$true] %s501
          %507 = dma.hbm_to_vmem [thread:$0]  %s8, 32, %s502, [#allocation12], 16, 16, 1
        $region44: #{tpu_custom_call.1} parent=11 // pred_fallthru
          _
        // Predicated region
        $region45: #{tpu_custom_call.1} parent=11 // pred_check
          %p508 = pneg %p248
        $region46: #{tpu_custom_call.1} parent=11 // pred_check_branch
          %510 = sbr.rel (%p508) target = $region48
        $region47: #{tpu_custom_call.1} parent=11 // pred_region
          _
        $region48: #{tpu_custom_call.1} parent=11 // pred_fallthru
          _
        // Predicated region
        $region49: #{tpu_custom_call.1} parent=11 // pred_check
          %p511 = pneg %p269
        $region50: #{tpu_custom_call.1} parent=11 // pred_check_branch
          %513 = sbr.rel (%p511) target = $region52
        $region51: #{tpu_custom_call.1} parent=11 // pred_region
          %s515 = ssub.s32 32, 32
          %516 = vsyncadd [#allocation12], %s515
          %s517 = sshll.u32 [#allocation13], 4
          %s518 = int_to_ptr.vmem [resolvable:$true] %s517
          %523 = dma.hbm_to_vmem [thread:$0]  %s10, 32, %s518, [#allocation12], 16, 16, 1
        $region52: #{tpu_custom_call.1} parent=11 // pred_fallthru
          _
        // Predicated region
        $region53: #{tpu_custom_call.1} parent=11 // pred_check
          %p524 = pneg %p290
        $region54: #{tpu_custom_call.1} parent=11 // pred_check_branch
          %526 = sbr.rel (%p524) target = $region56
        $region55: #{tpu_custom_call.1} parent=11 // pred_region
          _
        $region56: #{tpu_custom_call.1} parent=11 // pred_fallthru
          _
        // Predicated region
        $region57: #{tpu_custom_call.1} parent=11 // pred_check
          %p527 = pneg %p311
        $region58: #{tpu_custom_call.1} parent=11 // pred_check_branch
          %529 = sbr.rel (%p527) target = $region60
        $region59: #{tpu_custom_call.1} parent=11 // pred_region
          %s531 = ssub.s32 32, 32
          %532 = vsyncadd [#allocation15], %s531
          %s533 = sshll.u32 [#allocation14], 4
          %s534 = int_to_ptr.vmem [resolvable:$true] %s533
          %539 = dma.hbm_to_vmem [thread:$0]  %s12, 32, %s534, [#allocation15], 16, 16, 1
        $region60: #{tpu_custom_call.1} parent=11 // pred_fallthru
          _
        // Predicated region
        $region61: #{tpu_custom_call.1} parent=11 // pred_check
          %p540 = pneg %p332
        $region62: #{tpu_custom_call.1} parent=11 // pred_check_branch
          %542 = sbr.rel (%p540) target = $region64
        $region63: #{tpu_custom_call.1} parent=11 // pred_region
          %s544 = ssub.s32 32, 32
          %545 = vsyncadd [#allocation15], %s544
          %s546 = sshll.u32 [#allocation16], 4
          %s547 = int_to_ptr.vmem [resolvable:$true] %s546
          %552 = dma.hbm_to_vmem [thread:$0]  %s13, 32, %s547, [#allocation15], 16, 16, 1
        $region64: #{tpu_custom_call.1} parent=11 // pred_fallthru
          _
        // Predicated region
        $region65: #{tpu_custom_call.1} parent=11 // pred_check
          %p553 = pneg %p353
        $region66: #{tpu_custom_call.1} parent=11 // pred_check_branch
          %555 = sbr.rel (%p553) target = $region68
        $region67: #{tpu_custom_call.1} parent=11 // pred_region
          _
        $region68: #{tpu_custom_call.1} parent=11 // pred_fallthru
          _
        // Predicated region
        $region69: #{tpu_custom_call.1} parent=11 // pred_check
          %p556 = pneg %p374
        $region70: #{tpu_custom_call.1} parent=11 // pred_check_branch
          %558 = sbr.rel (%p556) target = $region72
        $region71: #{tpu_custom_call.1} parent=11 // pred_region
          _
        $region72: #{tpu_custom_call.1} parent=11 // pred_fallthru
          _
        // Predicated region
        $region73: #{tpu_custom_call.1} parent=11 // pred_check
          %p559 = pneg %p395
        $region74: #{tpu_custom_call.1} parent=11 // pred_check_branch
          %561 = sbr.rel (%p559) target = $region76
        $region75: #{tpu_custom_call.1} parent=11 // pred_region
          _
        $region76: #{tpu_custom_call.1} parent=11 // pred_fallthru
          _
      $region12: #{tpu_custom_call.1} parent=5 // pred_fallthru
        _
      %p562 = scmp.lt.s32.totalorder %s33, 2
      // Predicated region
      $region77: #{tpu_custom_call.1} parent=5 // pred_check
        %p563 = pneg %p562
      $region78: #{tpu_custom_call.1} parent=5 // pred_check_branch
        %565 = sbr.rel (%p563) target = $region80
      $region79: #{tpu_custom_call.1} parent=5 // pred_region
        // Predicated region
        $region81: #{tpu_custom_call.1} parent=79 // pred_check
          %p566 = pneg %p53
        $region82: #{tpu_custom_call.1} parent=79 // pred_check_branch
          %568 = sbr.rel (%p566) target = $region84
        $region83: #{tpu_custom_call.1} parent=79 // pred_region
          %s569 = sand.u32 %s43, 1
          %s570 = scalar_lea.sflag [#allocation3], %s569
          %s571 = sand.u32 %s43, 1
          %s572 = smul.addr %s571, 4
          %s573 = scalar_lea.vmem [#allocation2], %s572
          %s575 = ssub.s32 64, 64
          %576 = vsyncadd %s570, %s575
          %s577 = smul.addr %s33, 64
          %s578 = scalar_lea.hbm %s0, %s577
          %s580 = sshll.u32 %s573, 4
          %s581 = int_to_ptr.vmem [resolvable:$true] %s580
          %583 = dma.hbm_to_vmem [thread:$0]  %s578, 64, %s581, %s570
        $region84: #{tpu_custom_call.1} parent=79 // pred_fallthru
          _
      $region80: #{tpu_custom_call.1} parent=5 // pred_fallthru
        _
      %p584 = scmp.le.s32.totalorder 1, %s33
      %p585 = scmp.lt.s32.totalorder %s33, 3
      %p586 = pnand %p584, %p585
      %p587 = pneg %p586
      // Predicated region
      $region85: #{tpu_custom_call.1} parent=5 // pred_check
        _
      $region86: #{tpu_custom_call.1} parent=5 // pred_check_branch
        %589 = sbr.rel (%p586) target = $region88
      $region87: #{tpu_custom_call.1} parent=5 // pred_region
        %s590 = ssub.s32 %s33, 1
        %s591 = sand.u32 %s46, 1
        %s592 = scalar_lea.sflag [#allocation3], %s591
        %s593 = sand.u32 %s46, 1
        %s594 = smul.addr %s593, 4
        %s595 = scalar_lea.vmem [#allocation2], %s594
        // Predicated region
        $region89: #{tpu_custom_call.1} parent=87 // pred_check
          %p596 = pneg %p59
        $region90: #{tpu_custom_call.1} parent=87 // pred_check_branch
          %598 = sbr.rel (%p596) target = $region92
        $region91: #{tpu_custom_call.1} parent=87 // pred_region
          %599 = dma.done %s592, 64
        $region92: #{tpu_custom_call.1} parent=87 // pred_fallthru
          _
        // Predicated region
        $region93: #{tpu_custom_call.1} parent=87 // pred_check
          %p600 = pneg %p101
        $region94: #{tpu_custom_call.1} parent=87 // pred_check_branch
          %602 = sbr.rel (%p600) target = $region96
        $region95: #{tpu_custom_call.1} parent=87 // pred_region
          %603 = dma.done [#allocation6], 16
        $region96: #{tpu_custom_call.1} parent=87 // pred_fallthru
          _
        // Predicated region
        $region97: #{tpu_custom_call.1} parent=87 // pred_check
          %p604 = pneg %p143
        $region98: #{tpu_custom_call.1} parent=87 // pred_check_branch
          %606 = sbr.rel (%p604) target = $region100
        $region99: #{tpu_custom_call.1} parent=87 // pred_region
          %607 = dma.done [#allocation6], 32
        $region100: #{tpu_custom_call.1} parent=87 // pred_fallthru
          _
        // Predicated region
        $region101: #{tpu_custom_call.1} parent=87 // pred_check
          %p608 = pneg %p185
        $region102: #{tpu_custom_call.1} parent=87 // pred_check_branch
          %610 = sbr.rel (%p608) target = $region104
        $region103: #{tpu_custom_call.1} parent=87 // pred_region
          %611 = dma.done [#allocation9], 32
        $region104: #{tpu_custom_call.1} parent=87 // pred_fallthru
          _
        // Predicated region
        $region105: #{tpu_custom_call.1} parent=87 // pred_check
          %p612 = pneg %p206
        $region106: #{tpu_custom_call.1} parent=87 // pred_check_branch
          %614 = sbr.rel (%p612) target = $region108
        $region107: #{tpu_custom_call.1} parent=87 // pred_region
          %615 = dma.done [#allocation9], 32
        $region108: #{tpu_custom_call.1} parent=87 // pred_fallthru
          _
        // Predicated region
        $region109: #{tpu_custom_call.1} parent=87 // pred_check
          %p616 = pneg %p227
        $region110: #{tpu_custom_call.1} parent=87 // pred_check_branch
          %618 = sbr.rel (%p616) target = $region112
        $region111: #{tpu_custom_call.1} parent=87 // pred_region
          %619 = dma.done [#allocation12], 32
        $region112: #{tpu_custom_call.1} parent=87 // pred_fallthru
          _
        // Predicated region
        $region113: #{tpu_custom_call.1} parent=87 // pred_check
          %p620 = pneg %p269
        $region114: #{tpu_custom_call.1} parent=87 // pred_check_branch
          %622 = sbr.rel (%p620) target = $region116
        $region115: #{tpu_custom_call.1} parent=87 // pred_region
          %623 = dma.done [#allocation12], 32
        $region116: #{tpu_custom_call.1} parent=87 // pred_fallthru
          _
        // Predicated region
        $region117: #{tpu_custom_call.1} parent=87 // pred_check
          %p624 = pneg %p311
        $region118: #{tpu_custom_call.1} parent=87 // pred_check_branch
          %626 = sbr.rel (%p624) target = $region120
        $region119: #{tpu_custom_call.1} parent=87 // pred_region
          %627 = dma.done [#allocation15], 32
        $region120: #{tpu_custom_call.1} parent=87 // pred_fallthru
          _
        // Predicated region
        $region121: #{tpu_custom_call.1} parent=87 // pred_check
          %p628 = pneg %p332
        $region122: #{tpu_custom_call.1} parent=87 // pred_check_branch
          %630 = sbr.rel (%p628) target = $region124
        $region123: #{tpu_custom_call.1} parent=87 // pred_region
          %631 = dma.done [#allocation15], 32
        $region124: #{tpu_custom_call.1} parent=87 // pred_fallthru
          _
        %s632 = sand.u32 %s46, 1
        %s633 = scalar_lea.sflag [#allocation3], %s632
        %s634 = sand.u32 %s46, 1
        %s635 = smul.addr %s634, 4
        %s636 = scalar_lea.vmem [#allocation2], %s635
        %p637 = pneg %p59
        %p638 = pneg %p56
        %p639 = pneg %p80
        %p640 = pneg %p77
        %p641 = pneg %p101
        %p642 = pneg %p98
        %p643 = pneg %p122
        %p644 = pneg %p119
        %p645 = pneg %p143
        %p646 = pneg %p140
        %p647 = pneg %p164
        %p648 = pneg %p161
        %p649 = pneg %p185
        %p650 = pneg %p182
        %p651 = pneg %p206
        %p652 = pneg %p203
        %p653 = pneg %p227
        %p654 = pneg %p224
        %p655 = pneg %p248
        %p656 = pneg %p245
        %p657 = pneg %p269
        %p658 = pneg %p266
        %p659 = pneg %p290
        %p660 = pneg %p287
        %p661 = pneg %p311
        %p662 = pneg %p308
        %p663 = pneg %p332
        %p664 = pneg %p329
        %p665 = pneg %p353
        %p666 = pneg %p350
        %p667 = pneg %p374
        %p668 = pneg %p371
        %p669 = pneg %p395
        %p670 = pneg %p392
        %p671 = pneg %p421
        %p672 = pneg %p418
        %s673 = sand.u32 %s408, 1
        %s674 = scalar_lea.sflag [#allocation4], %s673
        %s675 = sand.u32 %s408, 1
        %s676 = scalar_lea.vmem [#allocation17], %s675
        %v678 = vld [vmem:[%s595] sm:$0xf]
        %v679 = vunpack.c.l.bf16 %v678
        %v680 = vld [vmem:[%s1] sm:$0x1]
        %v681 = vld [vmem:[#allocation5] sm:$0x1]
        %vm682 = vcmask 261120
        %v683 = vsel %vm682, %v679, 0.0
        %684 = vadd.xlane.f32.xlu0 %v683
        %v685 = vpop.xlane.xlu0 %684
        %v686 = vrcp.pop 32.0
        %v687 = vmul.f32 %v685, %v686
        %v688 = vsub.f32 %v679, %v687
        %v689 = vmul.f32 %v688, %v688
        %v690 = vsel %vm682, %v689, 0.0
        %691 = vadd.xlane.f32.xlu0 %v690
        %v692 = vpop.xlane.xlu0 %691
        %v693 = vmul.f32 %v692, %v686
        %v694 = vadd.f32 %v693, 1e-12
        %v695 = vrsqrt.pop %v694
        %v696 = vmul.f32 %v688, %v695
        %v698 = vlaneseq
        %v699 = vshrl.u32 %v698, 7
        %v700 = vsub.s32 0, %v699
        %v701 = vrot.slane %v680, %v700
        %v703 = vmul.f32 %v696, %v701
        %v705 = vlaneseq
        %v706 = vshrl.u32 %v705, 7
        %v707 = vsub.s32 0, %v706
        %v708 = vrot.slane %v681, %v707
        %v710 = vadd.f32 %v703, %v708
        %v711 = vpack.c.bf16 %v710, %v710
        %v712 = vld [vmem:[%s3] sm:$0xf]
        %v713 = vld [vmem:[%s3 + $0x4] sm:$0xf]
        %v714 = vld [vmem:[%s3 + $0x8] sm:$0xf]
        %v715 = vld [vmem:[%s3 + $0xc] sm:$0xf]
        %v716 = vld [vmem:[#allocation7] sm:$0x1]
        %v718 = vlaneseq
        %v719 = vshrl.u32 %v718, 7
        %v720 = vsub.s32 0, %v719
        %v721 = vrot.slane %v716, %v720
        %v727 = vunpack.c.l.b16 %v712
        %v728 = vunpack.c.l.b16 %v713
        %v729 = vunpack.c.l.b16 %v714
        %v730 = vunpack.c.l.b16 %v715
        %v731 = vpack.c.b16 %v728, %v727
        %v732 = vpack.c.b16 %v730, %v729
        %v736 = vsel %vm682, %v711, 0
        %738 = vmatprep.subr.bf16.mxu0 0
        %739 = vmatpush1.bf16.msra.mxu0 %v731
        %740 = vmatprep.subr.bf16.mxu0 0
        %741 = vmatpush1.bf16.msra.mxu0 %v732
        %742 = vmatprep.subr.bf16.mxu0 0
        %743 = vmatpush1.bf16.msra.mxu0 0
        %744 = vmatprep.subr.bf16.mxu0 0
        %745 = vmatpush1.bf16.msra.mxu0 0
        %746 = vmatprep.subr.bf16.mxu0 0
        %747 = vmatpush1.bf16.msra.mxu0 0
        %748 = vmatprep.subr.bf16.mxu0 0
        %749 = vmatpush1.bf16.msra.mxu0 0
        %750 = vmatprep.subr.bf16.mxu0 0
        %751 = vmatpush1.bf16.msra.mxu0 0
        %752 = vmatprep.subr.bf16.mxu0 0
        %753 = vmatpush1.bf16.msra.mxu0 0
        %754 = vmatprep.subr.bf16.mxu0 0
        %755 = vmatpush1.bf16.msra.mxu0 0
        %756 = vmatprep.subr.bf16.mxu0 0
        %757 = vmatpush1.bf16.msra.mxu0 0
        %758 = vmatprep.subr.bf16.mxu0 0
        %759 = vmatpush1.bf16.msra.mxu0 0
        %760 = vmatprep.subr.bf16.mxu0 0
        %761 = vmatpush1.bf16.msra.mxu0 0
        %762 = vmatprep.subr.bf16.mxu0 0
        %763 = vmatpush1.bf16.msra.mxu0 0
        %764 = vmatprep.subr.bf16.mxu0 0
        %765 = vmatpush1.bf16.msra.mxu0 0
        %766 = vmatprep.subr.bf16.mxu0 0
        %767 = vmatpush1.bf16.msra.mxu0 0
        %768 = vmatprep.subr.bf16.mxu0 0
        %769 = vmatpush1.bf16.msra.mxu0 0
        %770 = vmatprep.mubr.bf16.mxu0 0
        %771 = vmatmul.mubr.bf16.gmra.mrb[0].mxu0 %v736
        %v772 = vpop.f32.mrb[0].mxu0
        %v773 = vadd.f32 %v721, %v772
        %v774 = vpop.f32.mrb[0].mxu0
        %v775 = vpop.f32.mrb[0].mxu0
        %v776 = vpop.f32.mrb[0].mxu0
        %777 = vdwg.mxu0
        %v778 = vmul.f32 %v773, 0.35355338
        %780 = vrot.lane.b32.xlu0 %v773, 96
        %v781 = vpop.permute.xlu0 %780
        %vm782 = vcmask 64512
        %v784 = vsel %vm782, %v778, 0
        %v786 = vsel %vm782, %v781, 0
        %788 = vmatprep.subr.mxu0 0.0
        %789 = vmatpush1.xpose.msra.mxu0 %v786
        %790 = vmatprep.subr.mxu0 0.0
        %791 = vmatpush1.xpose.msra.mxu0 0.0
        %792 = vmatprep.subr.mxu0 0.0
        %793 = vmatpush1.xpose.msra.mxu0 0.0
        %794 = vmatprep.subr.mxu0 0.0
        %795 = vmatpush1.xpose.msra.mxu0 0.0
        %796 = vmatprep.subr.mxu0 0.0
        %797 = vmatpush1.xpose.msra.mxu0 0.0
        %798 = vmatprep.subr.mxu0 0.0
        %799 = vmatpush1.xpose.msra.mxu0 0.0
        %800 = vmatprep.subr.mxu0 0.0
        %801 = vmatpush1.xpose.msra.mxu0 0.0
        %802 = vmatprep.subr.mxu0 0.0
        %803 = vmatpush1.xpose.msra.mxu0 0.0
        %804 = vmatprep.subr.mxu0 0.0
        %805 = vmatpush1.xpose.msra.mxu0 0.0
        %806 = vmatprep.subr.mxu0 0.0
        %807 = vmatpush1.xpose.msra.mxu0 0.0
        %808 = vmatprep.subr.mxu0 0.0
        %809 = vmatpush1.xpose.msra.mxu0 0.0
        %810 = vmatprep.subr.mxu0 0.0
        %811 = vmatpush1.xpose.msra.mxu0 0.0
        %812 = vmatprep.subr.mxu0 0.0
        %813 = vmatpush1.xpose.msra.mxu0 0.0
        %814 = vmatprep.subr.mxu0 0.0
        %815 = vmatpush1.xpose.msra.mxu0 0.0
        %816 = vmatprep.subr.mxu0 0.0
        %817 = vmatpush1.xpose.msra.mxu0 0.0
        %818 = vmatprep.subr.mxu0 0.0
        %819 = vmatpush1.xpose.msra.mxu0 0.0
        %820 = vmatprep.subr.mxu0 0.0
        %821 = vmatpush1.xpose.msra.mxu0 0.0
        %822 = vmatprep.subr.mxu0 0.0
        %823 = vmatpush1.xpose.msra.mxu0 0.0
        %824 = vmatprep.subr.mxu0 0.0
        %825 = vmatpush1.xpose.msra.mxu0 0.0
        %826 = vmatprep.subr.mxu0 0.0
        %827 = vmatpush1.xpose.msra.mxu0 0.0
        %828 = vmatprep.subr.mxu0 0.0
        %829 = vmatpush1.xpose.msra.mxu0 0.0
        %830 = vmatprep.subr.mxu0 0.0
        %831 = vmatpush1.xpose.msra.mxu0 0.0
        %832 = vmatprep.subr.mxu0 0.0
        %833 = vmatpush1.xpose.msra.mxu0 0.0
        %834 = vmatprep.subr.mxu0 0.0
        %835 = vmatpush1.xpose.msra.mxu0 0.0
        %836 = vmatprep.subr.mxu0 0.0
        %837 = vmatpush1.xpose.msra.mxu0 0.0
        %838 = vmatprep.subr.mxu0 0.0
        %839 = vmatpush1.xpose.msra.mxu0 0.0
        %840 = vmatprep.subr.mxu0 0.0
        %841 = vmatpush1.xpose.msra.mxu0 0.0
        %842 = vmatprep.subr.mxu0 0.0
        %843 = vmatpush1.xpose.msra.mxu0 0.0
        %844 = vmatprep.subr.mxu0 0.0
        %845 = vmatpush1.xpose.msra.mxu0 0.0
        %846 = vmatprep.subr.mxu0 0.0
        %847 = vmatpush1.xpose.msra.mxu0 0.0
        %848 = vmatprep.subr.mxu0 0.0
        %849 = vmatpush1.xpose.msra.mxu0 0.0
        %850 = vmatprep.subr.mxu0 0.0
        %851 = vmatpush1.xpose.msra.mxu0 0.0
        %852 = vmatprep.mubr.f32.mxu0 0.0
        %853 = vmatmul.mubr.f32.gmra.mrb[0].mxu0 %v784
        %v854 = vpop.f32.mrb[0].mxu0
        %v855 = vadd.f32 0.0, %v854
        %v856 = vpop.f32.mrb[0].mxu0
        %857 = vdwg.mxu0
        %v858 = vsel %vm782, %v855, -inf
        %859 = vmax.xlane.f32.xlu0 %v858
        %v860 = vpop.xlane.xlu0 %859
        %v861 = vsub.f32 %v855, %v860
        %v862 = vmul.f32 %v861, 1.442695
        %v863 = vpow.pop %v862
        %v864 = vsel %vm782, %v863, 0.0
        %865 = vadd.xlane.f32.xlu0 %v864
        %v866 = vpop.xlane.xlu0 %865
        %v867 = vpack.c.bf16 %v863, %v863
        %v868 = vpack.c.bf16 %v773, %v773
        %870 = vrot.lane.b32.xlu0 %v868, 64
        %v871 = vpop.permute.xlu0 %870
        %v873 = vsel %vm782, %v867, 0
        %vm875 = vcmask 1043456
        %v877 = vsel %vm875, %v871, 0
        %879 = vmatprep.subr.bf16.mxu0 0
        %880 = vmatpush1.bf16.msra.mxu0 %v877
        %881 = vmatprep.subr.bf16.mxu0 0
        %882 = vmatpush1.bf16.msra.mxu0 0
        %883 = vmatprep.subr.bf16.mxu0 0
        %884 = vmatpush1.bf16.msra.mxu0 0
        %885 = vmatprep.subr.bf16.mxu0 0
        %886 = vmatpush1.bf16.msra.mxu0 0
        %887 = vmatprep.subr.bf16.mxu0 0
        %888 = vmatpush1.bf16.msra.mxu0 0
        %889 = vmatprep.subr.bf16.mxu0 0
        %890 = vmatpush1.bf16.msra.mxu0 0
        %891 = vmatprep.subr.bf16.mxu0 0
        %892 = vmatpush1.bf16.msra.mxu0 0
        %893 = vmatprep.subr.bf16.mxu0 0
        %894 = vmatpush1.bf16.msra.mxu0 0
        %895 = vmatprep.subr.bf16.mxu0 0
        %896 = vmatpush1.bf16.msra.mxu0 0
        %897 = vmatprep.subr.bf16.mxu0 0
        %898 = vmatpush1.bf16.msra.mxu0 0
        %899 = vmatprep.subr.bf16.mxu0 0
        %900 = vmatpush1.bf16.msra.mxu0 0
        %901 = vmatprep.subr.bf16.mxu0 0
        %902 = vmatpush1.bf16.msra.mxu0 0
        %903 = vmatprep.subr.bf16.mxu0 0
        %904 = vmatpush1.bf16.msra.mxu0 0
        %905 = vmatprep.subr.bf16.mxu0 0
        %906 = vmatpush1.bf16.msra.mxu0 0
        %907 = vmatprep.subr.bf16.mxu0 0
        %908 = vmatpush1.bf16.msra.mxu0 0
        %909 = vmatprep.subr.bf16.mxu0 0
        %910 = vmatpush1.bf16.msra.mxu0 0
        %911 = vmatprep.mubr.bf16.mxu0 0
        %912 = vmatmul.mubr.bf16.gmra.mrb[0].mxu0 %v873
        %v913 = vpop.f32.mrb[0].mxu0
        %v914 = vadd.f32 0.0, %v913
        %v915 = vpop.f32.mrb[0].mxu0
        %v916 = vpop.f32.mrb[0].mxu0
        %v917 = vpop.f32.mrb[0].mxu0
        %918 = vdwg.mxu0
        %v919 = vrcp.pop %v866
        %v920 = vmul.f32 %v914, %v919
        %921 = vrot.lane.b32.xlu0 %v778, 120
        %v922 = vpop.permute.xlu0 %921
        %923 = vrot.lane.b32.xlu0 %v773, 88
        %v924 = vpop.permute.xlu0 %923
        %v925 = vsel %vm782, %v922, 0
        %v927 = vsel %vm782, %v924, 0
        %929 = vmatprep.subr.mxu0 0.0
        %930 = vmatpush1.xpose.msra.mxu0 %v927
        %931 = vmatprep.subr.mxu0 0.0
        %932 = vmatpush1.xpose.msra.mxu0 0.0
        %933 = vmatprep.subr.mxu0 0.0
        %934 = vmatpush1.xpose.msra.mxu0 0.0
        %935 = vmatprep.subr.mxu0 0.0
        %936 = vmatpush1.xpose.msra.mxu0 0.0
        %937 = vmatprep.subr.mxu0 0.0
        %938 = vmatpush1.xpose.msra.mxu0 0.0
        %939 = vmatprep.subr.mxu0 0.0
        %940 = vmatpush1.xpose.msra.mxu0 0.0
        %941 = vmatprep.subr.mxu0 0.0
        %942 = vmatpush1.xpose.msra.mxu0 0.0
        %943 = vmatprep.subr.mxu0 0.0
        %944 = vmatpush1.xpose.msra.mxu0 0.0
        %945 = vmatprep.subr.mxu0 0.0
        %946 = vmatpush1.xpose.msra.mxu0 0.0
        %947 = vmatprep.subr.mxu0 0.0
        %948 = vmatpush1.xpose.msra.mxu0 0.0
        %949 = vmatprep.subr.mxu0 0.0
        %950 = vmatpush1.xpose.msra.mxu0 0.0
        %951 = vmatprep.subr.mxu0 0.0
        %952 = vmatpush1.xpose.msra.mxu0 0.0
        %953 = vmatprep.subr.mxu0 0.0
        %954 = vmatpush1.xpose.msra.mxu0 0.0
        %955 = vmatprep.subr.mxu0 0.0
        %956 = vmatpush1.xpose.msra.mxu0 0.0
        %957 = vmatprep.subr.mxu0 0.0
        %958 = vmatpush1.xpose.msra.mxu0 0.0
        %959 = vmatprep.subr.mxu0 0.0
        %960 = vmatpush1.xpose.msra.mxu0 0.0
        %961 = vmatprep.subr.mxu0 0.0
        %962 = vmatpush1.xpose.msra.mxu0 0.0
        %963 = vmatprep.subr.mxu0 0.0
        %964 = vmatpush1.xpose.msra.mxu0 0.0
        %965 = vmatprep.subr.mxu0 0.0
        %966 = vmatpush1.xpose.msra.mxu0 0.0
        %967 = vmatprep.subr.mxu0 0.0
        %968 = vmatpush1.xpose.msra.mxu0 0.0
        %969 = vmatprep.subr.mxu0 0.0
        %970 = vmatpush1.xpose.msra.mxu0 0.0
        %971 = vmatprep.subr.mxu0 0.0
        %972 = vmatpush1.xpose.msra.mxu0 0.0
        %973 = vmatprep.subr.mxu0 0.0
        %974 = vmatpush1.xpose.msra.mxu0 0.0
        %975 = vmatprep.subr.mxu0 0.0
        %976 = vmatpush1.xpose.msra.mxu0 0.0
        %977 = vmatprep.subr.mxu0 0.0
        %978 = vmatpush1.xpose.msra.mxu0 0.0
        %979 = vmatprep.subr.mxu0 0.0
        %980 = vmatpush1.xpose.msra.mxu0 0.0
        %981 = vmatprep.subr.mxu0 0.0
        %982 = vmatpush1.xpose.msra.mxu0 0.0
        %983 = vmatprep.subr.mxu0 0.0
        %984 = vmatpush1.xpose.msra.mxu0 0.0
        %985 = vmatprep.subr.mxu0 0.0
        %986 = vmatpush1.xpose.msra.mxu0 0.0
        %987 = vmatprep.subr.mxu0 0.0
        %988 = vmatpush1.xpose.msra.mxu0 0.0
        %989 = vmatprep.subr.mxu0 0.0
        %990 = vmatpush1.xpose.msra.mxu0 0.0
        %991 = vmatprep.subr.mxu0 0.0
        %992 = vmatpush1.xpose.msra.mxu0 0.0
        %993 = vmatprep.mubr.f32.mxu0 0.0
        %994 = vmatmul.mubr.f32.gmra.mrb[0].mxu0 %v925
        %v995 = vpop.f32.mrb[0].mxu0
        %v996 = vadd.f32 0.0, %v995
        %v997 = vpop.f32.mrb[0].mxu0
        %998 = vdwg.mxu0
        %v999 = vsel %vm782, %v996, -inf
        %1000 = vmax.xlane.f32.xlu0 %v999
        %v1001 = vpop.xlane.xlu0 %1000
        %v1002 = vsub.f32 %v996, %v1001
        %v1003 = vmul.f32 %v1002, 1.442695
        %v1004 = vpow.pop %v1003
        %v1005 = vsel %vm782, %v1004, 0.0
        %1006 = vadd.xlane.f32.xlu0 %v1005
        %v1007 = vpop.xlane.xlu0 %1006
        %v1008 = vpack.c.bf16 %v1004, %v1004
        %1009 = vrot.lane.b32.xlu0 %v868, 56
        %v1010 = vpop.permute.xlu0 %1009
        %v1012 = vsel %vm782, %v1008, 0
        %v1015 = vsel %vm875, %v1010, 0
        %1017 = vmatprep.subr.bf16.mxu0 0
        %1018 = vmatpush1.bf16.msra.mxu0 %v1015
        %1019 = vmatprep.subr.bf16.mxu0 0
        %1020 = vmatpush1.bf16.msra.mxu0 0
        %1021 = vmatprep.subr.bf16.mxu0 0
        %1022 = vmatpush1.bf16.msra.mxu0 0
        %1023 = vmatprep.subr.bf16.mxu0 0
        %1024 = vmatpush1.bf16.msra.mxu0 0
        %1025 = vmatprep.subr.bf16.mxu0 0
        %1026 = vmatpush1.bf16.msra.mxu0 0
        %1027 = vmatprep.subr.bf16.mxu0 0
        %1028 = vmatpush1.bf16.msra.mxu0 0
        %1029 = vmatprep.subr.bf16.mxu0 0
        %1030 = vmatpush1.bf16.msra.mxu0 0
        %1031 = vmatprep.subr.bf16.mxu0 0
        %1032 = vmatpush1.bf16.msra.mxu0 0
        %1033 = vmatprep.subr.bf16.mxu0 0
        %1034 = vmatpush1.bf16.msra.mxu0 0
        %1035 = vmatprep.subr.bf16.mxu0 0
        %1036 = vmatpush1.bf16.msra.mxu0 0
        %1037 = vmatprep.subr.bf16.mxu0 0
        %1038 = vmatpush1.bf16.msra.mxu0 0
        %1039 = vmatprep.subr.bf16.mxu0 0
        %1040 = vmatpush1.bf16.msra.mxu0 0
        %1041 = vmatprep.subr.bf16.mxu0 0
        %1042 = vmatpush1.bf16.msra.mxu0 0
        %1043 = vmatprep.subr.bf16.mxu0 0
        %1044 = vmatpush1.bf16.msra.mxu0 0
        %1045 = vmatprep.subr.bf16.mxu0 0
        %1046 = vmatpush1.bf16.msra.mxu0 0
        %1047 = vmatprep.subr.bf16.mxu0 0
        %1048 = vmatpush1.bf16.msra.mxu0 0
        %1049 = vmatprep.mubr.bf16.mxu0 0
        %1050 = vmatmul.mubr.bf16.gmra.mrb[0].mxu0 %v1012
        %v1051 = vpop.f32.mrb[0].mxu0
        %v1052 = vadd.f32 0.0, %v1051
        %v1053 = vpop.f32.mrb[0].mxu0
        %v1054 = vpop.f32.mrb[0].mxu0
        %v1055 = vpop.f32.mrb[0].mxu0
        %1056 = vdwg.mxu0
        %v1057 = vrcp.pop %v1007
        %v1058 = vmul.f32 %v1052, %v1057
        %1059 = vrot.lane.b32.xlu0 %v778, 112
        %v1060 = vpop.permute.xlu0 %1059
        %1061 = vrot.lane.b32.xlu0 %v773, 80
        %v1062 = vpop.permute.xlu0 %1061
        %v1063 = vsel %vm782, %v1060, 0
        %v1065 = vsel %vm782, %v1062, 0
        %1067 = vmatprep.subr.mxu0 0.0
        %1068 = vmatpush1.xpose.msra.mxu0 %v1065
        %1069 = vmatprep.subr.mxu0 0.0
        %1070 = vmatpush1.xpose.msra.mxu0 0.0
        %1071 = vmatprep.subr.mxu0 0.0
        %1072 = vmatpush1.xpose.msra.mxu0 0.0
        %1073 = vmatprep.subr.mxu0 0.0
        %1074 = vmatpush1.xpose.msra.mxu0 0.0
        %1075 = vmatprep.subr.mxu0 0.0
        %1076 = vmatpush1.xpose.msra.mxu0 0.0
        %1077 = vmatprep.subr.mxu0 0.0
        %1078 = vmatpush1.xpose.msra.mxu0 0.0
        %1079 = vmatprep.subr.mxu0 0.0
        %1080 = vmatpush1.xpose.msra.mxu0 0.0
        %1081 = vmatprep.subr.mxu0 0.0
        %1082 = vmatpush1.xpose.msra.mxu0 0.0
        %1083 = vmatprep.subr.mxu0 0.0
        %1084 = vmatpush1.xpose.msra.mxu0 0.0
        %1085 = vmatprep.subr.mxu0 0.0
        %1086 = vmatpush1.xpose.msra.mxu0 0.0
        %1087 = vmatprep.subr.mxu0 0.0
        %1088 = vmatpush1.xpose.msra.mxu0 0.0
        %1089 = vmatprep.subr.mxu0 0.0
        %1090 = vmatpush1.xpose.msra.mxu0 0.0
        %1091 = vmatprep.subr.mxu0 0.0
        %1092 = vmatpush1.xpose.msra.mxu0 0.0
        %1093 = vmatprep.subr.mxu0 0.0
        %1094 = vmatpush1.xpose.msra.mxu0 0.0
        %1095 = vmatprep.subr.mxu0 0.0
        %1096 = vmatpush1.xpose.msra.mxu0 0.0
        %1097 = vmatprep.subr.mxu0 0.0
        %1098 = vmatpush1.xpose.msra.mxu0 0.0
        %1099 = vmatprep.subr.mxu0 0.0
        %1100 = vmatpush1.xpose.msra.mxu0 0.0
        %1101 = vmatprep.subr.mxu0 0.0
        %1102 = vmatpush1.xpose.msra.mxu0 0.0
        %1103 = vmatprep.subr.mxu0 0.0
        %1104 = vmatpush1.xpose.msra.mxu0 0.0
        %1105 = vmatprep.subr.mxu0 0.0
        %1106 = vmatpush1.xpose.msra.mxu0 0.0
        %1107 = vmatprep.subr.mxu0 0.0
        %1108 = vmatpush1.xpose.msra.mxu0 0.0
        %1109 = vmatprep.subr.mxu0 0.0
        %1110 = vmatpush1.xpose.msra.mxu0 0.0
        %1111 = vmatprep.subr.mxu0 0.0
        %1112 = vmatpush1.xpose.msra.mxu0 0.0
        %1113 = vmatprep.subr.mxu0 0.0
        %1114 = vmatpush1.xpose.msra.mxu0 0.0
        %1115 = vmatprep.subr.mxu0 0.0
        %1116 = vmatpush1.xpose.msra.mxu0 0.0
        %1117 = vmatprep.subr.mxu0 0.0
        %1118 = vmatpush1.xpose.msra.mxu0 0.0
        %1119 = vmatprep.subr.mxu0 0.0
        %1120 = vmatpush1.xpose.msra.mxu0 0.0
        %1121 = vmatprep.subr.mxu0 0.0
        %1122 = vmatpush1.xpose.msra.mxu0 0.0
        %1123 = vmatprep.subr.mxu0 0.0
        %1124 = vmatpush1.xpose.msra.mxu0 0.0
        %1125 = vmatprep.subr.mxu0 0.0
        %1126 = vmatpush1.xpose.msra.mxu0 0.0
        %1127 = vmatprep.subr.mxu0 0.0
        %1128 = vmatpush1.xpose.msra.mxu0 0.0
        %1129 = vmatprep.subr.mxu0 0.0
        %1130 = vmatpush1.xpose.msra.mxu0 0.0
        %1131 = vmatprep.mubr.f32.mxu0 0.0
        %1132 = vmatmul.mubr.f32.gmra.mrb[0].mxu0 %v1063
        %v1133 = vpop.f32.mrb[0].mxu0
        %v1134 = vadd.f32 0.0, %v1133
        %v1135 = vpop.f32.mrb[0].mxu0
        %1136 = vdwg.mxu0
        %v1137 = vsel %vm782, %v1134, -inf
        %1138 = vmax.xlane.f32.xlu0 %v1137
        %v1139 = vpop.xlane.xlu0 %1138
        %v1140 = vsub.f32 %v1134, %v1139
        %v1141 = vmul.f32 %v1140, 1.442695
        %v1142 = vpow.pop %v1141
        %v1143 = vsel %vm782, %v1142, 0.0
        %1144 = vadd.xlane.f32.xlu0 %v1143
        %v1145 = vpop.xlane.xlu0 %1144
        %v1146 = vpack.c.bf16 %v1142, %v1142
        %1147 = vrot.lane.b32.xlu0 %v868, 48
        %v1148 = vpop.permute.xlu0 %1147
        %v1150 = vsel %vm782, %v1146, 0
        %v1153 = vsel %vm875, %v1148, 0
        %1155 = vmatprep.subr.bf16.mxu0 0
        %1156 = vmatpush1.bf16.msra.mxu0 %v1153
        %1157 = vmatprep.subr.bf16.mxu0 0
        %1158 = vmatpush1.bf16.msra.mxu0 0
        %1159 = vmatprep.subr.bf16.mxu0 0
        %1160 = vmatpush1.bf16.msra.mxu0 0
        %1161 = vmatprep.subr.bf16.mxu0 0
        %1162 = vmatpush1.bf16.msra.mxu0 0
        %1163 = vmatprep.subr.bf16.mxu0 0
        %1164 = vmatpush1.bf16.msra.mxu0 0
        %1165 = vmatprep.subr.bf16.mxu0 0
        %1166 = vmatpush1.bf16.msra.mxu0 0
        %1167 = vmatprep.subr.bf16.mxu0 0
        %1168 = vmatpush1.bf16.msra.mxu0 0
        %1169 = vmatprep.subr.bf16.mxu0 0
        %1170 = vmatpush1.bf16.msra.mxu0 0
        %1171 = vmatprep.subr.bf16.mxu0 0
        %1172 = vmatpush1.bf16.msra.mxu0 0
        %1173 = vmatprep.subr.bf16.mxu0 0
        %1174 = vmatpush1.bf16.msra.mxu0 0
        %1175 = vmatprep.subr.bf16.mxu0 0
        %1176 = vmatpush1.bf16.msra.mxu0 0
        %1177 = vmatprep.subr.bf16.mxu0 0
        %1178 = vmatpush1.bf16.msra.mxu0 0
        %1179 = vmatprep.subr.bf16.mxu0 0
        %1180 = vmatpush1.bf16.msra.mxu0 0
        %1181 = vmatprep.subr.bf16.mxu0 0
        %1182 = vmatpush1.bf16.msra.mxu0 0
        %1183 = vmatprep.subr.bf16.mxu0 0
        %1184 = vmatpush1.bf16.msra.mxu0 0
        %1185 = vmatprep.subr.bf16.mxu0 0
        %1186 = vmatpush1.bf16.msra.mxu0 0
        %1187 = vmatprep.mubr.bf16.mxu0 0
        %1188 = vmatmul.mubr.bf16.gmra.mrb[0].mxu0 %v1150
        %v1189 = vpop.f32.mrb[0].mxu0
        %v1190 = vadd.f32 0.0, %v1189
        %v1191 = vpop.f32.mrb[0].mxu0
        %v1192 = vpop.f32.mrb[0].mxu0
        %v1193 = vpop.f32.mrb[0].mxu0
        %1194 = vdwg.mxu0
        %v1195 = vrcp.pop %v1145
        %v1196 = vmul.f32 %v1190, %v1195
        %1197 = vrot.lane.b32.xlu0 %v778, 104
        %v1198 = vpop.permute.xlu0 %1197
        %1199 = vrot.lane.b32.xlu0 %v773, 72
        %v1200 = vpop.permute.xlu0 %1199
        %v1201 = vsel %vm782, %v1198, 0
        %v1203 = vsel %vm782, %v1200, 0
        %1205 = vmatprep.subr.mxu0 0.0
        %1206 = vmatpush1.xpose.msra.mxu0 %v1203
        %1207 = vmatprep.subr.mxu0 0.0
        %1208 = vmatpush1.xpose.msra.mxu0 0.0
        %1209 = vmatprep.subr.mxu0 0.0
        %1210 = vmatpush1.xpose.msra.mxu0 0.0
        %1211 = vmatprep.subr.mxu0 0.0
        %1212 = vmatpush1.xpose.msra.mxu0 0.0
        %1213 = vmatprep.subr.mxu0 0.0
        %1214 = vmatpush1.xpose.msra.mxu0 0.0
        %1215 = vmatprep.subr.mxu0 0.0
        %1216 = vmatpush1.xpose.msra.mxu0 0.0
        %1217 = vmatprep.subr.mxu0 0.0
        %1218 = vmatpush1.xpose.msra.mxu0 0.0
        %1219 = vmatprep.subr.mxu0 0.0
        %1220 = vmatpush1.xpose.msra.mxu0 0.0
        %1221 = vmatprep.subr.mxu0 0.0
        %1222 = vmatpush1.xpose.msra.mxu0 0.0
        %1223 = vmatprep.subr.mxu0 0.0
        %1224 = vmatpush1.xpose.msra.mxu0 0.0
        %1225 = vmatprep.subr.mxu0 0.0
        %1226 = vmatpush1.xpose.msra.mxu0 0.0
        %1227 = vmatprep.subr.mxu0 0.0
        %1228 = vmatpush1.xpose.msra.mxu0 0.0
        %1229 = vmatprep.subr.mxu0 0.0
        %1230 = vmatpush1.xpose.msra.mxu0 0.0
        %1231 = vmatprep.subr.mxu0 0.0
        %1232 = vmatpush1.xpose.msra.mxu0 0.0
        %1233 = vmatprep.subr.mxu0 0.0
        %1234 = vmatpush1.xpose.msra.mxu0 0.0
        %1235 = vmatprep.subr.mxu0 0.0
        %1236 = vmatpush1.xpose.msra.mxu0 0.0
        %1237 = vmatprep.subr.mxu0 0.0
        %1238 = vmatpush1.xpose.msra.mxu0 0.0
        %1239 = vmatprep.subr.mxu0 0.0
        %1240 = vmatpush1.xpose.msra.mxu0 0.0
        %1241 = vmatprep.subr.mxu0 0.0
        %1242 = vmatpush1.xpose.msra.mxu0 0.0
        %1243 = vmatprep.subr.mxu0 0.0
        %1244 = vmatpush1.xpose.msra.mxu0 0.0
        %1245 = vmatprep.subr.mxu0 0.0
        %1246 = vmatpush1.xpose.msra.mxu0 0.0
        %1247 = vmatprep.subr.mxu0 0.0
        %1248 = vmatpush1.xpose.msra.mxu0 0.0
        %1249 = vmatprep.subr.mxu0 0.0
        %1250 = vmatpush1.xpose.msra.mxu0 0.0
        %1251 = vmatprep.subr.mxu0 0.0
        %1252 = vmatpush1.xpose.msra.mxu0 0.0
        %1253 = vmatprep.subr.mxu0 0.0
        %1254 = vmatpush1.xpose.msra.mxu0 0.0
        %1255 = vmatprep.subr.mxu0 0.0
        %1256 = vmatpush1.xpose.msra.mxu0 0.0
        %1257 = vmatprep.subr.mxu0 0.0
        %1258 = vmatpush1.xpose.msra.mxu0 0.0
        %1259 = vmatprep.subr.mxu0 0.0
        %1260 = vmatpush1.xpose.msra.mxu0 0.0
        %1261 = vmatprep.subr.mxu0 0.0
        %1262 = vmatpush1.xpose.msra.mxu0 0.0
        %1263 = vmatprep.subr.mxu0 0.0
        %1264 = vmatpush1.xpose.msra.mxu0 0.0
        %1265 = vmatprep.subr.mxu0 0.0
        %1266 = vmatpush1.xpose.msra.mxu0 0.0
        %1267 = vmatprep.subr.mxu0 0.0
        %1268 = vmatpush1.xpose.msra.mxu0 0.0
        %1269 = vmatprep.mubr.f32.mxu0 0.0
        %1270 = vmatmul.mubr.f32.gmra.mrb[0].mxu0 %v1201
        %v1271 = vpop.f32.mrb[0].mxu0
        %v1272 = vadd.f32 0.0, %v1271
        %v1273 = vpop.f32.mrb[0].mxu0
        %1274 = vdwg.mxu0
        %v1275 = vsel %vm782, %v1272, -inf
        %1276 = vmax.xlane.f32.xlu0 %v1275
        %v1277 = vpop.xlane.xlu0 %1276
        %v1278 = vsub.f32 %v1272, %v1277
        %v1279 = vmul.f32 %v1278, 1.442695
        %v1280 = vpow.pop %v1279
        %v1281 = vsel %vm782, %v1280, 0.0
        %1282 = vadd.xlane.f32.xlu0 %v1281
        %v1283 = vpop.xlane.xlu0 %1282
        %v1284 = vpack.c.bf16 %v1280, %v1280
        %1285 = vrot.lane.b32.xlu0 %v868, 40
        %v1286 = vpop.permute.xlu0 %1285
        %v1288 = vsel %vm782, %v1284, 0
        %v1291 = vsel %vm875, %v1286, 0
        %1293 = vmatprep.subr.bf16.mxu0 0
        %1294 = vmatpush1.bf16.msra.mxu0 %v1291
        %1295 = vmatprep.subr.bf16.mxu0 0
        %1296 = vmatpush1.bf16.msra.mxu0 0
        %1297 = vmatprep.subr.bf16.mxu0 0
        %1298 = vmatpush1.bf16.msra.mxu0 0
        %1299 = vmatprep.subr.bf16.mxu0 0
        %1300 = vmatpush1.bf16.msra.mxu0 0
        %1301 = vmatprep.subr.bf16.mxu0 0
        %1302 = vmatpush1.bf16.msra.mxu0 0
        %1303 = vmatprep.subr.bf16.mxu0 0
        %1304 = vmatpush1.bf16.msra.mxu0 0
        %1305 = vmatprep.subr.bf16.mxu0 0
        %1306 = vmatpush1.bf16.msra.mxu0 0
        %1307 = vmatprep.subr.bf16.mxu0 0
        %1308 = vmatpush1.bf16.msra.mxu0 0
        %1309 = vmatprep.subr.bf16.mxu0 0
        %1310 = vmatpush1.bf16.msra.mxu0 0
        %1311 = vmatprep.subr.bf16.mxu0 0
        %1312 = vmatpush1.bf16.msra.mxu0 0
        %1313 = vmatprep.subr.bf16.mxu0 0
        %1314 = vmatpush1.bf16.msra.mxu0 0
        %1315 = vmatprep.subr.bf16.mxu0 0
        %1316 = vmatpush1.bf16.msra.mxu0 0
        %1317 = vmatprep.subr.bf16.mxu0 0
        %1318 = vmatpush1.bf16.msra.mxu0 0
        %1319 = vmatprep.subr.bf16.mxu0 0
        %1320 = vmatpush1.bf16.msra.mxu0 0
        %1321 = vmatprep.subr.bf16.mxu0 0
        %1322 = vmatpush1.bf16.msra.mxu0 0
        %1323 = vmatprep.subr.bf16.mxu0 0
        %1324 = vmatpush1.bf16.msra.mxu0 0
        %1325 = vmatprep.mubr.bf16.mxu0 0
        %1326 = vmatmul.mubr.bf16.gmra.mrb[0].mxu0 %v1288
        %v1327 = vpop.f32.mrb[0].mxu0
        %v1328 = vadd.f32 0.0, %v1327
        %v1329 = vpop.f32.mrb[0].mxu0
        %v1330 = vpop.f32.mrb[0].mxu0
        %v1331 = vpop.f32.mrb[0].mxu0
        %1332 = vdwg.mxu0
        %v1333 = vrcp.pop %v1283
        %v1334 = vmul.f32 %v1328, %v1333
        %1336 = vrot.lane.b32.xlu0 %v1058, 8
        %v1337 = vpop.permute.xlu0 %1336
        %1340 = vrot.lane.b32.xlu0 %v1196, 16
        %v1341 = vpop.permute.xlu0 %1340
        %1344 = vrot.lane.b32.xlu0 %v1334, 24
        %v1345 = vpop.permute.xlu0 %1344
        %v1347 = vsel %vm782, %v920, %v1337
        %vm1348 = vcmask 130048
        %v1349 = vsel %vm1348, %v1347, %v1341
        %vm1350 = vcmask 195584
        %v1351 = vsel %vm1350, %v1349, %v1345
        %v1352 = vpack.c.bf16 %v1351, %v1351
        %v1353 = vld [vmem:[%s5] sm:$0xf]
        %v1354 = vld [vmem:[%s5 + $0x4] sm:$0xf]
        %v1355 = vld [vmem:[%s5 + $0x8] sm:$0xf]
        %v1356 = vld [vmem:[%s5 + $0xc] sm:$0xf]
        %v1357 = vld [vmem:[#allocation8] sm:$0x1]
        %v1359 = vlaneseq
        %v1360 = vshrl.u32 %v1359, 7
        %v1361 = vsub.s32 0, %v1360
        %v1362 = vrot.slane %v1357, %v1361
        %v1368 = vunpack.c.l.b16 %v1353
        %v1369 = vunpack.c.l.b16 %v1354
        %v1370 = vunpack.c.l.b16 %v1355
        %v1371 = vunpack.c.l.b16 %v1356
        %v1372 = vpack.c.b16 %v1369, %v1368
        %v1373 = vpack.c.b16 %v1371, %v1370
        %v1377 = vsel %vm682, %v1352, 0
        %1379 = vmatprep.subr.bf16.mxu0 0
        %1380 = vmatpush1.bf16.msra.mxu0 %v1372
        %1381 = vmatprep.subr.bf16.mxu0 0
        %1382 = vmatpush1.bf16.msra.mxu0 %v1373
        %1383 = vmatprep.subr.bf16.mxu0 0
        %1384 = vmatpush1.bf16.msra.mxu0 0
        %1385 = vmatprep.subr.bf16.mxu0 0
        %1386 = vmatpush1.bf16.msra.mxu0 0
        %1387 = vmatprep.subr.bf16.mxu0 0
        %1388 = vmatpush1.bf16.msra.mxu0 0
        %1389 = vmatprep.subr.bf16.mxu0 0
        %1390 = vmatpush1.bf16.msra.mxu0 0
        %1391 = vmatprep.subr.bf16.mxu0 0
        %1392 = vmatpush1.bf16.msra.mxu0 0
        %1393 = vmatprep.subr.bf16.mxu0 0
        %1394 = vmatpush1.bf16.msra.mxu0 0
        %1395 = vmatprep.subr.bf16.mxu0 0
        %1396 = vmatpush1.bf16.msra.mxu0 0
        %1397 = vmatprep.subr.bf16.mxu0 0
        %1398 = vmatpush1.bf16.msra.mxu0 0
        %1399 = vmatprep.subr.bf16.mxu0 0
        %1400 = vmatpush1.bf16.msra.mxu0 0
        %1401 = vmatprep.subr.bf16.mxu0 0
        %1402 = vmatpush1.bf16.msra.mxu0 0
        %1403 = vmatprep.subr.bf16.mxu0 0
        %1404 = vmatpush1.bf16.msra.mxu0 0
        %1405 = vmatprep.subr.bf16.mxu0 0
        %1406 = vmatpush1.bf16.msra.mxu0 0
        %1407 = vmatprep.subr.bf16.mxu0 0
        %1408 = vmatpush1.bf16.msra.mxu0 0
        %1409 = vmatprep.subr.bf16.mxu0 0
        %1410 = vmatpush1.bf16.msra.mxu0 0
        %1411 = vmatprep.mubr.bf16.mxu0 0
        %1412 = vmatmul.mubr.bf16.gmra.mrb[0].mxu0 %v1377
        %v1413 = vpop.f32.mrb[0].mxu0
        %v1414 = vadd.f32 %v1362, %v1413
        %v1415 = vpop.f32.mrb[0].mxu0
        %v1416 = vpop.f32.mrb[0].mxu0
        %v1417 = vpop.f32.mrb[0].mxu0
        %1418 = vdwg.mxu0
        %v1419 = vadd.f32 %v710, %v1414
        %v1420 = vld [vmem:[#allocation10] sm:$0x1]
        %v1421 = vld [vmem:[#allocation11] sm:$0x1]
        %v1422 = vsel %vm682, %v1419, 0.0
        %1423 = vadd.xlane.f32.xlu0 %v1422
        %v1424 = vpop.xlane.xlu0 %1423
        %v1425 = vmul.f32 %v1424, %v686
        %v1426 = vsub.f32 %v1419, %v1425
        %v1427 = vmul.f32 %v1426, %v1426
        %v1428 = vsel %vm682, %v1427, 0.0
        %1429 = vadd.xlane.f32.xlu0 %v1428
        %v1430 = vpop.xlane.xlu0 %1429
        %v1431 = vmul.f32 %v1430, %v686
        %v1432 = vadd.f32 %v1431, 1e-12
        %v1433 = vrsqrt.pop %v1432
        %v1434 = vmul.f32 %v1426, %v1433
        %v1436 = vlaneseq
        %v1437 = vshrl.u32 %v1436, 7
        %v1438 = vsub.s32 0, %v1437
        %v1439 = vrot.slane %v1420, %v1438
        %v1441 = vmul.f32 %v1434, %v1439
        %v1443 = vlaneseq
        %v1444 = vshrl.u32 %v1443, 7
        %v1445 = vsub.s32 0, %v1444
        %v1446 = vrot.slane %v1421, %v1445
        %v1448 = vadd.f32 %v1441, %v1446
        %v1449 = vpack.c.bf16 %v1448, %v1448
        %v1450 = vld [vmem:[%s9] sm:$0xf]
        %v1451 = vld [vmem:[%s9 + $0x4] sm:$0xf]
        %v1452 = vld [vmem:[%s9 + $0x8] sm:$0xf]
        %v1453 = vld [vmem:[%s9 + $0xc] sm:$0xf]
        %v1454 = vld [vmem:[#allocation13] sm:$0x1]
        %v1456 = vlaneseq
        %v1457 = vshrl.u32 %v1456, 7
        %v1458 = vsub.s32 0, %v1457
        %v1459 = vrot.slane %v1454, %v1458
        %v1465 = vunpack.c.l.b16 %v1450
        %v1466 = vunpack.c.l.b16 %v1451
        %v1467 = vunpack.c.l.b16 %v1452
        %v1468 = vunpack.c.l.b16 %v1453
        %v1469 = vpack.c.b16 %v1466, %v1465
        %v1470 = vpack.c.b16 %v1468, %v1467
        %v1474 = vsel %vm682, %v1449, 0
        %1476 = vmatprep.subr.bf16.mxu0 0
        %1477 = vmatpush1.bf16.msra.mxu0 %v1469
        %1478 = vmatprep.subr.bf16.mxu0 0
        %1479 = vmatpush1.bf16.msra.mxu0 %v1470
        %1480 = vmatprep.subr.bf16.mxu0 0
        %1481 = vmatpush1.bf16.msra.mxu0 0
        %1482 = vmatprep.subr.bf16.mxu0 0
        %1483 = vmatpush1.bf16.msra.mxu0 0
        %1484 = vmatprep.subr.bf16.mxu0 0
        %1485 = vmatpush1.bf16.msra.mxu0 0
        %1486 = vmatprep.subr.bf16.mxu0 0
        %1487 = vmatpush1.bf16.msra.mxu0 0
        %1488 = vmatprep.subr.bf16.mxu0 0
        %1489 = vmatpush1.bf16.msra.mxu0 0
        %1490 = vmatprep.subr.bf16.mxu0 0
        %1491 = vmatpush1.bf16.msra.mxu0 0
        %1492 = vmatprep.subr.bf16.mxu0 0
        %1493 = vmatpush1.bf16.msra.mxu0 0
        %1494 = vmatprep.subr.bf16.mxu0 0
        %1495 = vmatpush1.bf16.msra.mxu0 0
        %1496 = vmatprep.subr.bf16.mxu0 0
        %1497 = vmatpush1.bf16.msra.mxu0 0
        %1498 = vmatprep.subr.bf16.mxu0 0
        %1499 = vmatpush1.bf16.msra.mxu0 0
        %1500 = vmatprep.subr.bf16.mxu0 0
        %1501 = vmatpush1.bf16.msra.mxu0 0
        %1502 = vmatprep.subr.bf16.mxu0 0
        %1503 = vmatpush1.bf16.msra.mxu0 0
        %1504 = vmatprep.subr.bf16.mxu0 0
        %1505 = vmatpush1.bf16.msra.mxu0 0
        %1506 = vmatprep.subr.bf16.mxu0 0
        %1507 = vmatpush1.bf16.msra.mxu0 0
        %1508 = vmatprep.mubr.bf16.mxu0 0
        %1509 = vmatmul.mubr.bf16.gmra.mrb[0].mxu0 %v1474
        %v1510 = vpop.f32.mrb[0].mxu0
        %v1511 = vadd.f32 %v1459, %v1510
        %v1512 = vpop.f32.mrb[0].mxu0
        %v1513 = vpop.f32.mrb[0].mxu0
        %v1514 = vpop.f32.mrb[0].mxu0
        %1515 = vdwg.mxu0
        %v1516 = vmul.f32 %v1511, %v1511
        %v1517 = vmul.f32 %v1511, %v1516
        %v1518 = vmul.f32 %v1517, 0.044715
        %v1519 = vadd.f32 %v1511, %v1518
        %v1520 = vmul.f32 %v1519, 0.7978846
        %v1521 = vtanh.pop %v1520
        %v1522 = vadd.f32 %v1521, 1.0
        %v1523 = vmul.f32 %v1522, 0.5
        %v1524 = vmul.f32 %v1511, %v1523
        %v1525 = vpack.c.bf16 %v1524, %v1524
        %v1526 = vld [vmem:[%s11] sm:$0xf]
        %v1527 = vld [vmem:[%s11 + $0x4] sm:$0xf]
        %v1528 = vld [vmem:[%s11 + $0x8] sm:$0xf]
        %v1529 = vld [vmem:[%s11 + $0xc] sm:$0xf]
        %v1530 = vld [vmem:[%s11 + $0x10] sm:$0xf]
        %v1531 = vld [vmem:[%s11 + $0x14] sm:$0xf]
        %v1532 = vld [vmem:[%s11 + $0x18] sm:$0xf]
        %v1533 = vld [vmem:[%s11 + $0x1c] sm:$0xf]
        %v1534 = vld [vmem:[#allocation14] sm:$0x1]
        %v1536 = vlaneseq
        %v1537 = vshrl.u32 %v1536, 7
        %v1538 = vsub.s32 0, %v1537
        %v1539 = vrot.slane %v1534, %v1538
        %v1549 = vunpack.c.l.b16 %v1526
        %v1550 = vunpack.c.l.b16 %v1527
        %v1551 = vunpack.c.l.b16 %v1528
        %v1552 = vunpack.c.l.b16 %v1529
        %v1553 = vunpack.c.l.b16 %v1530
        %v1554 = vunpack.c.l.b16 %v1531
        %v1555 = vunpack.c.l.b16 %v1532
        %v1556 = vunpack.c.l.b16 %v1533
        %v1557 = vpack.c.b16 %v1550, %v1549
        %v1558 = vpack.c.b16 %v1552, %v1551
        %v1559 = vpack.c.b16 %v1554, %v1553
        %v1560 = vpack.c.b16 %v1556, %v1555
        %vm1565 = vcmask 523264
        %v1567 = vsel %vm1565, %v1525, 0
        %1569 = vmatprep.subr.bf16.mxu0 0
        %1570 = vmatpush1.bf16.msra.mxu0 %v1557
        %1571 = vmatprep.subr.bf16.mxu0 0
        %1572 = vmatpush1.bf16.msra.mxu0 %v1558
        %1573 = vmatprep.subr.bf16.mxu0 0
        %1574 = vmatpush1.bf16.msra.mxu0 %v1559
        %1575 = vmatprep.subr.bf16.mxu0 0
        %1576 = vmatpush1.bf16.msra.mxu0 %v1560
        %1577 = vmatprep.subr.bf16.mxu0 0
        %1578 = vmatpush1.bf16.msra.mxu0 0
        %1579 = vmatprep.subr.bf16.mxu0 0
        %1580 = vmatpush1.bf16.msra.mxu0 0
        %1581 = vmatprep.subr.bf16.mxu0 0
        %1582 = vmatpush1.bf16.msra.mxu0 0
        %1583 = vmatprep.subr.bf16.mxu0 0
        %1584 = vmatpush1.bf16.msra.mxu0 0
        %1585 = vmatprep.subr.bf16.mxu0 0
        %1586 = vmatpush1.bf16.msra.mxu0 0
        %1587 = vmatprep.subr.bf16.mxu0 0
        %1588 = vmatpush1.bf16.msra.mxu0 0
        %1589 = vmatprep.subr.bf16.mxu0 0
        %1590 = vmatpush1.bf16.msra.mxu0 0
        %1591 = vmatprep.subr.bf16.mxu0 0
        %1592 = vmatpush1.bf16.msra.mxu0 0
        %1593 = vmatprep.subr.bf16.mxu0 0
        %1594 = vmatpush1.bf16.msra.mxu0 0
        %1595 = vmatprep.subr.bf16.mxu0 0
        %1596 = vmatpush1.bf16.msra.mxu0 0
        %1597 = vmatprep.subr.bf16.mxu0 0
        %1598 = vmatpush1.bf16.msra.mxu0 0
        %1599 = vmatprep.subr.bf16.mxu0 0
        %1600 = vmatpush1.bf16.msra.mxu0 0
        %1601 = vmatprep.mubr.bf16.mxu0 0
        %1602 = vmatmul.mubr.bf16.gmra.mrb[0].mxu0 %v1567
        %v1603 = vpop.f32.mrb[0].mxu0
        %v1604 = vadd.f32 %v1539, %v1603
        %v1605 = vpop.f32.mrb[0].mxu0
        %v1606 = vpop.f32.mrb[0].mxu0
        %v1607 = vpop.f32.mrb[0].mxu0
        %1608 = vdwg.mxu0
        %v1609 = vadd.f32 %v1448, %v1604
        %v1610 = vld [vmem:[#allocation16] sm:$0x1]
        %v1611 = vld [vmem:[%s14] sm:$0x1]
        %v1612 = vsel %vm682, %v1609, 0.0
        %1613 = vadd.xlane.f32.xlu0 %v1612
        %v1614 = vpop.xlane.xlu0 %1613
        %v1615 = vmul.f32 %v1614, %v686
        %v1616 = vsub.f32 %v1609, %v1615
        %v1617 = vmul.f32 %v1616, %v1616
        %v1618 = vsel %vm682, %v1617, 0.0
        %1619 = vadd.xlane.f32.xlu0 %v1618
        %v1620 = vpop.xlane.xlu0 %1619
        %v1621 = vmul.f32 %v1620, %v686
        %v1622 = vadd.f32 %v1621, 1e-12
        %v1623 = vrsqrt.pop %v1622
        %v1624 = vmul.f32 %v1616, %v1623
        %v1626 = vlaneseq
        %v1627 = vshrl.u32 %v1626, 7
        %v1628 = vsub.s32 0, %v1627
        %v1629 = vrot.slane %v1610, %v1628
        %v1631 = vmul.f32 %v1624, %v1629
        %v1633 = vlaneseq
        %v1634 = vshrl.u32 %v1633, 7
        %v1635 = vsub.s32 0, %v1634
        %v1636 = vrot.slane %v1611, %v1635
        %v1638 = vadd.f32 %v1631, %v1636
        %v1639 = vpack.c.bf16 %v1638, %v1638
        %s1640 = scalar_lea.vmem %s3, 16
        %v1641 = vld [vmem:[%s1640] sm:$0xf]
        %v1642 = vld [vmem:[%s1640 + $0x4] sm:$0xf]
        %v1643 = vld [vmem:[%s1640 + $0x8] sm:$0xf]
        %v1644 = vld [vmem:[%s1640 + $0xc] sm:$0xf]
        %s1645 = scalar_lea.vmem [#allocation7], 1
        %v1646 = vld [vmem:[%s1645] sm:$0x1]
        %v1648 = vlaneseq
        %v1649 = vshrl.u32 %v1648, 7
        %v1650 = vsub.s32 0, %v1649
        %v1651 = vrot.slane %v1646, %v1650
        %v1657 = vunpack.c.l.b16 %v1641
        %v1658 = vunpack.c.l.b16 %v1642
        %v1659 = vunpack.c.l.b16 %v1643
        %v1660 = vunpack.c.l.b16 %v1644
        %v1661 = vpack.c.b16 %v1658, %v1657
        %v1662 = vpack.c.b16 %v1660, %v1659
        %v1666 = vsel %vm682, %v1639, 0
        %1668 = vmatprep.subr.bf16.mxu0 0
        %1669 = vmatpush1.bf16.msra.mxu0 %v1661
        %1670 = vmatprep.subr.bf16.mxu0 0
        %1671 = vmatpush1.bf16.msra.mxu0 %v1662
        %1672 = vmatprep.subr.bf16.mxu0 0
        %1673 = vmatpush1.bf16.msra.mxu0 0
        %1674 = vmatprep.subr.bf16.mxu0 0
        %1675 = vmatpush1.bf16.msra.mxu0 0
        %1676 = vmatprep.subr.bf16.mxu0 0
        %1677 = vmatpush1.bf16.msra.mxu0 0
        %1678 = vmatprep.subr.bf16.mxu0 0
        %1679 = vmatpush1.bf16.msra.mxu0 0
        %1680 = vmatprep.subr.bf16.mxu0 0
        %1681 = vmatpush1.bf16.msra.mxu0 0
        %1682 = vmatprep.subr.bf16.mxu0 0
        %1683 = vmatpush1.bf16.msra.mxu0 0
        %1684 = vmatprep.subr.bf16.mxu0 0
        %1685 = vmatpush1.bf16.msra.mxu0 0
        %1686 = vmatprep.subr.bf16.mxu0 0
        %1687 = vmatpush1.bf16.msra.mxu0 0
        %1688 = vmatprep.subr.bf16.mxu0 0
        %1689 = vmatpush1.bf16.msra.mxu0 0
        %1690 = vmatprep.subr.bf16.mxu0 0
        %1691 = vmatpush1.bf16.msra.mxu0 0
        %1692 = vmatprep.subr.bf16.mxu0 0
        %1693 = vmatpush1.bf16.msra.mxu0 0
        %1694 = vmatprep.subr.bf16.mxu0 0
        %1695 = vmatpush1.bf16.msra.mxu0 0
        %1696 = vmatprep.subr.bf16.mxu0 0
        %1697 = vmatpush1.bf16.msra.mxu0 0
        %1698 = vmatprep.subr.bf16.mxu0 0
        %1699 = vmatpush1.bf16.msra.mxu0 0
        %1700 = vmatprep.mubr.bf16.mxu0 0
        %1701 = vmatmul.mubr.bf16.gmra.mrb[0].mxu0 %v1666
        %v1702 = vpop.f32.mrb[0].mxu0
        %v1703 = vadd.f32 %v1651, %v1702
        %v1704 = vpop.f32.mrb[0].mxu0
        %v1705 = vpop.f32.mrb[0].mxu0
        %v1706 = vpop.f32.mrb[0].mxu0
        %1707 = vdwg.mxu0
        %v1708 = vmul.f32 %v1703, 0.35355338
        %1710 = vrot.lane.b32.xlu0 %v1703, 96
        %v1711 = vpop.permute.xlu0 %1710
        %v1713 = vsel %vm782, %v1708, 0
        %v1715 = vsel %vm782, %v1711, 0
        %1717 = vmatprep.subr.mxu0 0.0
        %1718 = vmatpush1.xpose.msra.mxu0 %v1715
        %1719 = vmatprep.subr.mxu0 0.0
        %1720 = vmatpush1.xpose.msra.mxu0 0.0
        %1721 = vmatprep.subr.mxu0 0.0
        %1722 = vmatpush1.xpose.msra.mxu0 0.0
        %1723 = vmatprep.subr.mxu0 0.0
        %1724 = vmatpush1.xpose.msra.mxu0 0.0
        %1725 = vmatprep.subr.mxu0 0.0
        %1726 = vmatpush1.xpose.msra.mxu0 0.0
        %1727 = vmatprep.subr.mxu0 0.0
        %1728 = vmatpush1.xpose.msra.mxu0 0.0
        %1729 = vmatprep.subr.mxu0 0.0
        %1730 = vmatpush1.xpose.msra.mxu0 0.0
        %1731 = vmatprep.subr.mxu0 0.0
        %1732 = vmatpush1.xpose.msra.mxu0 0.0
        %1733 = vmatprep.subr.mxu0 0.0
        %1734 = vmatpush1.xpose.msra.mxu0 0.0
        %1735 = vmatprep.subr.mxu0 0.0
        %1736 = vmatpush1.xpose.msra.mxu0 0.0
        %1737 = vmatprep.subr.mxu0 0.0
        %1738 = vmatpush1.xpose.msra.mxu0 0.0
        %1739 = vmatprep.subr.mxu0 0.0
        %1740 = vmatpush1.xpose.msra.mxu0 0.0
        %1741 = vmatprep.subr.mxu0 0.0
        %1742 = vmatpush1.xpose.msra.mxu0 0.0
        %1743 = vmatprep.subr.mxu0 0.0
        %1744 = vmatpush1.xpose.msra.mxu0 0.0
        %1745 = vmatprep.subr.mxu0 0.0
        %1746 = vmatpush1.xpose.msra.mxu0 0.0
        %1747 = vmatprep.subr.mxu0 0.0
        %1748 = vmatpush1.xpose.msra.mxu0 0.0
        %1749 = vmatprep.subr.mxu0 0.0
        %1750 = vmatpush1.xpose.msra.mxu0 0.0
        %1751 = vmatprep.subr.mxu0 0.0
        %1752 = vmatpush1.xpose.msra.mxu0 0.0
        %1753 = vmatprep.subr.mxu0 0.0
        %1754 = vmatpush1.xpose.msra.mxu0 0.0
        %1755 = vmatprep.subr.mxu0 0.0
        %1756 = vmatpush1.xpose.msra.mxu0 0.0
        %1757 = vmatprep.subr.mxu0 0.0
        %1758 = vmatpush1.xpose.msra.mxu0 0.0
        %1759 = vmatprep.subr.mxu0 0.0
        %1760 = vmatpush1.xpose.msra.mxu0 0.0
        %1761 = vmatprep.subr.mxu0 0.0
        %1762 = vmatpush1.xpose.msra.mxu0 0.0
        %1763 = vmatprep.subr.mxu0 0.0
        %1764 = vmatpush1.xpose.msra.mxu0 0.0
        %1765 = vmatprep.subr.mxu0 0.0
        %1766 = vmatpush1.xpose.msra.mxu0 0.0
        %1767 = vmatprep.subr.mxu0 0.0
        %1768 = vmatpush1.xpose.msra.mxu0 0.0
        %1769 = vmatprep.subr.mxu0 0.0
        %1770 = vmatpush1.xpose.msra.mxu0 0.0
        %1771 = vmatprep.subr.mxu0 0.0
        %1772 = vmatpush1.xpose.msra.mxu0 0.0
        %1773 = vmatprep.subr.mxu0 0.0
        %1774 = vmatpush1.xpose.msra.mxu0 0.0
        %1775 = vmatprep.subr.mxu0 0.0
        %1776 = vmatpush1.xpose.msra.mxu0 0.0
        %1777 = vmatprep.subr.mxu0 0.0
        %1778 = vmatpush1.xpose.msra.mxu0 0.0
        %1779 = vmatprep.subr.mxu0 0.0
        %1780 = vmatpush1.xpose.msra.mxu0 0.0
        %1781 = vmatprep.mubr.f32.mxu0 0.0
        %1782 = vmatmul.mubr.f32.gmra.mrb[0].mxu0 %v1713
        %v1783 = vpop.f32.mrb[0].mxu0
        %v1784 = vadd.f32 0.0, %v1783
        %v1785 = vpop.f32.mrb[0].mxu0
        %1786 = vdwg.mxu0
        %v1787 = vsel %vm782, %v1784, -inf
        %1788 = vmax.xlane.f32.xlu0 %v1787
        %v1789 = vpop.xlane.xlu0 %1788
        %v1790 = vsub.f32 %v1784, %v1789
        %v1791 = vmul.f32 %v1790, 1.442695
        %v1792 = vpow.pop %v1791
        %v1793 = vsel %vm782, %v1792, 0.0
        %1794 = vadd.xlane.f32.xlu0 %v1793
        %v1795 = vpop.xlane.xlu0 %1794
        %v1796 = vpack.c.bf16 %v1792, %v1792
        %v1797 = vpack.c.bf16 %v1703, %v1703
        %1799 = vrot.lane.b32.xlu0 %v1797, 64
        %v1800 = vpop.permute.xlu0 %1799
        %v1802 = vsel %vm782, %v1796, 0
        %v1805 = vsel %vm875, %v1800, 0
        %1807 = vmatprep.subr.bf16.mxu0 0
        %1808 = vmatpush1.bf16.msra.mxu0 %v1805
        %1809 = vmatprep.subr.bf16.mxu0 0
        %1810 = vmatpush1.bf16.msra.mxu0 0
        %1811 = vmatprep.subr.bf16.mxu0 0
        %1812 = vmatpush1.bf16.msra.mxu0 0
        %1813 = vmatprep.subr.bf16.mxu0 0
        %1814 = vmatpush1.bf16.msra.mxu0 0
        %1815 = vmatprep.subr.bf16.mxu0 0
        %1816 = vmatpush1.bf16.msra.mxu0 0
        %1817 = vmatprep.subr.bf16.mxu0 0
        %1818 = vmatpush1.bf16.msra.mxu0 0
        %1819 = vmatprep.subr.bf16.mxu0 0
        %1820 = vmatpush1.bf16.msra.mxu0 0
        %1821 = vmatprep.subr.bf16.mxu0 0
        %1822 = vmatpush1.bf16.msra.mxu0 0
        %1823 = vmatprep.subr.bf16.mxu0 0
        %1824 = vmatpush1.bf16.msra.mxu0 0
        %1825 = vmatprep.subr.bf16.mxu0 0
        %1826 = vmatpush1.bf16.msra.mxu0 0
        %1827 = vmatprep.subr.bf16.mxu0 0
        %1828 = vmatpush1.bf16.msra.mxu0 0
        %1829 = vmatprep.subr.bf16.mxu0 0
        %1830 = vmatpush1.bf16.msra.mxu0 0
        %1831 = vmatprep.subr.bf16.mxu0 0
        %1832 = vmatpush1.bf16.msra.mxu0 0
        %1833 = vmatprep.subr.bf16.mxu0 0
        %1834 = vmatpush1.bf16.msra.mxu0 0
        %1835 = vmatprep.subr.bf16.mxu0 0
        %1836 = vmatpush1.bf16.msra.mxu0 0
        %1837 = vmatprep.subr.bf16.mxu0 0
        %1838 = vmatpush1.bf16.msra.mxu0 0
        %1839 = vmatprep.mubr.bf16.mxu0 0
        %1840 = vmatmul.mubr.bf16.gmra.mrb[0].mxu0 %v1802
        %v1841 = vpop.f32.mrb[0].mxu0
        %v1842 = vadd.f32 0.0, %v1841
        %v1843 = vpop.f32.mrb[0].mxu0
        %v1844 = vpop.f32.mrb[0].mxu0
        %v1845 = vpop.f32.mrb[0].mxu0
        %1846 = vdwg.mxu0
        %v1847 = vrcp.pop %v1795
        %v1848 = vmul.f32 %v1842, %v1847
        %1849 = vrot.lane.b32.xlu0 %v1708, 120
        %v1850 = vpop.permute.xlu0 %1849
        %1851 = vrot.lane.b32.xlu0 %v1703, 88
        %v1852 = vpop.permute.xlu0 %1851
        %v1853 = vsel %vm782, %v1850, 0
        %v1855 = vsel %vm782, %v1852, 0
        %1857 = vmatprep.subr.mxu0 0.0
        %1858 = vmatpush1.xpose.msra.mxu0 %v1855
        %1859 = vmatprep.subr.mxu0 0.0
        %1860 = vmatpush1.xpose.msra.mxu0 0.0
        %1861 = vmatprep.subr.mxu0 0.0
        %1862 = vmatpush1.xpose.msra.mxu0 0.0
        %1863 = vmatprep.subr.mxu0 0.0
        %1864 = vmatpush1.xpose.msra.mxu0 0.0
        %1865 = vmatprep.subr.mxu0 0.0
        %1866 = vmatpush1.xpose.msra.mxu0 0.0
        %1867 = vmatprep.subr.mxu0 0.0
        %1868 = vmatpush1.xpose.msra.mxu0 0.0
        %1869 = vmatprep.subr.mxu0 0.0
        %1870 = vmatpush1.xpose.msra.mxu0 0.0
        %1871 = vmatprep.subr.mxu0 0.0
        %1872 = vmatpush1.xpose.msra.mxu0 0.0
        %1873 = vmatprep.subr.mxu0 0.0
        %1874 = vmatpush1.xpose.msra.mxu0 0.0
        %1875 = vmatprep.subr.mxu0 0.0
        %1876 = vmatpush1.xpose.msra.mxu0 0.0
        %1877 = vmatprep.subr.mxu0 0.0
        %1878 = vmatpush1.xpose.msra.mxu0 0.0
        %1879 = vmatprep.subr.mxu0 0.0
        %1880 = vmatpush1.xpose.msra.mxu0 0.0
        %1881 = vmatprep.subr.mxu0 0.0
        %1882 = vmatpush1.xpose.msra.mxu0 0.0
        %1883 = vmatprep.subr.mxu0 0.0
        %1884 = vmatpush1.xpose.msra.mxu0 0.0
        %1885 = vmatprep.subr.mxu0 0.0
        %1886 = vmatpush1.xpose.msra.mxu0 0.0
        %1887 = vmatprep.subr.mxu0 0.0
        %1888 = vmatpush1.xpose.msra.mxu0 0.0
        %1889 = vmatprep.subr.mxu0 0.0
        %1890 = vmatpush1.xpose.msra.mxu0 0.0
        %1891 = vmatprep.subr.mxu0 0.0
        %1892 = vmatpush1.xpose.msra.mxu0 0.0
        %1893 = vmatprep.subr.mxu0 0.0
        %1894 = vmatpush1.xpose.msra.mxu0 0.0
        %1895 = vmatprep.subr.mxu0 0.0
        %1896 = vmatpush1.xpose.msra.mxu0 0.0
        %1897 = vmatprep.subr.mxu0 0.0
        %1898 = vmatpush1.xpose.msra.mxu0 0.0
        %1899 = vmatprep.subr.mxu0 0.0
        %1900 = vmatpush1.xpose.msra.mxu0 0.0
        %1901 = vmatprep.subr.mxu0 0.0
        %1902 = vmatpush1.xpose.msra.mxu0 0.0
        %1903 = vmatprep.subr.mxu0 0.0
        %1904 = vmatpush1.xpose.msra.mxu0 0.0
        %1905 = vmatprep.subr.mxu0 0.0
        %1906 = vmatpush1.xpose.msra.mxu0 0.0
        %1907 = vmatprep.subr.mxu0 0.0
        %1908 = vmatpush1.xpose.msra.mxu0 0.0
        %1909 = vmatprep.subr.mxu0 0.0
        %1910 = vmatpush1.xpose.msra.mxu0 0.0
        %1911 = vmatprep.subr.mxu0 0.0
        %1912 = vmatpush1.xpose.msra.mxu0 0.0
        %1913 = vmatprep.subr.mxu0 0.0
        %1914 = vmatpush1.xpose.msra.mxu0 0.0
        %1915 = vmatprep.subr.mxu0 0.0
        %1916 = vmatpush1.xpose.msra.mxu0 0.0
        %1917 = vmatprep.subr.mxu0 0.0
        %1918 = vmatpush1.xpose.msra.mxu0 0.0
        %1919 = vmatprep.subr.mxu0 0.0
        %1920 = vmatpush1.xpose.msra.mxu0 0.0
        %1921 = vmatprep.mubr.f32.mxu0 0.0
        %1922 = vmatmul.mubr.f32.gmra.mrb[0].mxu0 %v1853
        %v1923 = vpop.f32.mrb[0].mxu0
        %v1924 = vadd.f32 0.0, %v1923
        %v1925 = vpop.f32.mrb[0].mxu0
        %1926 = vdwg.mxu0
        %v1927 = vsel %vm782, %v1924, -inf
        %1928 = vmax.xlane.f32.xlu0 %v1927
        %v1929 = vpop.xlane.xlu0 %1928
        %v1930 = vsub.f32 %v1924, %v1929
        %v1931 = vmul.f32 %v1930, 1.442695
        %v1932 = vpow.pop %v1931
        %v1933 = vsel %vm782, %v1932, 0.0
        %1934 = vadd.xlane.f32.xlu0 %v1933
        %v1935 = vpop.xlane.xlu0 %1934
        %v1936 = vpack.c.bf16 %v1932, %v1932
        %1937 = vrot.lane.b32.xlu0 %v1797, 56
        %v1938 = vpop.permute.xlu0 %1937
        %v1940 = vsel %vm782, %v1936, 0
        %v1943 = vsel %vm875, %v1938, 0
        %1945 = vmatprep.subr.bf16.mxu0 0
        %1946 = vmatpush1.bf16.msra.mxu0 %v1943
        %1947 = vmatprep.subr.bf16.mxu0 0
        %1948 = vmatpush1.bf16.msra.mxu0 0
        %1949 = vmatprep.subr.bf16.mxu0 0
        %1950 = vmatpush1.bf16.msra.mxu0 0
        %1951 = vmatprep.subr.bf16.mxu0 0
        %1952 = vmatpush1.bf16.msra.mxu0 0
        %1953 = vmatprep.subr.bf16.mxu0 0
        %1954 = vmatpush1.bf16.msra.mxu0 0
        %1955 = vmatprep.subr.bf16.mxu0 0
        %1956 = vmatpush1.bf16.msra.mxu0 0
        %1957 = vmatprep.subr.bf16.mxu0 0
        %1958 = vmatpush1.bf16.msra.mxu0 0
        %1959 = vmatprep.subr.bf16.mxu0 0
        %1960 = vmatpush1.bf16.msra.mxu0 0
        %1961 = vmatprep.subr.bf16.mxu0 0
        %1962 = vmatpush1.bf16.msra.mxu0 0
        %1963 = vmatprep.subr.bf16.mxu0 0
        %1964 = vmatpush1.bf16.msra.mxu0 0
        %1965 = vmatprep.subr.bf16.mxu0 0
        %1966 = vmatpush1.bf16.msra.mxu0 0
        %1967 = vmatprep.subr.bf16.mxu0 0
        %1968 = vmatpush1.bf16.msra.mxu0 0
        %1969 = vmatprep.subr.bf16.mxu0 0
        %1970 = vmatpush1.bf16.msra.mxu0 0
        %1971 = vmatprep.subr.bf16.mxu0 0
        %1972 = vmatpush1.bf16.msra.mxu0 0
        %1973 = vmatprep.subr.bf16.mxu0 0
        %1974 = vmatpush1.bf16.msra.mxu0 0
        %1975 = vmatprep.subr.bf16.mxu0 0
        %1976 = vmatpush1.bf16.msra.mxu0 0
        %1977 = vmatprep.mubr.bf16.mxu0 0
        %1978 = vmatmul.mubr.bf16.gmra.mrb[0].mxu0 %v1940
        %v1979 = vpop.f32.mrb[0].mxu0
        %v1980 = vadd.f32 0.0, %v1979
        %v1981 = vpop.f32.mrb[0].mxu0
        %v1982 = vpop.f32.mrb[0].mxu0
        %v1983 = vpop.f32.mrb[0].mxu0
        %1984 = vdwg.mxu0
        %v1985 = vrcp.pop %v1935
        %v1986 = vmul.f32 %v1980, %v1985
        %1987 = vrot.lane.b32.xlu0 %v1708, 112
        %v1988 = vpop.permute.xlu0 %1987
        %1989 = vrot.lane.b32.xlu0 %v1703, 80
        %v1990 = vpop.permute.xlu0 %1989
        %v1991 = vsel %vm782, %v1988, 0
        %v1993 = vsel %vm782, %v1990, 0
        %1995 = vmatprep.subr.mxu0 0.0
        %1996 = vmatpush1.xpose.msra.mxu0 %v1993
        %1997 = vmatprep.subr.mxu0 0.0
        %1998 = vmatpush1.xpose.msra.mxu0 0.0
        %1999 = vmatprep.subr.mxu0 0.0
        %2000 = vmatpush1.xpose.msra.mxu0 0.0
        %2001 = vmatprep.subr.mxu0 0.0
        %2002 = vmatpush1.xpose.msra.mxu0 0.0
        %2003 = vmatprep.subr.mxu0 0.0
        %2004 = vmatpush1.xpose.msra.mxu0 0.0
        %2005 = vmatprep.subr.mxu0 0.0
        %2006 = vmatpush1.xpose.msra.mxu0 0.0
        %2007 = vmatprep.subr.mxu0 0.0
        %2008 = vmatpush1.xpose.msra.mxu0 0.0
        %2009 = vmatprep.subr.mxu0 0.0
        %2010 = vmatpush1.xpose.msra.mxu0 0.0
        %2011 = vmatprep.subr.mxu0 0.0
        %2012 = vmatpush1.xpose.msra.mxu0 0.0
        %2013 = vmatprep.subr.mxu0 0.0
        %2014 = vmatpush1.xpose.msra.mxu0 0.0
        %2015 = vmatprep.subr.mxu0 0.0
        %2016 = vmatpush1.xpose.msra.mxu0 0.0
        %2017 = vmatprep.subr.mxu0 0.0
        %2018 = vmatpush1.xpose.msra.mxu0 0.0
        %2019 = vmatprep.subr.mxu0 0.0
        %2020 = vmatpush1.xpose.msra.mxu0 0.0
        %2021 = vmatprep.subr.mxu0 0.0
        %2022 = vmatpush1.xpose.msra.mxu0 0.0
        %2023 = vmatprep.subr.mxu0 0.0
        %2024 = vmatpush1.xpose.msra.mxu0 0.0
        %2025 = vmatprep.subr.mxu0 0.0
        %2026 = vmatpush1.xpose.msra.mxu0 0.0
        %2027 = vmatprep.subr.mxu0 0.0
        %2028 = vmatpush1.xpose.msra.mxu0 0.0
        %2029 = vmatprep.subr.mxu0 0.0
        %2030 = vmatpush1.xpose.msra.mxu0 0.0
        %2031 = vmatprep.subr.mxu0 0.0
        %2032 = vmatpush1.xpose.msra.mxu0 0.0
        %2033 = vmatprep.subr.mxu0 0.0
        %2034 = vmatpush1.xpose.msra.mxu0 0.0
        %2035 = vmatprep.subr.mxu0 0.0
        %2036 = vmatpush1.xpose.msra.mxu0 0.0
        %2037 = vmatprep.subr.mxu0 0.0
        %2038 = vmatpush1.xpose.msra.mxu0 0.0
        %2039 = vmatprep.subr.mxu0 0.0
        %2040 = vmatpush1.xpose.msra.mxu0 0.0
        %2041 = vmatprep.subr.mxu0 0.0
        %2042 = vmatpush1.xpose.msra.mxu0 0.0
        %2043 = vmatprep.subr.mxu0 0.0
        %2044 = vmatpush1.xpose.msra.mxu0 0.0
        %2045 = vmatprep.subr.mxu0 0.0
        %2046 = vmatpush1.xpose.msra.mxu0 0.0
        %2047 = vmatprep.subr.mxu0 0.0
        %2048 = vmatpush1.xpose.msra.mxu0 0.0
        %2049 = vmatprep.subr.mxu0 0.0
        %2050 = vmatpush1.xpose.msra.mxu0 0.0
        %2051 = vmatprep.subr.mxu0 0.0
        %2052 = vmatpush1.xpose.msra.mxu0 0.0
        %2053 = vmatprep.subr.mxu0 0.0
        %2054 = vmatpush1.xpose.msra.mxu0 0.0
        %2055 = vmatprep.subr.mxu0 0.0
        %2056 = vmatpush1.xpose.msra.mxu0 0.0
        %2057 = vmatprep.subr.mxu0 0.0
        %2058 = vmatpush1.xpose.msra.mxu0 0.0
        %2059 = vmatprep.mubr.f32.mxu0 0.0
        %2060 = vmatmul.mubr.f32.gmra.mrb[0].mxu0 %v1991
        %v2061 = vpop.f32.mrb[0].mxu0
        %v2062 = vadd.f32 0.0, %v2061
        %v2063 = vpop.f32.mrb[0].mxu0
        %2064 = vdwg.mxu0
        %v2065 = vsel %vm782, %v2062, -inf
        %2066 = vmax.xlane.f32.xlu0 %v2065
        %v2067 = vpop.xlane.xlu0 %2066
        %v2068 = vsub.f32 %v2062, %v2067
        %v2069 = vmul.f32 %v2068, 1.442695
        %v2070 = vpow.pop %v2069
        %v2071 = vsel %vm782, %v2070, 0.0
        %2072 = vadd.xlane.f32.xlu0 %v2071
        %v2073 = vpop.xlane.xlu0 %2072
        %v2074 = vpack.c.bf16 %v2070, %v2070
        %2075 = vrot.lane.b32.xlu0 %v1797, 48
        %v2076 = vpop.permute.xlu0 %2075
        %v2078 = vsel %vm782, %v2074, 0
        %v2081 = vsel %vm875, %v2076, 0
        %2083 = vmatprep.subr.bf16.mxu0 0
        %2084 = vmatpush1.bf16.msra.mxu0 %v2081
        %2085 = vmatprep.subr.bf16.mxu0 0
        %2086 = vmatpush1.bf16.msra.mxu0 0
        %2087 = vmatprep.subr.bf16.mxu0 0
        %2088 = vmatpush1.bf16.msra.mxu0 0
        %2089 = vmatprep.subr.bf16.mxu0 0
        %2090 = vmatpush1.bf16.msra.mxu0 0
        %2091 = vmatprep.subr.bf16.mxu0 0
        %2092 = vmatpush1.bf16.msra.mxu0 0
        %2093 = vmatprep.subr.bf16.mxu0 0
        %2094 = vmatpush1.bf16.msra.mxu0 0
        %2095 = vmatprep.subr.bf16.mxu0 0
        %2096 = vmatpush1.bf16.msra.mxu0 0
        %2097 = vmatprep.subr.bf16.mxu0 0
        %2098 = vmatpush1.bf16.msra.mxu0 0
        %2099 = vmatprep.subr.bf16.mxu0 0
        %2100 = vmatpush1.bf16.msra.mxu0 0
        %2101 = vmatprep.subr.bf16.mxu0 0
        %2102 = vmatpush1.bf16.msra.mxu0 0
        %2103 = vmatprep.subr.bf16.mxu0 0
        %2104 = vmatpush1.bf16.msra.mxu0 0
        %2105 = vmatprep.subr.bf16.mxu0 0
        %2106 = vmatpush1.bf16.msra.mxu0 0
        %2107 = vmatprep.subr.bf16.mxu0 0
        %2108 = vmatpush1.bf16.msra.mxu0 0
        %2109 = vmatprep.subr.bf16.mxu0 0
        %2110 = vmatpush1.bf16.msra.mxu0 0
        %2111 = vmatprep.subr.bf16.mxu0 0
        %2112 = vmatpush1.bf16.msra.mxu0 0
        %2113 = vmatprep.subr.bf16.mxu0 0
        %2114 = vmatpush1.bf16.msra.mxu0 0
        %2115 = vmatprep.mubr.bf16.mxu0 0
        %2116 = vmatmul.mubr.bf16.gmra.mrb[0].mxu0 %v2078
        %v2117 = vpop.f32.mrb[0].mxu0
        %v2118 = vadd.f32 0.0, %v2117
        %v2119 = vpop.f32.mrb[0].mxu0
        %v2120 = vpop.f32.mrb[0].mxu0
        %v2121 = vpop.f32.mrb[0].mxu0
        %2122 = vdwg.mxu0
        %v2123 = vrcp.pop %v2073
        %v2124 = vmul.f32 %v2118, %v2123
        %2125 = vrot.lane.b32.xlu0 %v1708, 104
        %v2126 = vpop.permute.xlu0 %2125
        %2127 = vrot.lane.b32.xlu0 %v1703, 72
        %v2128 = vpop.permute.xlu0 %2127
        %v2129 = vsel %vm782, %v2126, 0
        %v2131 = vsel %vm782, %v2128, 0
        %2133 = vmatprep.subr.mxu0 0.0
        %2134 = vmatpush1.xpose.msra.mxu0 %v2131
        %2135 = vmatprep.subr.mxu0 0.0
        %2136 = vmatpush1.xpose.msra.mxu0 0.0
        %2137 = vmatprep.subr.mxu0 0.0
        %2138 = vmatpush1.xpose.msra.mxu0 0.0
        %2139 = vmatprep.subr.mxu0 0.0
        %2140 = vmatpush1.xpose.msra.mxu0 0.0
        %2141 = vmatprep.subr.mxu0 0.0
        %2142 = vmatpush1.xpose.msra.mxu0 0.0
        %2143 = vmatprep.subr.mxu0 0.0
        %2144 = vmatpush1.xpose.msra.mxu0 0.0
        %2145 = vmatprep.subr.mxu0 0.0
        %2146 = vmatpush1.xpose.msra.mxu0 0.0
        %2147 = vmatprep.subr.mxu0 0.0
        %2148 = vmatpush1.xpose.msra.mxu0 0.0
        %2149 = vmatprep.subr.mxu0 0.0
        %2150 = vmatpush1.xpose.msra.mxu0 0.0
        %2151 = vmatprep.subr.mxu0 0.0
        %2152 = vmatpush1.xpose.msra.mxu0 0.0
        %2153 = vmatprep.subr.mxu0 0.0
        %2154 = vmatpush1.xpose.msra.mxu0 0.0
        %2155 = vmatprep.subr.mxu0 0.0
        %2156 = vmatpush1.xpose.msra.mxu0 0.0
        %2157 = vmatprep.subr.mxu0 0.0
        %2158 = vmatpush1.xpose.msra.mxu0 0.0
        %2159 = vmatprep.subr.mxu0 0.0
        %2160 = vmatpush1.xpose.msra.mxu0 0.0
        %2161 = vmatprep.subr.mxu0 0.0
        %2162 = vmatpush1.xpose.msra.mxu0 0.0
        %2163 = vmatprep.subr.mxu0 0.0
        %2164 = vmatpush1.xpose.msra.mxu0 0.0
        %2165 = vmatprep.subr.mxu0 0.0
        %2166 = vmatpush1.xpose.msra.mxu0 0.0
        %2167 = vmatprep.subr.mxu0 0.0
        %2168 = vmatpush1.xpose.msra.mxu0 0.0
        %2169 = vmatprep.subr.mxu0 0.0
        %2170 = vmatpush1.xpose.msra.mxu0 0.0
        %2171 = vmatprep.subr.mxu0 0.0
        %2172 = vmatpush1.xpose.msra.mxu0 0.0
        %2173 = vmatprep.subr.mxu0 0.0
        %2174 = vmatpush1.xpose.msra.mxu0 0.0
        %2175 = vmatprep.subr.mxu0 0.0
        %2176 = vmatpush1.xpose.msra.mxu0 0.0
        %2177 = vmatprep.subr.mxu0 0.0
        %2178 = vmatpush1.xpose.msra.mxu0 0.0
        %2179 = vmatprep.subr.mxu0 0.0
        %2180 = vmatpush1.xpose.msra.mxu0 0.0
        %2181 = vmatprep.subr.mxu0 0.0
        %2182 = vmatpush1.xpose.msra.mxu0 0.0
        %2183 = vmatprep.subr.mxu0 0.0
        %2184 = vmatpush1.xpose.msra.mxu0 0.0
        %2185 = vmatprep.subr.mxu0 0.0
        %2186 = vmatpush1.xpose.msra.mxu0 0.0
        %2187 = vmatprep.subr.mxu0 0.0
        %2188 = vmatpush1.xpose.msra.mxu0 0.0
        %2189 = vmatprep.subr.mxu0 0.0
        %2190 = vmatpush1.xpose.msra.mxu0 0.0
        %2191 = vmatprep.subr.mxu0 0.0
        %2192 = vmatpush1.xpose.msra.mxu0 0.0
        %2193 = vmatprep.subr.mxu0 0.0
        %2194 = vmatpush1.xpose.msra.mxu0 0.0
        %2195 = vmatprep.subr.mxu0 0.0
        %2196 = vmatpush1.xpose.msra.mxu0 0.0
        %2197 = vmatprep.mubr.f32.mxu0 0.0
        %2198 = vmatmul.mubr.f32.gmra.mrb[0].mxu0 %v2129
        %v2199 = vpop.f32.mrb[0].mxu0
        %v2200 = vadd.f32 0.0, %v2199
        %v2201 = vpop.f32.mrb[0].mxu0
        %2202 = vdwg.mxu0
        %v2203 = vsel %vm782, %v2200, -inf
        %2204 = vmax.xlane.f32.xlu0 %v2203
        %v2205 = vpop.xlane.xlu0 %2204
        %v2206 = vsub.f32 %v2200, %v2205
        %v2207 = vmul.f32 %v2206, 1.442695
        %v2208 = vpow.pop %v2207
        %v2209 = vsel %vm782, %v2208, 0.0
        %2210 = vadd.xlane.f32.xlu0 %v2209
        %v2211 = vpop.xlane.xlu0 %2210
        %v2212 = vpack.c.bf16 %v2208, %v2208
        %2213 = vrot.lane.b32.xlu0 %v1797, 40
        %v2214 = vpop.permute.xlu0 %2213
        %v2216 = vsel %vm782, %v2212, 0
        %v2219 = vsel %vm875, %v2214, 0
        %2221 = vmatprep.subr.bf16.mxu0 0
        %2222 = vmatpush1.bf16.msra.mxu0 %v2219
        %2223 = vmatprep.subr.bf16.mxu0 0
        %2224 = vmatpush1.bf16.msra.mxu0 0
        %2225 = vmatprep.subr.bf16.mxu0 0
        %2226 = vmatpush1.bf16.msra.mxu0 0
        %2227 = vmatprep.subr.bf16.mxu0 0
        %2228 = vmatpush1.bf16.msra.mxu0 0
        %2229 = vmatprep.subr.bf16.mxu0 0
        %2230 = vmatpush1.bf16.msra.mxu0 0
        %2231 = vmatprep.subr.bf16.mxu0 0
        %2232 = vmatpush1.bf16.msra.mxu0 0
        %2233 = vmatprep.subr.bf16.mxu0 0
        %2234 = vmatpush1.bf16.msra.mxu0 0
        %2235 = vmatprep.subr.bf16.mxu0 0
        %2236 = vmatpush1.bf16.msra.mxu0 0
        %2237 = vmatprep.subr.bf16.mxu0 0
        %2238 = vmatpush1.bf16.msra.mxu0 0
        %2239 = vmatprep.subr.bf16.mxu0 0
        %2240 = vmatpush1.bf16.msra.mxu0 0
        %2241 = vmatprep.subr.bf16.mxu0 0
        %2242 = vmatpush1.bf16.msra.mxu0 0
        %2243 = vmatprep.subr.bf16.mxu0 0
        %2244 = vmatpush1.bf16.msra.mxu0 0
        %2245 = vmatprep.subr.bf16.mxu0 0
        %2246 = vmatpush1.bf16.msra.mxu0 0
        %2247 = vmatprep.subr.bf16.mxu0 0
        %2248 = vmatpush1.bf16.msra.mxu0 0
        %2249 = vmatprep.subr.bf16.mxu0 0
        %2250 = vmatpush1.bf16.msra.mxu0 0
        %2251 = vmatprep.subr.bf16.mxu0 0
        %2252 = vmatpush1.bf16.msra.mxu0 0
        %2253 = vmatprep.mubr.bf16.mxu0 0
        %2254 = vmatmul.mubr.bf16.gmra.mrb[0].mxu0 %v2216
        %v2255 = vpop.f32.mrb[0].mxu0
        %v2256 = vadd.f32 0.0, %v2255
        %v2257 = vpop.f32.mrb[0].mxu0
        %v2258 = vpop.f32.mrb[0].mxu0
        %v2259 = vpop.f32.mrb[0].mxu0
        %2260 = vdwg.mxu0
        %v2261 = vrcp.pop %v2211
        %v2262 = vmul.f32 %v2256, %v2261
        %2264 = vrot.lane.b32.xlu0 %v1986, 8
        %v2265 = vpop.permute.xlu0 %2264
        %2268 = vrot.lane.b32.xlu0 %v2124, 16
        %v2269 = vpop.permute.xlu0 %2268
        %2272 = vrot.lane.b32.xlu0 %v2262, 24
        %v2273 = vpop.permute.xlu0 %2272
        %v2275 = vsel %vm782, %v1848, %v2265
        %v2276 = vsel %vm1348, %v2275, %v2269
        %v2277 = vsel %vm1350, %v2276, %v2273
        %v2278 = vpack.c.bf16 %v2277, %v2277
        %s2279 = scalar_lea.vmem %s5, 16
        %v2280 = vld [vmem:[%s2279] sm:$0xf]
        %v2281 = vld [vmem:[%s2279 + $0x4] sm:$0xf]
        %v2282 = vld [vmem:[%s2279 + $0x8] sm:$0xf]
        %v2283 = vld [vmem:[%s2279 + $0xc] sm:$0xf]
        %s2284 = scalar_lea.vmem [#allocation8], 1
        %v2285 = vld [vmem:[%s2284] sm:$0x1]
        %v2287 = vlaneseq
        %v2288 = vshrl.u32 %v2287, 7
        %v2289 = vsub.s32 0, %v2288
        %v2290 = vrot.slane %v2285, %v2289
        %v2296 = vunpack.c.l.b16 %v2280
        %v2297 = vunpack.c.l.b16 %v2281
        %v2298 = vunpack.c.l.b16 %v2282
        %v2299 = vunpack.c.l.b16 %v2283
        %v2300 = vpack.c.b16 %v2297, %v2296
        %v2301 = vpack.c.b16 %v2299, %v2298
        %v2305 = vsel %vm682, %v2278, 0
        %2307 = vmatprep.subr.bf16.mxu0 0
        %2308 = vmatpush1.bf16.msra.mxu0 %v2300
        %2309 = vmatprep.subr.bf16.mxu0 0
        %2310 = vmatpush1.bf16.msra.mxu0 %v2301
        %2311 = vmatprep.subr.bf16.mxu0 0
        %2312 = vmatpush1.bf16.msra.mxu0 0
        %2313 = vmatprep.subr.bf16.mxu0 0
        %2314 = vmatpush1.bf16.msra.mxu0 0
        %2315 = vmatprep.subr.bf16.mxu0 0
        %2316 = vmatpush1.bf16.msra.mxu0 0
        %2317 = vmatprep.subr.bf16.mxu0 0
        %2318 = vmatpush1.bf16.msra.mxu0 0
        %2319 = vmatprep.subr.bf16.mxu0 0
        %2320 = vmatpush1.bf16.msra.mxu0 0
        %2321 = vmatprep.subr.bf16.mxu0 0
        %2322 = vmatpush1.bf16.msra.mxu0 0
        %2323 = vmatprep.subr.bf16.mxu0 0
        %2324 = vmatpush1.bf16.msra.mxu0 0
        %2325 = vmatprep.subr.bf16.mxu0 0
        %2326 = vmatpush1.bf16.msra.mxu0 0
        %2327 = vmatprep.subr.bf16.mxu0 0
        %2328 = vmatpush1.bf16.msra.mxu0 0
        %2329 = vmatprep.subr.bf16.mxu0 0
        %2330 = vmatpush1.bf16.msra.mxu0 0
        %2331 = vmatprep.subr.bf16.mxu0 0
        %2332 = vmatpush1.bf16.msra.mxu0 0
        %2333 = vmatprep.subr.bf16.mxu0 0
        %2334 = vmatpush1.bf16.msra.mxu0 0
        %2335 = vmatprep.subr.bf16.mxu0 0
        %2336 = vmatpush1.bf16.msra.mxu0 0
        %2337 = vmatprep.subr.bf16.mxu0 0
        %2338 = vmatpush1.bf16.msra.mxu0 0
        %2339 = vmatprep.mubr.bf16.mxu0 0
        %2340 = vmatmul.mubr.bf16.gmra.mrb[0].mxu0 %v2305
        %v2341 = vpop.f32.mrb[0].mxu0
        %v2342 = vadd.f32 %v2290, %v2341
        %v2343 = vpop.f32.mrb[0].mxu0
        %v2344 = vpop.f32.mrb[0].mxu0
        %v2345 = vpop.f32.mrb[0].mxu0
        %2346 = vdwg.mxu0
        %v2347 = vadd.f32 %v1638, %v2342
        %s2348 = scalar_lea.vmem [#allocation10], 1
        %v2349 = vld [vmem:[%s2348] sm:$0x1]
        %s2350 = scalar_lea.vmem [#allocation11], 1
        %v2351 = vld [vmem:[%s2350] sm:$0x1]
        %v2352 = vsel %vm682, %v2347, 0.0
        %2353 = vadd.xlane.f32.xlu0 %v2352
        %v2354 = vpop.xlane.xlu0 %2353
        %v2355 = vmul.f32 %v2354, %v686
        %v2356 = vsub.f32 %v2347, %v2355
        %v2357 = vmul.f32 %v2356, %v2356
        %v2358 = vsel %vm682, %v2357, 0.0
        %2359 = vadd.xlane.f32.xlu0 %v2358
        %v2360 = vpop.xlane.xlu0 %2359
        %v2361 = vmul.f32 %v2360, %v686
        %v2362 = vadd.f32 %v2361, 1e-12
        %v2363 = vrsqrt.pop %v2362
        %v2364 = vmul.f32 %v2356, %v2363
        %v2366 = vlaneseq
        %v2367 = vshrl.u32 %v2366, 7
        %v2368 = vsub.s32 0, %v2367
        %v2369 = vrot.slane %v2349, %v2368
        %v2371 = vmul.f32 %v2364, %v2369
        %v2373 = vlaneseq
        %v2374 = vshrl.u32 %v2373, 7
        %v2375 = vsub.s32 0, %v2374
        %v2376 = vrot.slane %v2351, %v2375
        %v2378 = vadd.f32 %v2371, %v2376
        %v2379 = vpack.c.bf16 %v2378, %v2378
        %s2380 = scalar_lea.vmem %s9, 16
        %v2381 = vld [vmem:[%s2380] sm:$0xf]
        %v2382 = vld [vmem:[%s2380 + $0x4] sm:$0xf]
        %v2383 = vld [vmem:[%s2380 + $0x8] sm:$0xf]
        %v2384 = vld [vmem:[%s2380 + $0xc] sm:$0xf]
        %s2385 = scalar_lea.vmem [#allocation13], 1
        %v2386 = vld [vmem:[%s2385] sm:$0x1]
        %v2388 = vlaneseq
        %v2389 = vshrl.u32 %v2388, 7
        %v2390 = vsub.s32 0, %v2389
        %v2391 = vrot.slane %v2386, %v2390
        %v2397 = vunpack.c.l.b16 %v2381
        %v2398 = vunpack.c.l.b16 %v2382
        %v2399 = vunpack.c.l.b16 %v2383
        %v2400 = vunpack.c.l.b16 %v2384
        %v2401 = vpack.c.b16 %v2398, %v2397
        %v2402 = vpack.c.b16 %v2400, %v2399
        %v2406 = vsel %vm682, %v2379, 0
        %2408 = vmatprep.subr.bf16.mxu0 0
        %2409 = vmatpush1.bf16.msra.mxu0 %v2401
        %2410 = vmatprep.subr.bf16.mxu0 0
        %2411 = vmatpush1.bf16.msra.mxu0 %v2402
        %2412 = vmatprep.subr.bf16.mxu0 0
        %2413 = vmatpush1.bf16.msra.mxu0 0
        %2414 = vmatprep.subr.bf16.mxu0 0
        %2415 = vmatpush1.bf16.msra.mxu0 0
        %2416 = vmatprep.subr.bf16.mxu0 0
        %2417 = vmatpush1.bf16.msra.mxu0 0
        %2418 = vmatprep.subr.bf16.mxu0 0
        %2419 = vmatpush1.bf16.msra.mxu0 0
        %2420 = vmatprep.subr.bf16.mxu0 0
        %2421 = vmatpush1.bf16.msra.mxu0 0
        %2422 = vmatprep.subr.bf16.mxu0 0
        %2423 = vmatpush1.bf16.msra.mxu0 0
        %2424 = vmatprep.subr.bf16.mxu0 0
        %2425 = vmatpush1.bf16.msra.mxu0 0
        %2426 = vmatprep.subr.bf16.mxu0 0
        %2427 = vmatpush1.bf16.msra.mxu0 0
        %2428 = vmatprep.subr.bf16.mxu0 0
        %2429 = vmatpush1.bf16.msra.mxu0 0
        %2430 = vmatprep.subr.bf16.mxu0 0
        %2431 = vmatpush1.bf16.msra.mxu0 0
        %2432 = vmatprep.subr.bf16.mxu0 0
        %2433 = vmatpush1.bf16.msra.mxu0 0
        %2434 = vmatprep.subr.bf16.mxu0 0
        %2435 = vmatpush1.bf16.msra.mxu0 0
        %2436 = vmatprep.subr.bf16.mxu0 0
        %2437 = vmatpush1.bf16.msra.mxu0 0
        %2438 = vmatprep.subr.bf16.mxu0 0
        %2439 = vmatpush1.bf16.msra.mxu0 0
        %2440 = vmatprep.mubr.bf16.mxu0 0
        %2441 = vmatmul.mubr.bf16.gmra.mrb[0].mxu0 %v2406
        %v2442 = vpop.f32.mrb[0].mxu0
        %v2443 = vadd.f32 %v2391, %v2442
        %v2444 = vpop.f32.mrb[0].mxu0
        %v2445 = vpop.f32.mrb[0].mxu0
        %v2446 = vpop.f32.mrb[0].mxu0
        %2447 = vdwg.mxu0
        %v2448 = vmul.f32 %v2443, %v2443
        %v2449 = vmul.f32 %v2443, %v2448
        %v2450 = vmul.f32 %v2449, 0.044715
        %v2451 = vadd.f32 %v2443, %v2450
        %v2452 = vmul.f32 %v2451, 0.7978846
        %v2453 = vtanh.pop %v2452
        %v2454 = vadd.f32 %v2453, 1.0
        %v2455 = vmul.f32 %v2454, 0.5
        %v2456 = vmul.f32 %v2443, %v2455
        %v2457 = vpack.c.bf16 %v2456, %v2456
        %s2458 = scalar_lea.vmem %s11, 32
        %v2459 = vld [vmem:[%s2458] sm:$0xf]
        %v2460 = vld [vmem:[%s2458 + $0x4] sm:$0xf]
        %v2461 = vld [vmem:[%s2458 + $0x8] sm:$0xf]
        %v2462 = vld [vmem:[%s2458 + $0xc] sm:$0xf]
        %v2463 = vld [vmem:[%s2458 + $0x10] sm:$0xf]
        %v2464 = vld [vmem:[%s2458 + $0x14] sm:$0xf]
        %v2465 = vld [vmem:[%s2458 + $0x18] sm:$0xf]
        %v2466 = vld [vmem:[%s2458 + $0x1c] sm:$0xf]
        %s2467 = scalar_lea.vmem [#allocation14], 1
        %v2468 = vld [vmem:[%s2467] sm:$0x1]
        %v2470 = vlaneseq
        %v2471 = vshrl.u32 %v2470, 7
        %v2472 = vsub.s32 0, %v2471
        %v2473 = vrot.slane %v2468, %v2472
        %v2483 = vunpack.c.l.b16 %v2459
        %v2484 = vunpack.c.l.b16 %v2460
        %v2485 = vunpack.c.l.b16 %v2461
        %v2486 = vunpack.c.l.b16 %v2462
        %v2487 = vunpack.c.l.b16 %v2463
        %v2488 = vunpack.c.l.b16 %v2464
        %v2489 = vunpack.c.l.b16 %v2465
        %v2490 = vunpack.c.l.b16 %v2466
        %v2491 = vpack.c.b16 %v2484, %v2483
        %v2492 = vpack.c.b16 %v2486, %v2485
        %v2493 = vpack.c.b16 %v2488, %v2487
        %v2494 = vpack.c.b16 %v2490, %v2489
        %v2500 = vsel %vm1565, %v2457, 0
        %2502 = vmatprep.subr.bf16.mxu0 0
        %2503 = vmatpush1.bf16.msra.mxu0 %v2491
        %2504 = vmatprep.subr.bf16.mxu0 0
        %2505 = vmatpush1.bf16.msra.mxu0 %v2492
        %2506 = vmatprep.subr.bf16.mxu0 0
        %2507 = vmatpush1.bf16.msra.mxu0 %v2493
        %2508 = vmatprep.subr.bf16.mxu0 0
        %2509 = vmatpush1.bf16.msra.mxu0 %v2494
        %2510 = vmatprep.subr.bf16.mxu0 0
        %2511 = vmatpush1.bf16.msra.mxu0 0
        %2512 = vmatprep.subr.bf16.mxu0 0
        %2513 = vmatpush1.bf16.msra.mxu0 0
        %2514 = vmatprep.subr.bf16.mxu0 0
        %2515 = vmatpush1.bf16.msra.mxu0 0
        %2516 = vmatprep.subr.bf16.mxu0 0
        %2517 = vmatpush1.bf16.msra.mxu0 0
        %2518 = vmatprep.subr.bf16.mxu0 0
        %2519 = vmatpush1.bf16.msra.mxu0 0
        %2520 = vmatprep.subr.bf16.mxu0 0
        %2521 = vmatpush1.bf16.msra.mxu0 0
        %2522 = vmatprep.subr.bf16.mxu0 0
        %2523 = vmatpush1.bf16.msra.mxu0 0
        %2524 = vmatprep.subr.bf16.mxu0 0
        %2525 = vmatpush1.bf16.msra.mxu0 0
        %2526 = vmatprep.subr.bf16.mxu0 0
        %2527 = vmatpush1.bf16.msra.mxu0 0
        %2528 = vmatprep.subr.bf16.mxu0 0
        %2529 = vmatpush1.bf16.msra.mxu0 0
        %2530 = vmatprep.subr.bf16.mxu0 0
        %2531 = vmatpush1.bf16.msra.mxu0 0
        %2532 = vmatprep.subr.bf16.mxu0 0
        %2533 = vmatpush1.bf16.msra.mxu0 0
        %2534 = vmatprep.mubr.bf16.mxu0 0
        %2535 = vmatmul.mubr.bf16.gmra.mrb[0].mxu0 %v2500
        %v2536 = vpop.f32.mrb[0].mxu0
        %v2537 = vadd.f32 %v2473, %v2536
        %v2538 = vpop.f32.mrb[0].mxu0
        %v2539 = vpop.f32.mrb[0].mxu0
        %v2540 = vpop.f32.mrb[0].mxu0
        %2541 = vdwg.mxu0
        %v2542 = vadd.f32 %v2378, %v2537
        %s2543 = scalar_lea.vmem [#allocation16], 1
        %v2544 = vld [vmem:[%s2543] sm:$0x1]
        %s2545 = scalar_lea.vmem %s14, 1
        %v2546 = vld [vmem:[%s2545] sm:$0x1]
        %v2547 = vsel %vm682, %v2542, 0.0
        %2548 = vadd.xlane.f32.xlu0 %v2547
        %v2549 = vpop.xlane.xlu0 %2548
        %v2550 = vmul.f32 %v2549, %v686
        %v2551 = vsub.f32 %v2542, %v2550
        %v2552 = vmul.f32 %v2551, %v2551
        %v2553 = vsel %vm682, %v2552, 0.0
        %2554 = vadd.xlane.f32.xlu0 %v2553
        %v2555 = vpop.xlane.xlu0 %2554
        %v2556 = vmul.f32 %v2555, %v686
        %v2557 = vadd.f32 %v2556, 1e-12
        %v2558 = vrsqrt.pop %v2557
        %v2559 = vmul.f32 %v2551, %v2558
        %v2561 = vlaneseq
        %v2562 = vshrl.u32 %v2561, 7
        %v2563 = vsub.s32 0, %v2562
        %v2564 = vrot.slane %v2544, %v2563
        %v2566 = vmul.f32 %v2559, %v2564
        %v2568 = vlaneseq
        %v2569 = vshrl.u32 %v2568, 7
        %v2570 = vsub.s32 0, %v2569
        %v2571 = vrot.slane %v2546, %v2570
        %v2573 = vadd.f32 %v2566, %v2571
        %v2574 = vpack.c.bf16 %v2573, %v2573
        %v2575 = vld [vmem:[%s15] sm:$0xf]
        %v2576 = vld [vmem:[%s15 + $0x4] sm:$0xf]
        %v2577 = vld [vmem:[%s15 + $0x8] sm:$0xf]
        %v2578 = vld [vmem:[%s15 + $0xc] sm:$0xf]
        %v2579 = vld [vmem:[%s16] sm:$0x1]
        %v2584 = vunpack.c.l.b16 %v2575
        %v2585 = vunpack.c.l.b16 %v2576
        %v2586 = vunpack.c.l.b16 %v2577
        %v2587 = vunpack.c.l.b16 %v2578
        %v2588 = vpack.c.b16 %v2585, %v2584
        %v2589 = vpack.c.b16 %v2587, %v2586
        %v2593 = vsel %vm682, %v2574, 0
        %2595 = vmatprep.subr.bf16.mxu0 0
        %2596 = vmatpush1.bf16.msra.mxu0 %v2588
        %2597 = vmatprep.subr.bf16.mxu0 0
        %2598 = vmatpush1.bf16.msra.mxu0 %v2589
        %2599 = vmatprep.subr.bf16.mxu0 0
        %2600 = vmatpush1.bf16.msra.mxu0 0
        %2601 = vmatprep.subr.bf16.mxu0 0
        %2602 = vmatpush1.bf16.msra.mxu0 0
        %2603 = vmatprep.subr.bf16.mxu0 0
        %2604 = vmatpush1.bf16.msra.mxu0 0
        %2605 = vmatprep.subr.bf16.mxu0 0
        %2606 = vmatpush1.bf16.msra.mxu0 0
        %2607 = vmatprep.subr.bf16.mxu0 0
        %2608 = vmatpush1.bf16.msra.mxu0 0
        %2609 = vmatprep.subr.bf16.mxu0 0
        %2610 = vmatpush1.bf16.msra.mxu0 0
        %2611 = vmatprep.subr.bf16.mxu0 0
        %2612 = vmatpush1.bf16.msra.mxu0 0
        %2613 = vmatprep.subr.bf16.mxu0 0
        %2614 = vmatpush1.bf16.msra.mxu0 0
        %2615 = vmatprep.subr.bf16.mxu0 0
        %2616 = vmatpush1.bf16.msra.mxu0 0
        %2617 = vmatprep.subr.bf16.mxu0 0
        %2618 = vmatpush1.bf16.msra.mxu0 0
        %2619 = vmatprep.subr.bf16.mxu0 0
        %2620 = vmatpush1.bf16.msra.mxu0 0
        %2621 = vmatprep.subr.bf16.mxu0 0
        %2622 = vmatpush1.bf16.msra.mxu0 0
        %2623 = vmatprep.subr.bf16.mxu0 0
        %2624 = vmatpush1.bf16.msra.mxu0 0
        %2625 = vmatprep.subr.bf16.mxu0 0
        %2626 = vmatpush1.bf16.msra.mxu0 0
        %2627 = vmatprep.mubr.bf16.mxu0 0
        %2628 = vmatmul.mubr.bf16.gmra.mrb[0].mxu0 %v2593
        %v2629 = vpop.f32.mrb[0].mxu0
        %v2630 = vadd.f32 %v2579, %v2629
        %v2631 = vpop.f32.mrb[0].mxu0
        %v2632 = vpop.f32.mrb[0].mxu0
        %v2633 = vpop.f32.mrb[0].mxu0
        %2634 = vdwg.mxu0
        %2635 = vst [vmem:[%s676] sm:$0x1] %v2630
        %s2636 = sand.u32 %s408, 1
        %s2637 = scalar_lea.sflag [#allocation4], %s2636
        %s2638 = sand.u32 %s408, 1
        %s2639 = scalar_lea.vmem [#allocation17], %s2638
        // Predicated region
        $region125: #{tpu_custom_call.1} parent=87 // pred_check
          %p2640 = pneg %p418
        $region126: #{tpu_custom_call.1} parent=87 // pred_check_branch
          %2642 = sbr.rel (%p2640) target = $region128
        $region127: #{tpu_custom_call.1} parent=87 // pred_region
          %s2644 = ssub.s32 16, 16
          %2645 = vsyncadd %s2637, %s2644
          %s2646 = smul.addr %s38, 16
          %s2647 = scalar_lea.hbm %s17, %s2646
          %s2649 = sshll.u32 %s2639, 4
          %s2650 = int_to_ptr.vmem [resolvable:$true] %s2649
          %2652 = dma.vmem_to_hbm [thread:$0]  %s2650, 16, %s2647, %s2637
        $region128: #{tpu_custom_call.1} parent=87 // pred_fallthru
          _
      $region88: #{tpu_custom_call.1} parent=5 // pred_fallthru
        _
      %p2653 = scmp.le.s32.totalorder 2, %s33
      // Predicated region
      $region129: #{tpu_custom_call.1} parent=5 // pred_check
        %p2654 = pneg %p2653
      $region130: #{tpu_custom_call.1} parent=5 // pred_check_branch
        %2656 = sbr.rel (%p2654) target = $region132
      $region131: #{tpu_custom_call.1} parent=5 // pred_region
        %s2657 = ssub.s32 %s33, 2
        // Predicated region
        $region133: #{tpu_custom_call.1} parent=131 // pred_check
          %p2658 = pneg %p424
        $region134: #{tpu_custom_call.1} parent=131 // pred_check_branch
          %2660 = sbr.rel (%p2658) target = $region136
        $region135: #{tpu_custom_call.1} parent=131 // pred_region
          %s2661 = sand.u32 %s409, 1
          %s2662 = scalar_lea.sflag [#allocation4], %s2661
          %s2663 = sand.u32 %s409, 1
          %s2664 = scalar_lea.vmem [#allocation17], %s2663
          %2665 = dma.done %s2662, 16
        $region136: #{tpu_custom_call.1} parent=131 // pred_fallthru
          _
      $region132: #{tpu_custom_call.1} parent=5 // pred_fallthru
        _
    $region6: #{tpu_custom_call.1} parent=1 // loop_footer
      %s37 = sadd.s32 1, %s33
    $region7: #{tpu_custom_call.1} parent=1 // loop_footer_branch
      %32 = sbr.rel target = $region3
    $region8: #{tpu_custom_call.1} parent=1 // loop_exit
      _
    %2666 = vsyncpa [#allocation3], 1
    %s2667 = scalar_lea.sflag [#allocation3], 1
    %2668 = vsyncpa %s2667, 1
    %2669 = vsyncpa [#allocation6], 1
    %2670 = vsyncpa [#allocation9], 1
    %2671 = vsyncpa [#allocation12], 1
    %2672 = vsyncpa [#allocation15], 1
    %2673 = vsyncpa [#allocation4], 1
    %s2674 = scalar_lea.sflag [#allocation4], 1
    %2675 = vsyncpa %s2674, 1

</llo_original>
